<compile_context>
chip_gen: v6e
topology: v6e:2x2x1
jax: 0.10.0
libtpu: 0.0.40
codegen_flags: <defaults>
</compile_context>

<pallas_src>
import functools

import jax
import jax.numpy as jnp
from jax.experimental import pallas as pl
from jax.experimental.pallas import tpu as pltpu


def _vicreg_kernel(*refs, split, tn, dc, n_total, d_total, needs_mask,
                   mxu_dtype, inv_w, var_w, cov_w):
    if split:
        (za_ref, zb_ref, zra_ref, zrb_ref, out_ref, *accs) = refs
    else:
        (za_ref, zb_ref, out_ref, *accs) = refs
    (sum_a, sum_b, ssq_a, ssq_b, sqd,
     sumh_a, sumh_b, dga, dgb, gram_a, gram_b) = accs

    c = pl.program_id(0)              # column-slab / TensorCore index (parallel)
    j = pl.program_id(1)              # row-tile index (reduction, arbitrary)
    n_row_tiles = pl.num_programs(1)

    # ---- init accumulators on the first row tile (per core) -----------------
    @pl.when(j == 0)
    def _init():
        for r in accs:
            r[...] = jnp.zeros_like(r)

    # ---- load current row tile ----------------------------------------------
    za = za_ref[...]
    zb = zb_ref[...]
    zra = zra_ref[...] if split else za       # rhs column slab of this core
    zrb = zrb_ref[...] if split else zb

    if needs_mask:                            # ragged last tile: zero padded rows
        row = jax.lax.broadcasted_iota(jnp.int32, (tn, 1), 0) + j * tn
        valid = row < n_total
        za = jnp.where(valid, za, 0.0)
        zb = jnp.where(valid, zb, 0.0)
        if split:
            zra = jnp.where(valid, zra, 0.0)
            zrb = jnp.where(valid, zrb, 0.0)
        else:
            zra, zrb = za, zb

    # f32 copies for VPU statistics
    za_f = za.astype(jnp.float32)
    zb_f = zb.astype(jnp.float32)
    zra_f = zra.astype(jnp.float32) if split else za_f
    zrb_f = zrb.astype(jnp.float32) if split else zb_f

    # MXU operands (optionally narrowed to bf16; accumulation stays f32)
    if mxu_dtype is not None:
        za_m = za.astype(mxu_dtype)
        zb_m = zb.astype(mxu_dtype)
        zra_m = zra.astype(mxu_dtype) if split else za_m
        zrb_m = zrb.astype(mxu_dtype) if split else zb_m
    else:
        za_m, zb_m, zra_m, zrb_m = za, zb, zra, zrb

    # f32 images of the exact MXU operands -> diag(G) accumulators stay
    # consistent with the Gram even when the MXU runs bf16.
    dra_f = zra_m.astype(jnp.float32)
    drb_f = zrb_m.astype(jnp.float32)

    def fold(x):
        # (tn, W) -> (8, W): pure vreg adds (no per-tile cross-sublane reduce)
        return jnp.sum(x.reshape(tn // 8, 8, x.shape[-1]), axis=0)

    sum_a[...] += fold(za_f)
    sum_b[...] += fold(zb_f)
    ssq_a[...] += fold(za_f * za_f)
    ssq_b[...] += fold(zb_f * zb_f)
    d = za_f - zb_f
    sqd[...] += fold(d * d)
    sumh_a[...] += fold(zra_f)
    sumh_b[...] += fold(zrb_f)
    dga[...] += fold(dra_f * dra_f)
    dgb[...] += fold(drb_f * drb_f)

    # Gram column slabs on the MXU: contraction over the batch (sublane) axis,
    # i.e. the standard weight-gradient orientation A^T B with f32 accumulation.
    # (Review item: confirm with pl.lower_as_mlir on a given toolchain that no
    # explicit per-tile transpose is emitted; restructure if it is.)
    dn = (((0,), (0,)), ((), ()))
    gram_a[...] += jax.lax.dot_general(za_m, zra_m, dn,
                                       preferred_element_type=jnp.float32)
    gram_b[...] += jax.lax.dot_general(zb_m, zrb_m, dn,
                                       preferred_element_type=jnp.float32)

    # ---- finalize on the last row tile: reduce own slab to a scalar partial --
    @pl.when(j == n_row_tiles - 1)
    def _finalize():
        inv_n = 1.0 / n_total
        inv_nm1 = 1.0 / max(n_total - 1, 1)   # N==1 guarded (torch gives NaN)
        inv_d = 1.0 / d_total
        is_core0 = (c == 0).astype(jnp.float32)

        def lanes(acc):                       # single 8 -> 1 sublane fold
            return jnp.sum(acc[...], axis=0, keepdims=True)

        s_a, s_b = lanes(sum_a), lanes(sum_b)
        q_a, q_b = lanes(ssq_a), lanes(ssq_b)
        sh_a, sh_b = lanes(sumh_a), lanes(sumh_b)
        g_a, g_b = lanes(dga), lanes(dgb)

        # variance + invariance (full width, counted once on core 0)
        def var_term(q, s):
            var = (q - s * s * inv_n) * inv_nm1     # unbiased, matches torch
            std = jnp.sqrt(var + 1e-4)
            return jnp.sum(jnp.maximum(1.0 - std, 0.0))

        loss_var = (var_term(q_a, s_a) + var_term(q_b, s_b)) * inv_d
        loss_inv = jnp.sum(sqd[...]) * (inv_n * inv_d)

        # covariance: this core's column-slab contribution of
        #   ||cov||_F^2 - sum_j cov_jj^2,  cov = (G - s s^T/N)/(N-1)
        row8 = jax.lax.broadcasted_iota(jnp.int32, (8, d_total), 0)
        row8h = jax.lax.broadcasted_iota(jnp.int32, (8, dc), 0)

        def cov_partial(gram, s_full, s_half, diag_g):
            g = gram[...]                                       # (D, dc) f32
            frob = jnp.sum(g * g)
            u_full = jnp.where(row8 == 0,
                               jnp.broadcast_to(s_full, (8, d_total)), 0.0)
            u_half = jnp.where(row8h == 0,
                               jnp.broadcast_to(s_half, (8, dc)), 0.0)
            # row 0 of (u_full @ G_slab) = s^T G_slab ; pair with s over cols
            r = jax.lax.dot_general(u_full, g, (((1,), (0,)), ((), ())),
                                    preferred_element_type=jnp.float32)
            sgs = jnp.sum(r * u_half)
            dvals = diag_g - s_half * s_half * inv_n            # cov diag * (N-1)
            diag_sq = jnp.sum(dvals * dvals)
            ssq = jnp.sum(s_full * s_full)
            global_term = (ssq * inv_n) * (ssq * inv_n)         # (s^T s)^2 / N^2
            return ((frob - 2.0 * inv_n * sgs - diag_sq)
                    + is_core0 * global_term) * (inv_nm1 * inv_nm1)

        loss_cov = (cov_partial(gram_a, s_a, sh_a, g_a)
                    + cov_partial(gram_b, s_b, sh_b, g_b)) * inv_d

        partial = (cov_w * loss_cov
                   + is_core0 * (inv_w * loss_inv + var_w * loss_var))
        out_ref[...] = jnp.zeros(out_ref.shape, jnp.float32) + partial


# ----------------------------------------------------------------------------
# Sizing helpers (hardware aware)
# ----------------------------------------------------------------------------
def _ceil_to(x, m):
    return -(-x // m) * m


def _vmem_capacity_bytes():
    try:
        info = pltpu.get_tpu_info()
        cap = getattr(info, "vmem_capacity_bytes", None)
        if cap:
            return int(cap)
    except Exception:
        pass
    return 64 * 1024 * 1024           # conservative fallback (v7x-sized)


def _detect_num_tensorcores():
    try:
        info = pltpu.get_tpu_info()
        for name in ("num_cores", "core_count", "num_tensorcores"):
            val = getattr(info, name, None)
            if isinstance(val, int) and val >= 1:
                return val
    except Exception:
        pass
    return 1


def _working_set_bytes(tn, d, dc, in_itemsize, mxu_itemsize, split):
    """Per-core VMEM peak: double-buffered input tiles + in-kernel cast
    temporaries + scratch (counted once) + a slab-sized finalize transient."""
    d_p, dc_p, tn_p = _ceil_to(d, 128), _ceil_to(dc, 128), _ceil_to(tn, 8)
    inputs = 2 * 2 * tn_p * d_p * in_itemsize
    if split:
        inputs += 2 * 2 * tn_p * dc_p * in_itemsize
    casts = 2 * tn_p * d_p * 4 + 2 * tn_p * d_p * mxu_itemsize
    stats = (5 * 8 * d_p + 4 * 8 * dc_p) * 4
    gram = 2 * _ceil_to(d, 8) * dc_p * 4
    finalize = _ceil_to(d, 8) * dc_p * 4 + 4 * 8 * d_p * 4
    return inputs + casts + stats + gram + finalize


def _pick_block_rows(n, d, dc, in_itemsize, mxu_itemsize, split, vmem_cap,
                     requested=None):
    n_pad = _ceil_to(n, 8)
    if requested is not None:
        return max(8, min(_ceil_to(requested, 8), n_pad))
    # ~2 MiB per streamed (tn, D) tile; 128-row multiples keep the MXU K full
    # and amortize the ~0.35us per-grid-step overhead.
    tn = (2 * 1024 * 1024) // max(d * in_itemsize, 1)
    tn = max(128, min(1024, (tn // 128) * 128))
    tn = min(tn, n_pad)
    tn = max(8, (tn // 8) * 8)
    budget = int(0.7 * vmem_cap)
    while tn > 8 and _working_set_bytes(tn, d, dc, in_itemsize, mxu_itemsize,
                                        split) > budget:
        tn = max(8, ((tn // 2) // 8) * 8)
    return tn


# ----------------------------------------------------------------------------
# Public wrapper
# ----------------------------------------------------------------------------
def vicreg_loss(Z_a, Z_b,
                invariance_loss_weight=25.0,
                variance_loss_weight=25.0,
                covariance_loss_weight=1.0,
                *,
                block_rows=None,
                num_cores=None,
                gram_dtype=jnp.bfloat16):
    assert Z_a.shape == Z_b.shape and Z_a.ndim == 2
    assert Z_a.dtype == Z_b.dtype
    N, D = Z_a.shape
    in_itemsize = jnp.dtype(Z_a.dtype).itemsize

    # Only narrow the Gram operands (e.g. f32 -> bf16); never widen.
    mxu_dtype = None
    if gram_dtype is not None and jnp.dtype(gram_dtype) != jnp.dtype(Z_a.dtype):
        if jnp.dtype(gram_dtype).itemsize < in_itemsize:
            mxu_dtype = jnp.dtype(gram_dtype)
    mxu_itemsize = in_itemsize if mxu_dtype is None else jnp.dtype(mxu_dtype).itemsize

    # Megacore column split (v7x): shard the Gram columns across TensorCores.
    if num_cores is None:
        num_cores = _detect_num_tensorcores() if D >= 1024 else 1
    num_cores = max(1, int(num_cores))
    if num_cores > 1 and (D % (num_cores * 128) != 0):
        num_cores = 1                 # per-core slabs must be 128-lane aligned
    dc = D // num_cores
    split = num_cores > 1

    vmem_cap = _vmem_capacity_bytes()
    tn = _pick_block_rows(N, D, dc, in_itemsize, mxu_itemsize, split, vmem_cap,
                          requested=block_rows)
    n_row_tiles = pl.cdiv(N, tn)
    needs_mask = (N % tn) != 0

    kernel = functools.partial(
        _vicreg_kernel,
        split=split, tn=tn, dc=dc, n_total=N, d_total=D,
        needs_mask=needs_mask, mxu_dtype=mxu_dtype,
        inv_w=float(invariance_loss_weight),
        var_w=float(variance_loss_weight),
        cov_w=float(covariance_loss_weight),
    )

    in_specs = [
        pl.BlockSpec((tn, D), lambda c, j: (j, 0)),
        pl.BlockSpec((tn, D), lambda c, j: (j, 0)),
    ]
    operands = [Z_a, Z_b]
    if split:
        # Same arrays again, but only this core's column slab (rhs of the Gram).
        in_specs += [
            pl.BlockSpec((tn, dc), lambda c, j: (j, c)),
            pl.BlockSpec((tn, dc), lambda c, j: (j, c)),
        ]
        operands += [Z_a, Z_b]

    scratch_shapes = [
        pltpu.VMEM((8, D), jnp.float32),    # sum_a
        pltpu.VMEM((8, D), jnp.float32),    # sum_b
        pltpu.VMEM((8, D), jnp.float32),    # sumsq_a (f32 values, variance term)
        pltpu.VMEM((8, D), jnp.float32),    # sumsq_b
        pltpu.VMEM((8, D), jnp.float32),    # sum((Za - Zb)^2) per feature
        pltpu.VMEM((8, dc), jnp.float32),   # sum_a over this core's columns
        pltpu.VMEM((8, dc), jnp.float32),   # sum_b over this core's columns
        pltpu.VMEM((8, dc), jnp.float32),   # diag(G_a) accumulator (MXU dtype^2)
        pltpu.VMEM((8, dc), jnp.float32),   # diag(G_b) accumulator
        pltpu.VMEM((D, dc), jnp.float32),   # G_a column slab
        pltpu.VMEM((D, dc), jnp.float32),   # G_b column slab
    ]

    need = _working_set_bytes(tn, D, dc, in_itemsize, mxu_itemsize, split)
    vmem_limit = int(min(max(need + (4 << 20), 32 << 20), int(0.8 * vmem_cap)))

    cost = pl.CostEstimate(
        flops=int(4 * N * D * D + 12 * N * D),
        transcendentals=int(2 * D),
        bytes_accessed=int(num_cores * (2 + (1 if split else 0)) * N * D
                           * in_itemsize),
    )

    out = pl.pallas_call(
        kernel,
        out_shape=jax.ShapeDtypeStruct((num_cores, 8, 128), jnp.float32),
        grid=(num_cores, n_row_tiles),
        in_specs=in_specs,
        out_specs=pl.BlockSpec((1, 8, 128), lambda c, j: (c, 0, 0)),
        scratch_shapes=scratch_shapes,
        compiler_params=pltpu.CompilerParams(
            dimension_semantics=("parallel", "arbitrary"),
            vmem_limit_bytes=vmem_limit,
        ),
        cost_estimate=cost,
    )(*operands)

    return jnp.sum(out[:, 0, 0])      # sum per-core partial losses


# ----------------------------------------------------------------------------
# Pure-JAX reference (mirrors the PyTorch forward, full f32)
# ----------------------------------------------------------------------------
def _vicreg_loss_ref(Z_a, Z_b, inv_w=25.0, var_w=25.0, cov_w=1.0):
    Z_a = Z_a.astype(jnp.float32)
    Z_b = Z_b.astype(jnp.float32)
    N, D = Z_a.shape
    loss_inv = jnp.mean((Z_a - Z_b) ** 2)
    std_a = jnp.sqrt(jnp.var(Z_a, axis=0, ddof=1) + 1e-4)
    std_b = jnp.sqrt(jnp.var(Z_b, axis=0, ddof=1) + 1e-4)
    loss_var = jnp.mean(jax.nn.relu(1 - std_a)) + jnp.mean(jax.nn.relu(1 - std_b))
    Za = Z_a - Z_a.mean(axis=0)
    Zb = Z_b - Z_b.mean(axis=0)
    hi = jax.lax.Precision.HIGHEST
    cov_a = jnp.square(jnp.einsum("ni,nj->ij", Za, Za, precision=hi) / (N - 1))
    cov_b = jnp.square(jnp.einsum("ni,nj->ij", Zb, Zb, precision=hi) / (N - 1))
    loss_cov = ((cov_a.sum() - jnp.trace(cov_a)) / D
                + (cov_b.sum() - jnp.trace(cov_b)) / D)
    return loss_inv * inv_w + loss_var * var_w + loss_cov * cov_w


if __name__ == "__main__":
    key = jax.random.PRNGKey(0)
    k1, k2, k3, k4 = jax.random.split(key, 4)

    # VICReg operates on (batch, embedding) projections; small deterministic case.
    N, D = 64, 256
    Z_a = jax.random.normal(k1, (N, D), dtype=jnp.float32)
    Z_b = Z_a + 0.3 * jax.random.normal(k2, (N, D), dtype=jnp.float32)
    ref = _vicreg_loss_ref(Z_a, Z_b)

    # 1) single-core path, f32 Gram operands, 4-tile streamed reduction.
    loss = vicreg_loss(Z_a, Z_b, block_rows=16, num_cores=1, gram_dtype=None)
    jax.block_until_ready(loss)
    assert jnp.allclose(loss, ref, rtol=1e-3, atol=1e-3), (loss, ref)

    # 2) default config: bf16 Gram operands (covariance-only accuracy cost).
    loss_bf16 = vicreg_loss(Z_a, Z_b, block_rows=16, num_cores=1)
    jax.block_until_ready(loss_bf16)
    assert jnp.allclose(loss_bf16, ref, rtol=5e-3, atol=5e-3), (loss_bf16, ref)

    # 3) megacore column-split path (shards the Gram across TensorCores on v7x;
    #    runs the parallel axis sequentially, and correctly, on 1-TC chips).
    loss_mc = vicreg_loss(Z_a, Z_b, block_rows=16, num_cores=2)
    jax.block_until_ready(loss_mc)
    assert jnp.allclose(loss_mc, ref, rtol=5e-3, atol=5e-3), (loss_mc, ref)

    # 4) ragged batch: N not divisible by the row tile -> masked last tile.
    Nr = 52
    Zr_a = jax.random.normal(k3, (Nr, D), dtype=jnp.float32)
    Zr_b = Zr_a + 0.3 * jax.random.normal(k4, (Nr, D), dtype=jnp.float32)
    loss_r = vicreg_loss(Zr_a, Zr_b, block_rows=16, num_cores=1, gram_dtype=None)
    jax.block_until_ready(loss_r)
    ref_r = _vicreg_loss_ref(Zr_a, Zr_b)
    assert jnp.allclose(loss_r, ref_r, rtol=1e-3, atol=1e-3), (loss_r, ref_r)

    print("KERNEL_OK")
</pallas_src>

<mosaic_0001>
module attributes {stable_mosaic.version = 11 : i64} {
  func.func @_vicreg_kernel(%arg0: i32, %arg1: i32, %arg2: memref<16x256xf32, #tpu.memory_space<vmem>>, %arg3: memref<16x256xf32, #tpu.memory_space<vmem>>, %arg4: memref<1x8x128xf32, #tpu.memory_space<vmem>>, %arg5: memref<8x256xf32, #tpu.memory_space<vmem>>, %arg6: memref<8x256xf32, #tpu.memory_space<vmem>>, %arg7: memref<8x256xf32, #tpu.memory_space<vmem>>, %arg8: memref<8x256xf32, #tpu.memory_space<vmem>>, %arg9: memref<8x256xf32, #tpu.memory_space<vmem>>, %arg10: memref<8x256xf32, #tpu.memory_space<vmem>>, %arg11: memref<8x256xf32, #tpu.memory_space<vmem>>, %arg12: memref<8x256xf32, #tpu.memory_space<vmem>>, %arg13: memref<8x256xf32, #tpu.memory_space<vmem>>, %arg14: memref<256x256xf32, #tpu.memory_space<vmem>>, %arg15: memref<256x256xf32, #tpu.memory_space<vmem>>) attributes {dimension_semantics = [#tpu.dimension_semantics<parallel>, #tpu.dimension_semantics<arbitrary>], iteration_bounds = array<i64: 1, 4>, scalar_prefetch = 0 : i64, scratch_operands = 11 : i64, tpu.core_type = #tpu.core_type<tc>, window_params = [{transform_indices = @transform_0, window_bounds = array<i64: 16, 256>}, {transform_indices = @transform_1, window_bounds = array<i64: 16, 256>}, {transform_indices = @transform_2, window_bounds = array<i64: 1, 8, 128>}]} {
    %c0_i32 = arith.constant 0 : i32
    %0 = arith.cmpi eq, %arg1, %c0_i32 : i32
    %1 = arith.extui %0 : i1 to i32
    %c0_i32_0 = arith.constant 0 : i32
    %2 = arith.cmpi ne, %1, %c0_i32_0 : i32
    scf.if %2 {
      %cst_59 = arith.constant 0.000000e+00 : f32
      %67 = vector.broadcast %cst_59 : f32 to vector<8x256xf32>
      %c0_60 = arith.constant 0 : index
      %c0_61 = arith.constant 0 : index
      %68 = vector.load %arg5[%c0_60, %c0_61] : memref<8x256xf32, #tpu.memory_space<vmem>>, vector<8x256xf32>
      tpu.vector_store %arg5[%c0_60, %c0_61], %67 {strides = array<i32>} : memref<8x256xf32, #tpu.memory_space<vmem>>, vector<8x256xf32>,
      %cst_62 = arith.constant 0.000000e+00 : f32
      %69 = vector.broadcast %cst_62 : f32 to vector<8x256xf32>
      %c0_63 = arith.constant 0 : index
      %c0_64 = arith.constant 0 : index
      %70 = vector.load %arg6[%c0_63, %c0_64] : memref<8x256xf32, #tpu.memory_space<vmem>>, vector<8x256xf32>
      tpu.vector_store %arg6[%c0_63, %c0_64], %69 {strides = array<i32>} : memref<8x256xf32, #tpu.memory_space<vmem>>, vector<8x256xf32>,
      %cst_65 = arith.constant 0.000000e+00 : f32
      %71 = vector.broadcast %cst_65 : f32 to vector<8x256xf32>
      %c0_66 = arith.constant 0 : index
      %c0_67 = arith.constant 0 : index
      %72 = vector.load %arg7[%c0_66, %c0_67] : memref<8x256xf32, #tpu.memory_space<vmem>>, vector<8x256xf32>
      tpu.vector_store %arg7[%c0_66, %c0_67], %71 {strides = array<i32>} : memref<8x256xf32, #tpu.memory_space<vmem>>, vector<8x256xf32>,
      %cst_68 = arith.constant 0.000000e+00 : f32
      %73 = vector.broadcast %cst_68 : f32 to vector<8x256xf32>
      %c0_69 = arith.constant 0 : index
      %c0_70 = arith.constant 0 : index
      %74 = vector.load %arg8[%c0_69, %c0_70] : memref<8x256xf32, #tpu.memory_space<vmem>>, vector<8x256xf32>
      tpu.vector_store %arg8[%c0_69, %c0_70], %73 {strides = array<i32>} : memref<8x256xf32, #tpu.memory_space<vmem>>, vector<8x256xf32>,
      %cst_71 = arith.constant 0.000000e+00 : f32
      %75 = vector.broadcast %cst_71 : f32 to vector<8x256xf32>
      %c0_72 = arith.constant 0 : index
      %c0_73 = arith.constant 0 : index
      %76 = vector.load %arg9[%c0_72, %c0_73] : memref<8x256xf32, #tpu.memory_space<vmem>>, vector<8x256xf32>
      tpu.vector_store %arg9[%c0_72, %c0_73], %75 {strides = array<i32>} : memref<8x256xf32, #tpu.memory_space<vmem>>, vector<8x256xf32>,
      %cst_74 = arith.constant 0.000000e+00 : f32
      %77 = vector.broadcast %cst_74 : f32 to vector<8x256xf32>
      %c0_75 = arith.constant 0 : index
      %c0_76 = arith.constant 0 : index
      %78 = vector.load %arg10[%c0_75, %c0_76] : memref<8x256xf32, #tpu.memory_space<vmem>>, vector<8x256xf32>
      tpu.vector_store %arg10[%c0_75, %c0_76], %77 {strides = array<i32>} : memref<8x256xf32, #tpu.memory_space<vmem>>, vector<8x256xf32>,
      %cst_77 = arith.constant 0.000000e+00 : f32
      %79 = vector.broadcast %cst_77 : f32 to vector<8x256xf32>
      %c0_78 = arith.constant 0 : index
      %c0_79 = arith.constant 0 : index
      %80 = vector.load %arg11[%c0_78, %c0_79] : memref<8x256xf32, #tpu.memory_space<vmem>>, vector<8x256xf32>
      tpu.vector_store %arg11[%c0_78, %c0_79], %79 {strides = array<i32>} : memref<8x256xf32, #tpu.memory_space<vmem>>, vector<8x256xf32>,
      %cst_80 = arith.constant 0.000000e+00 : f32
      %81 = vector.broadcast %cst_80 : f32 to vector<8x256xf32>
      %c0_81 = arith.constant 0 : index
      %c0_82 = arith.constant 0 : index
      %82 = vector.load %arg12[%c0_81, %c0_82] : memref<8x256xf32, #tpu.memory_space<vmem>>, vector<8x256xf32>
      tpu.vector_store %arg12[%c0_81, %c0_82], %81 {strides = array<i32>} : memref<8x256xf32, #tpu.memory_space<vmem>>, vector<8x256xf32>,
      %cst_83 = arith.constant 0.000000e+00 : f32
      %83 = vector.broadcast %cst_83 : f32 to vector<8x256xf32>
      %c0_84 = arith.constant 0 : index
      %c0_85 = arith.constant 0 : index
      %84 = vector.load %arg13[%c0_84, %c0_85] : memref<8x256xf32, #tpu.memory_space<vmem>>, vector<8x256xf32>
      tpu.vector_store %arg13[%c0_84, %c0_85], %83 {strides = array<i32>} : memref<8x256xf32, #tpu.memory_space<vmem>>, vector<8x256xf32>,
      %cst_86 = arith.constant 0.000000e+00 : f32
      %85 = vector.broadcast %cst_86 : f32 to vector<256x256xf32>
      %c0_87 = arith.constant 0 : index
      %c0_88 = arith.constant 0 : index
      %86 = vector.load %arg14[%c0_87, %c0_88] : memref<256x256xf32, #tpu.memory_space<vmem>>, vector<256x256xf32>
      tpu.vector_store %arg14[%c0_87, %c0_88], %85 {strides = array<i32>} : memref<256x256xf32, #tpu.memory_space<vmem>>, vector<256x256xf32>,
      %cst_89 = arith.constant 0.000000e+00 : f32
      %87 = vector.broadcast %cst_89 : f32 to vector<256x256xf32>
      %c0_90 = arith.constant 0 : index
      %c0_91 = arith.constant 0 : index
      %88 = vector.load %arg15[%c0_90, %c0_91] : memref<256x256xf32, #tpu.memory_space<vmem>>, vector<256x256xf32>
      tpu.vector_store %arg15[%c0_90, %c0_91], %87 {strides = array<i32>} : memref<256x256xf32, #tpu.memory_space<vmem>>, vector<256x256xf32>,
    } else {
    }
    %c0 = arith.constant 0 : index
    %c0_1 = arith.constant 0 : index
    %3 = vector.load %arg2[%c0, %c0_1] : memref<16x256xf32, #tpu.memory_space<vmem>>, vector<16x256xf32>
    %c0_2 = arith.constant 0 : index
    %c0_3 = arith.constant 0 : index
    %4 = vector.load %arg3[%c0_2, %c0_3] : memref<16x256xf32, #tpu.memory_space<vmem>>, vector<16x256xf32>
    %c0_4 = arith.constant 0 : index
    %c0_5 = arith.constant 0 : index
    %5 = vector.load %arg5[%c0_4, %c0_5] : memref<8x256xf32, #tpu.memory_space<vmem>>, vector<8x256xf32>
    %6 = vector.shape_cast %3 : vector<16x256xf32> to vector<2x8x256xf32>
    %cst = arith.constant dense<0.000000e+00> : vector<8x256xf32>
    %7 = vector.multi_reduction <add>, %6, %cst [0] : vector<2x8x256xf32> to vector<8x256xf32>
    %8 = arith.addf %5, %7 : vector<8x256xf32>
    %c0_6 = arith.constant 0 : index
    %c0_7 = arith.constant 0 : index
    %9 = vector.load %arg5[%c0_6, %c0_7] : memref<8x256xf32, #tpu.memory_space<vmem>>, vector<8x256xf32>
    tpu.vector_store %arg5[%c0_6, %c0_7], %8 {strides = array<i32>} : memref<8x256xf32, #tpu.memory_space<vmem>>, vector<8x256xf32>,
    %c0_8 = arith.constant 0 : index
    %c0_9 = arith.constant 0 : index
    %10 = vector.load %arg6[%c0_8, %c0_9] : memref<8x256xf32, #tpu.memory_space<vmem>>, vector<8x256xf32>
    %11 = vector.shape_cast %4 : vector<16x256xf32> to vector<2x8x256xf32>
    %cst_10 = arith.constant dense<0.000000e+00> : vector<8x256xf32>
    %12 = vector.multi_reduction <add>, %11, %cst_10 [0] : vector<2x8x256xf32> to vector<8x256xf32>
    %13 = arith.addf %10, %12 : vector<8x256xf32>
    %c0_11 = arith.constant 0 : index
    %c0_12 = arith.constant 0 : index
    %14 = vector.load %arg6[%c0_11, %c0_12] : memref<8x256xf32, #tpu.memory_space<vmem>>, vector<8x256xf32>
    tpu.vector_store %arg6[%c0_11, %c0_12], %13 {strides = array<i32>} : memref<8x256xf32, #tpu.memory_space<vmem>>, vector<8x256xf32>,
    %c0_13 = arith.constant 0 : index
    %c0_14 = arith.constant 0 : index
    %15 = vector.load %arg7[%c0_13, %c0_14] : memref<8x256xf32, #tpu.memory_space<vmem>>, vector<8x256xf32>
    %16 = arith.mulf %3, %3 : vector<16x256xf32>
    %17 = vector.shape_cast %16 : vector<16x256xf32> to vector<2x8x256xf32>
    %cst_15 = arith.constant dense<0.000000e+00> : vector<8x256xf32>
    %18 = vector.multi_reduction <add>, %17, %cst_15 [0] : vector<2x8x256xf32> to vector<8x256xf32>
    %19 = arith.addf %15, %18 : vector<8x256xf32>
    %c0_16 = arith.constant 0 : index
    %c0_17 = arith.constant 0 : index
    %20 = vector.load %arg7[%c0_16, %c0_17] : memref<8x256xf32, #tpu.memory_space<vmem>>, vector<8x256xf32>
    tpu.vector_store %arg7[%c0_16, %c0_17], %19 {strides = array<i32>} : memref<8x256xf32, #tpu.memory_space<vmem>>, vector<8x256xf32>,
    %c0_18 = arith.constant 0 : index
    %c0_19 = arith.constant 0 : index
    %21 = vector.load %arg8[%c0_18, %c0_19] : memref<8x256xf32, #tpu.memory_space<vmem>>, vector<8x256xf32>
    %22 = arith.mulf %4, %4 : vector<16x256xf32>
    %23 = vector.shape_cast %22 : vector<16x256xf32> to vector<2x8x256xf32>
    %cst_20 = arith.constant dense<0.000000e+00> : vector<8x256xf32>
    %24 = vector.multi_reduction <add>, %23, %cst_20 [0] : vector<2x8x256xf32> to vector<8x256xf32>
    %25 = arith.addf %21, %24 : vector<8x256xf32>
    %c0_21 = arith.constant 0 : index
    %c0_22 = arith.constant 0 : index
    %26 = vector.load %arg8[%c0_21, %c0_22] : memref<8x256xf32, #tpu.memory_space<vmem>>, vector<8x256xf32>
    tpu.vector_store %arg8[%c0_21, %c0_22], %25 {strides = array<i32>} : memref<8x256xf32, #tpu.memory_space<vmem>>, vector<8x256xf32>,
    %27 = arith.subf %3, %4 : vector<16x256xf32>
    %c0_23 = arith.constant 0 : index
    %c0_24 = arith.constant 0 : index
    %28 = vector.load %arg9[%c0_23, %c0_24] : memref<8x256xf32, #tpu.memory_space<vmem>>, vector<8x256xf32>
    %29 = arith.mulf %27, %27 : vector<16x256xf32>
    %30 = vector.shape_cast %29 : vector<16x256xf32> to vector<2x8x256xf32>
    %cst_25 = arith.constant dense<0.000000e+00> : vector<8x256xf32>
    %31 = vector.multi_reduction <add>, %30, %cst_25 [0] : vector<2x8x256xf32> to vector<8x256xf32>
    %32 = arith.addf %28, %31 : vector<8x256xf32>
    %c0_26 = arith.constant 0 : index
    %c0_27 = arith.constant 0 : index
    %33 = vector.load %arg9[%c0_26, %c0_27] : memref<8x256xf32, #tpu.memory_space<vmem>>, vector<8x256xf32>
    tpu.vector_store %arg9[%c0_26, %c0_27], %32 {strides = array<i32>} : memref<8x256xf32, #tpu.memory_space<vmem>>, vector<8x256xf32>,
    %c0_28 = arith.constant 0 : index
    %c0_29 = arith.constant 0 : index
    %34 = vector.load %arg10[%c0_28, %c0_29] : memref<8x256xf32, #tpu.memory_space<vmem>>, vector<8x256xf32>
    %35 = vector.shape_cast %3 : vector<16x256xf32> to vector<2x8x256xf32>
    %cst_30 = arith.constant dense<0.000000e+00> : vector<8x256xf32>
    %36 = vector.multi_reduction <add>, %35, %cst_30 [0] : vector<2x8x256xf32> to vector<8x256xf32>
    %37 = arith.addf %34, %36 : vector<8x256xf32>
    %c0_31 = arith.constant 0 : index
    %c0_32 = arith.constant 0 : index
    %38 = vector.load %arg10[%c0_31, %c0_32] : memref<8x256xf32, #tpu.memory_space<vmem>>, vector<8x256xf32>
    tpu.vector_store %arg10[%c0_31, %c0_32], %37 {strides = array<i32>} : memref<8x256xf32, #tpu.memory_space<vmem>>, vector<8x256xf32>,
    %c0_33 = arith.constant 0 : index
    %c0_34 = arith.constant 0 : index
    %39 = vector.load %arg11[%c0_33, %c0_34] : memref<8x256xf32, #tpu.memory_space<vmem>>, vector<8x256xf32>
    %40 = vector.shape_cast %4 : vector<16x256xf32> to vector<2x8x256xf32>
    %cst_35 = arith.constant dense<0.000000e+00> : vector<8x256xf32>
    %41 = vector.multi_reduction <add>, %40, %cst_35 [0] : vector<2x8x256xf32> to vector<8x256xf32>
    %42 = arith.addf %39, %41 : vector<8x256xf32>
    %c0_36 = arith.constant 0 : index
    %c0_37 = arith.constant 0 : index
    %43 = vector.load %arg11[%c0_36, %c0_37] : memref<8x256xf32, #tpu.memory_space<vmem>>, vector<8x256xf32>
    tpu.vector_store %arg11[%c0_36, %c0_37], %42 {strides = array<i32>} : memref<8x256xf32, #tpu.memory_space<vmem>>, vector<8x256xf32>,
    %c0_38 = arith.constant 0 : index
    %c0_39 = arith.constant 0 : index
    %44 = vector.load %arg12[%c0_38, %c0_39] : memref<8x256xf32, #tpu.memory_space<vmem>>, vector<8x256xf32>
    %45 = arith.mulf %3, %3 : vector<16x256xf32>
    %46 = vector.shape_cast %45 : vector<16x256xf32> to vector<2x8x256xf32>
    %cst_40 = arith.constant dense<0.000000e+00> : vector<8x256xf32>
    %47 = vector.multi_reduction <add>, %46, %cst_40 [0] : vector<2x8x256xf32> to vector<8x256xf32>
    %48 = arith.addf %44, %47 : vector<8x256xf32>
    %c0_41 = arith.constant 0 : index
    %c0_42 = arith.constant 0 : index
    %49 = vector.load %arg12[%c0_41, %c0_42] : memref<8x256xf32, #tpu.memory_space<vmem>>, vector<8x256xf32>
    tpu.vector_store %arg12[%c0_41, %c0_42], %48 {strides = array<i32>} : memref<8x256xf32, #tpu.memory_space<vmem>>, vector<8x256xf32>,
    %c0_43 = arith.constant 0 : index
    %c0_44 = arith.constant 0 : index
    %50 = vector.load %arg13[%c0_43, %c0_44] : memref<8x256xf32, #tpu.memory_space<vmem>>, vector<8x256xf32>
    %51 = arith.mulf %4, %4 : vector<16x256xf32>
    %52 = vector.shape_cast %51 : vector<16x256xf32> to vector<2x8x256xf32>
    %cst_45 = arith.constant dense<0.000000e+00> : vector<8x256xf32>
    %53 = vector.multi_reduction <add>, %52, %cst_45 [0] : vector<2x8x256xf32> to vector<8x256xf32>
    %54 = arith.addf %50, %53 : vector<8x256xf32>
    %c0_46 = arith.constant 0 : index
    %c0_47 = arith.constant 0 : index
    %55 = vector.load %arg13[%c0_46, %c0_47] : memref<8x256xf32, #tpu.memory_space<vmem>>, vector<8x256xf32>
    tpu.vector_store %arg13[%c0_46, %c0_47], %54 {strides = array<i32>} : memref<8x256xf32, #tpu.memory_space<vmem>>, vector<8x256xf32>,
    %c0_48 = arith.constant 0 : index
    %c0_49 = arith.constant 0 : index
    %56 = vector.load %arg14[%c0_48, %c0_49] : memref<256x256xf32, #tpu.memory_space<vmem>>, vector<256x256xf32>
    %cst_50 = arith.constant dense<0.000000e+00> : vector<256x256xf32>
    %57 = tpu.matmul %3, %3, %cst_50 {dimension_numbers = #tpu.dot_dimension_numbers<[0], [0], [1], [1], [0, 1, 1, 1], [], []>} : vector<16x256xf32>, vector<16x256xf32>, vector<256x256xf32> -> vector<256x256xf32>
    %58 = arith.addf %56, %57 : vector<256x256xf32>
    %c0_51 = arith.constant 0 : index
    %c0_52 = arith.constant 0 : index
    %59 = vector.load %arg14[%c0_51, %c0_52] : memref<256x256xf32, #tpu.memory_space<vmem>>, vector<256x256xf32>
    tpu.vector_store %arg14[%c0_51, %c0_52], %58 {strides = array<i32>} : memref<256x256xf32, #tpu.memory_space<vmem>>, vector<256x256xf32>,
    %c0_53 = arith.constant 0 : index
    %c0_54 = arith.constant 0 : index
    %60 = vector.load %arg15[%c0_53, %c0_54] : memref<256x256xf32, #tpu.memory_space<vmem>>, vector<256x256xf32>
    %cst_55 = arith.constant dense<0.000000e+00> : vector<256x256xf32>
    %61 = tpu.matmul %4, %4, %cst_55 {dimension_numbers = #tpu.dot_dimension_numbers<[0], [0], [1], [1], [0, 1, 1, 1], [], []>} : vector<16x256xf32>, vector<16x256xf32>, vector<256x256xf32> -> vector<256x256xf32>
    %62 = arith.addf %60, %61 : vector<256x256xf32>
    %c0_56 = arith.constant 0 : index
    %c0_57 = arith.constant 0 : index
    %63 = vector.load %arg15[%c0_56, %c0_57] : memref<256x256xf32, #tpu.memory_space<vmem>>, vector<256x256xf32>
    tpu.vector_store %arg15[%c0_56, %c0_57], %62 {strides = array<i32>} : memref<256x256xf32, #tpu.memory_space<vmem>>, vector<256x256xf32>,
    %c3_i32 = arith.constant 3 : i32
    %64 = arith.cmpi eq, %arg1, %c3_i32 : i32
    %65 = arith.extui %64 : i1 to i32
    %c0_i32_58 = arith.constant 0 : i32
    %66 = arith.cmpi ne, %65, %c0_i32_58 : i32
    scf.if %66 {
      %c0_i32_59 = arith.constant 0 : i32
      %67 = arith.cmpi eq, %arg0, %c0_i32_59 : i32
      %68 = arith.extui %67 : i1 to i32
      %69 = arith.sitofp %68 : i32 to f32
      %c0_60 = arith.constant 0 : index
      %c0_61 = arith.constant 0 : index
      %70 = vector.load %arg5[%c0_60, %c0_61] : memref<8x256xf32, #tpu.memory_space<vmem>>, vector<8x256xf32>
      %cst_62 = arith.constant dense<0.000000e+00> : vector<256xf32>
      %71 = vector.multi_reduction <add>, %70, %cst_62 [0] : vector<8x256xf32> to vector<256xf32>
      %72 = vector.shape_cast %71 : vector<256xf32> to vector<1x256xf32>
      %c0_63 = arith.constant 0 : index
      %c0_64 = arith.constant 0 : index
      %73 = vector.load %arg6[%c0_63, %c0_64] : memref<8x256xf32, #tpu.memory_space<vmem>>, vector<8x256xf32>
      %cst_65 = arith.constant dense<0.000000e+00> : vector<256xf32>
      %74 = vector.multi_reduction <add>, %73, %cst_65 [0] : vector<8x256xf32> to vector<256xf32>
      %75 = vector.shape_cast %74 : vector<256xf32> to vector<1x256xf32>
      %c0_66 = arith.constant 0 : index
      %c0_67 = arith.constant 0 : index
      %76 = vector.load %arg7[%c0_66, %c0_67] : memref<8x256xf32, #tpu.memory_space<vmem>>, vector<8x256xf32>
      %cst_68 = arith.constant dense<0.000000e+00> : vector<256xf32>
      %77 = vector.multi_reduction <add>, %76, %cst_68 [0] : vector<8x256xf32> to vector<256xf32>
      %78 = vector.shape_cast %77 : vector<256xf32> to vector<1x256xf32>
      %c0_69 = arith.constant 0 : index
      %c0_70 = arith.constant 0 : index
      %79 = vector.load %arg8[%c0_69, %c0_70] : memref<8x256xf32, #tpu.memory_space<vmem>>, vector<8x256xf32>
      %cst_71 = arith.constant dense<0.000000e+00> : vector<256xf32>
      %80 = vector.multi_reduction <add>, %79, %cst_71 [0] : vector<8x256xf32> to vector<256xf32>
      %81 = vector.shape_cast %80 : vector<256xf32> to vector<1x256xf32>
      %c0_72 = arith.constant 0 : index
      %c0_73 = arith.constant 0 : index
      %82 = vector.load %arg10[%c0_72, %c0_73] : memref<8x256xf32, #tpu.memory_space<vmem>>, vector<8x256xf32>
      %cst_74 = arith.constant dense<0.000000e+00> : vector<256xf32>
      %83 = vector.multi_reduction <add>, %82, %cst_74 [0] : vector<8x256xf32> to vector<256xf32>
      %84 = vector.shape_cast %83 : vector<256xf32> to vector<1x256xf32>
      %c0_75 = arith.constant 0 : index
      %c0_76 = arith.constant 0 : index
      %85 = vector.load %arg11[%c0_75, %c0_76] : memref<8x256xf32, #tpu.memory_space<vmem>>, vector<8x256xf32>
      %cst_77 = arith.constant dense<0.000000e+00> : vector<256xf32>
      %86 = vector.multi_reduction <add>, %85, %cst_77 [0] : vector<8x256xf32> to vector<256xf32>
      %87 = vector.shape_cast %86 : vector<256xf32> to vector<1x256xf32>
      %c0_78 = arith.constant 0 : index
      %c0_79 = arith.constant 0 : index
      %88 = vector.load %arg12[%c0_78, %c0_79] : memref<8x256xf32, #tpu.memory_space<vmem>>, vector<8x256xf32>
      %cst_80 = arith.constant dense<0.000000e+00> : vector<256xf32>
      %89 = vector.multi_reduction <add>, %88, %cst_80 [0] : vector<8x256xf32> to vector<256xf32>
      %90 = vector.shape_cast %89 : vector<256xf32> to vector<1x256xf32>
      %c0_81 = arith.constant 0 : index
      %c0_82 = arith.constant 0 : index
      %91 = vector.load %arg13[%c0_81, %c0_82] : memref<8x256xf32, #tpu.memory_space<vmem>>, vector<8x256xf32>
      %cst_83 = arith.constant dense<0.000000e+00> : vector<256xf32>
      %92 = vector.multi_reduction <add>, %91, %cst_83 [0] : vector<8x256xf32> to vector<256xf32>
      %93 = vector.shape_cast %92 : vector<256xf32> to vector<1x256xf32>
      %94 = arith.mulf %72, %72 : vector<1x256xf32>
      %cst_84 = arith.constant 1.562500e-02 : f32
      %95 = vector.broadcast %cst_84 : f32 to vector<1x256xf32>
      %96 = arith.mulf %94, %95 : vector<1x256xf32>
      %97 = arith.subf %78, %96 : vector<1x256xf32>
      %cst_85 = arith.constant 0.0158730168 : f32
      %98 = vector.broadcast %cst_85 : f32 to vector<1x256xf32>
      %99 = arith.mulf %97, %98 : vector<1x256xf32>
      %cst_86 = arith.constant 9.99999974E-5 : f32
      %100 = vector.broadcast %cst_86 : f32 to vector<1x256xf32>
      %101 = arith.addf %99, %100 : vector<1x256xf32>
      %102 = math.sqrt %101 : vector<1x256xf32>
      %cst_87 = arith.constant 1.000000e+00 : f32
      %103 = vector.broadcast %cst_87 : f32 to vector<1x256xf32>
      %104 = arith.subf %103, %102 : vector<1x256xf32>
      %cst_88 = arith.constant 0.000000e+00 : f32
      %105 = vector.broadcast %cst_88 : f32 to vector<1x256xf32>
      %106 = arith.maximumf %104, %105 : vector<1x256xf32>
      %107 = vector.shape_cast %106 : vector<1x256xf32> to vector<1x1x256xf32>
      %cst_89 = arith.constant dense<0.000000e+00> : vector<1xf32>
      %108 = vector.multi_reduction <add>, %107, %cst_89 [1, 2] : vector<1x1x256xf32> to vector<1xf32>
      %109 = vector.shape_cast %108 : vector<1xf32> to vector<1x1x1xf32>
      %110 = vector.extract %109[0, 0, 0] : f32 from vector<1x1x1xf32>
      %111 = arith.mulf %75, %75 : vector<1x256xf32>
      %cst_90 = arith.constant 1.562500e-02 : f32
      %112 = vector.broadcast %cst_90 : f32 to vector<1x256xf32>
      %113 = arith.mulf %111, %112 : vector<1x256xf32>
      %114 = arith.subf %81, %113 : vector<1x256xf32>
      %cst_91 = arith.constant 0.0158730168 : f32
      %115 = vector.broadcast %cst_91 : f32 to vector<1x256xf32>
      %116 = arith.mulf %114, %115 : vector<1x256xf32>
      %cst_92 = arith.constant 9.99999974E-5 : f32
      %117 = vector.broadcast %cst_92 : f32 to vector<1x256xf32>
      %118 = arith.addf %116, %117 : vector<1x256xf32>
      %119 = math.sqrt %118 : vector<1x256xf32>
      %cst_93 = arith.constant 1.000000e+00 : f32
      %120 = vector.broadcast %cst_93 : f32 to vector<1x256xf32>
      %121 = arith.subf %120, %119 : vector<1x256xf32>
      %cst_94 = arith.constant 0.000000e+00 : f32
      %122 = vector.broadcast %cst_94 : f32 to vector<1x256xf32>
      %123 = arith.maximumf %121, %122 : vector<1x256xf32>
      %124 = vector.shape_cast %123 : vector<1x256xf32> to vector<1x1x256xf32>
      %cst_95 = arith.constant dense<0.000000e+00> : vector<1xf32>
      %125 = vector.multi_reduction <add>, %124, %cst_95 [1, 2] : vector<1x1x256xf32> to vector<1xf32>
      %126 = vector.shape_cast %125 : vector<1xf32> to vector<1x1x1xf32>
      %127 = vector.extract %126[0, 0, 0] : f32 from vector<1x1x1xf32>
      %128 = arith.addf %110, %127 : f32
      %cst_96 = arith.constant 3.906250e-03 : f32
      %129 = arith.mulf %128, %cst_96 : f32
      %c0_97 = arith.constant 0 : index
      %c0_98 = arith.constant 0 : index
      %130 = vector.load %arg9[%c0_97, %c0_98] : memref<8x256xf32, #tpu.memory_space<vmem>>, vector<8x256xf32>
      %131 = vector.shape_cast %130 : vector<8x256xf32> to vector<1x8x256xf32>
      %cst_99 = arith.constant dense<0.000000e+00> : vector<1xf32>
      %132 = vector.multi_reduction <add>, %131, %cst_99 [1, 2] : vector<1x8x256xf32> to vector<1xf32>
      %133 = vector.shape_cast %132 : vector<1xf32> to vector<1x1x1xf32>
      %134 = vector.extract %133[0, 0, 0] : f32 from vector<1x1x1xf32>
      %cst_100 = arith.constant 6.10351563E-5 : f32
      %135 = arith.mulf %134, %cst_100 : f32
      %136 = tpu.iota {dimensions = array<i32: 0>} : vector<8x256xi32>
      %137 = tpu.iota {dimensions = array<i32: 0>} : vector<8x256xi32>
      %c0_101 = arith.constant 0 : index
      %c0_102 = arith.constant 0 : index
      %138 = vector.load %arg14[%c0_101, %c0_102] : memref<256x256xf32, #tpu.memory_space<vmem>>, vector<256x256xf32>
      %139 = arith.mulf %138, %138 : vector<256x256xf32>
      %140 = vector.shape_cast %139 : vector<256x256xf32> to vector<1x256x256xf32>
      %cst_103 = arith.constant dense<0.000000e+00> : vector<1xf32>
      %141 = vector.multi_reduction <add>, %140, %cst_103 [1, 2] : vector<1x256x256xf32> to vector<1xf32>
      %142 = vector.shape_cast %141 : vector<1xf32> to vector<1x1x1xf32>
      %143 = vector.extract %142[0, 0, 0] : f32 from vector<1x1x1xf32>
      %c0_i32_104 = arith.constant 0 : i32
      %144 = vector.broadcast %c0_i32_104 : i32 to vector<8x256xi32>
      %145 = arith.cmpi eq, %136, %144 : vector<8x256xi32>
      %146 = vector.shape_cast %72 : vector<1x256xf32> to vector<1x256xf32>
      %147 = vector.broadcast %146 : vector<1x256xf32> to vector<8x256xf32>
      %cst_105 = arith.constant 0.000000e+00 : f32
      %148 = vector.broadcast %cst_105 : f32 to vector<8x256xf32>
      %149 = arith.select %145, %147, %148 : vector<8x256xi1>, vector<8x256xf32>
      %c0_i32_106 = arith.constant 0 : i32
      %150 = vector.broadcast %c0_i32_106 : i32 to vector<8x256xi32>
      %151 = arith.cmpi eq, %137, %150 : vector<8x256xi32>
      %152 = vector.shape_cast %84 : vector<1x256xf32> to vector<1x256xf32>
      %153 = vector.broadcast %152 : vector<1x256xf32> to vector<8x256xf32>
      %cst_107 = arith.constant 0.000000e+00 : f32
      %154 = vector.broadcast %cst_107 : f32 to vector<8x256xf32>
      %155 = arith.select %151, %153, %154 : vector<8x256xi1>, vector<8x256xf32>
      %cst_108 = arith.constant dense<0.000000e+00> : vector<8x256xf32>
      %156 = tpu.matmul %149, %138, %cst_108 {dimension_numbers = #tpu.dot_dimension_numbers<[1], [0], [0], [1], [0, 0, 1, 1], [], []>} : vector<8x256xf32>, vector<256x256xf32>, vector<8x256xf32> -> vector<8x256xf32>
      %157 = arith.mulf %156, %155 : vector<8x256xf32>
      %158 = vector.shape_cast %157 : vector<8x256xf32> to vector<1x8x256xf32>
      %cst_109 = arith.constant dense<0.000000e+00> : vector<1xf32>
      %159 = vector.multi_reduction <add>, %158, %cst_109 [1, 2] : vector<1x8x256xf32> to vector<1xf32>
      %160 = vector.shape_cast %159 : vector<1xf32> to vector<1x1x1xf32>
      %161 = vector.extract %160[0, 0, 0] : f32 from vector<1x1x1xf32>
      %162 = arith.mulf %84, %84 : vector<1x256xf32>
      %cst_110 = arith.constant 1.562500e-02 : f32
      %163 = vector.broadcast %cst_110 : f32 to vector<1x256xf32>
      %164 = arith.mulf %162, %163 : vector<1x256xf32>
      %165 = arith.subf %90, %164 : vector<1x256xf32>
      %166 = arith.mulf %165, %165 : vector<1x256xf32>
      %167 = vector.shape_cast %166 : vector<1x256xf32> to vector<1x1x256xf32>
      %cst_111 = arith.constant dense<0.000000e+00> : vector<1xf32>
      %168 = vector.multi_reduction <add>, %167, %cst_111 [1, 2] : vector<1x1x256xf32> to vector<1xf32>
      %169 = vector.shape_cast %168 : vector<1xf32> to vector<1x1x1xf32>
      %170 = vector.extract %169[0, 0, 0] : f32 from vector<1x1x1xf32>
      %171 = arith.mulf %72, %72 : vector<1x256xf32>
      %172 = vector.shape_cast %171 : vector<1x256xf32> to vector<1x1x256xf32>
      %cst_112 = arith.constant dense<0.000000e+00> : vector<1xf32>
      %173 = vector.multi_reduction <add>, %172, %cst_112 [1, 2] : vector<1x1x256xf32> to vector<1xf32>
      %174 = vector.shape_cast %173 : vector<1xf32> to vector<1x1x1xf32>
      %175 = vector.extract %174[0, 0, 0] : f32 from vector<1x1x1xf32>
      %cst_113 = arith.constant 1.562500e-02 : f32
      %176 = arith.mulf %175, %cst_113 : f32
      %cst_114 = arith.constant 1.562500e-02 : f32
      %177 = arith.mulf %175, %cst_114 : f32
      %178 = arith.mulf %176, %177 : f32
      %cst_115 = arith.constant 3.125000e-02 : f32
      %179 = arith.mulf %cst_115, %161 : f32
      %180 = arith.subf %143, %179 : f32
      %181 = arith.subf %180, %170 : f32
      %182 = arith.mulf %69, %178 : f32
      %183 = arith.addf %181, %182 : f32
      %cst_116 = arith.constant 2.51952646E-4 : f32
      %184 = arith.mulf %183, %cst_116 : f32
      %c0_117 = arith.constant 0 : index
      %c0_118 = arith.constant 0 : index
      %185 = vector.load %arg15[%c0_117, %c0_118] : memref<256x256xf32, #tpu.memory_space<vmem>>, vector<256x256xf32>
      %186 = arith.mulf %185, %185 : vector<256x256xf32>
      %187 = vector.shape_cast %186 : vector<256x256xf32> to vector<1x256x256xf32>
      %cst_119 = arith.constant dense<0.000000e+00> : vector<1xf32>
      %188 = vector.multi_reduction <add>, %187, %cst_119 [1, 2] : vector<1x256x256xf32> to vector<1xf32>
      %189 = vector.shape_cast %188 : vector<1xf32> to vector<1x1x1xf32>
      %190 = vector.extract %189[0, 0, 0] : f32 from vector<1x1x1xf32>
      %c0_i32_120 = arith.constant 0 : i32
      %191 = vector.broadcast %c0_i32_120 : i32 to vector<8x256xi32>
      %192 = arith.cmpi eq, %136, %191 : vector<8x256xi32>
      %193 = vector.shape_cast %75 : vector<1x256xf32> to vector<1x256xf32>
      %194 = vector.broadcast %193 : vector<1x256xf32> to vector<8x256xf32>
      %cst_121 = arith.constant 0.000000e+00 : f32
      %195 = vector.broadcast %cst_121 : f32 to vector<8x256xf32>
      %196 = arith.select %192, %194, %195 : vector<8x256xi1>, vector<8x256xf32>
      %c0_i32_122 = arith.constant 0 : i32
      %197 = vector.broadcast %c0_i32_122 : i32 to vector<8x256xi32>
      %198 = arith.cmpi eq, %137, %197 : vector<8x256xi32>
      %199 = vector.shape_cast %87 : vector<1x256xf32> to vector<1x256xf32>
      %200 = vector.broadcast %199 : vector<1x256xf32> to vector<8x256xf32>
      %cst_123 = arith.constant 0.000000e+00 : f32
      %201 = vector.broadcast %cst_123 : f32 to vector<8x256xf32>
      %202 = arith.select %198, %200, %201 : vector<8x256xi1>, vector<8x256xf32>
      %cst_124 = arith.constant dense<0.000000e+00> : vector<8x256xf32>
      %203 = tpu.matmul %196, %185, %cst_124 {dimension_numbers = #tpu.dot_dimension_numbers<[1], [0], [0], [1], [0, 0, 1, 1], [], []>} : vector<8x256xf32>, vector<256x256xf32>, vector<8x256xf32> -> vector<8x256xf32>
      %204 = arith.mulf %203, %202 : vector<8x256xf32>
      %205 = vector.shape_cast %204 : vector<8x256xf32> to vector<1x8x256xf32>
      %cst_125 = arith.constant dense<0.000000e+00> : vector<1xf32>
      %206 = vector.multi_reduction <add>, %205, %cst_125 [1, 2] : vector<1x8x256xf32> to vector<1xf32>
      %207 = vector.shape_cast %206 : vector<1xf32> to vector<1x1x1xf32>
      %208 = vector.extract %207[0, 0, 0] : f32 from vector<1x1x1xf32>
      %209 = arith.mulf %87, %87 : vector<1x256xf32>
      %cst_126 = arith.constant 1.562500e-02 : f32
      %210 = vector.broadcast %cst_126 : f32 to vector<1x256xf32>
      %211 = arith.mulf %209, %210 : vector<1x256xf32>
      %212 = arith.subf %93, %211 : vector<1x256xf32>
      %213 = arith.mulf %212, %212 : vector<1x256xf32>
      %214 = vector.shape_cast %213 : vector<1x256xf32> to vector<1x1x256xf32>
      %cst_127 = arith.constant dense<0.000000e+00> : vector<1xf32>
      %215 = vector.multi_reduction <add>, %214, %cst_127 [1, 2] : vector<1x1x256xf32> to vector<1xf32>
      %216 = vector.shape_cast %215 : vector<1xf32> to vector<1x1x1xf32>
      %217 = vector.extract %216[0, 0, 0] : f32 from vector<1x1x1xf32>
      %218 = arith.mulf %75, %75 : vector<1x256xf32>
      %219 = vector.shape_cast %218 : vector<1x256xf32> to vector<1x1x256xf32>
      %cst_128 = arith.constant dense<0.000000e+00> : vector<1xf32>
      %220 = vector.multi_reduction <add>, %219, %cst_128 [1, 2] : vector<1x1x256xf32> to vector<1xf32>
      %221 = vector.shape_cast %220 : vector<1xf32> to vector<1x1x1xf32>
      %222 = vector.extract %221[0, 0, 0] : f32 from vector<1x1x1xf32>
      %cst_129 = arith.constant 1.562500e-02 : f32
      %223 = arith.mulf %222, %cst_129 : f32
      %cst_130 = arith.constant 1.562500e-02 : f32
      %224 = arith.mulf %222, %cst_130 : f32
      %225 = arith.mulf %223, %224 : f32
      %cst_131 = arith.constant 3.125000e-02 : f32
      %226 = arith.mulf %cst_131, %208 : f32
      %227 = arith.subf %190, %226 : f32
      %228 = arith.subf %227, %217 : f32
      %229 = arith.mulf %69, %225 : f32
      %230 = arith.addf %228, %229 : f32
      %cst_132 = arith.constant 2.51952646E-4 : f32
      %231 = arith.mulf %230, %cst_132 : f32
      %232 = arith.addf %184, %231 : f32
      %cst_133 = arith.constant 3.906250e-03 : f32
      %233 = arith.mulf %232, %cst_133 : f32
      %cst_134 = arith.constant 1.000000e+00 : f32
      %234 = arith.mulf %cst_134, %233 : f32
      %cst_135 = arith.constant 2.500000e+01 : f32
      %235 = arith.mulf %cst_135, %135 : f32
      %cst_136 = arith.constant 2.500000e+01 : f32
      %236 = arith.mulf %cst_136, %129 : f32
      %237 = arith.addf %235, %236 : f32
      %238 = arith.mulf %69, %237 : f32
      %239 = arith.addf %234, %238 : f32
      %cst_137 = arith.constant 0.000000e+00 : f32
      %240 = vector.broadcast %cst_137 : f32 to vector<1x8x128xf32>
      %241 = vector.broadcast %239 : f32 to vector<1x8x128xf32>
      %242 = arith.addf %240, %241 : vector<1x8x128xf32>
      %c0_138 = arith.constant 0 : index
      %c0_139 = arith.constant 0 : index
      %c0_140 = arith.constant 0 : index
      %243 = vector.load %arg4[%c0_138, %c0_139, %c0_140] : memref<1x8x128xf32, #tpu.memory_space<vmem>>, vector<1x8x128xf32>
      tpu.vector_store %arg4[%c0_138, %c0_139, %c0_140], %242 {strides = array<i32>} : memref<1x8x128xf32, #tpu.memory_space<vmem>>, vector<1x8x128xf32>,
    } else {
    }
    return
  }
  func.func @transform_0(%arg0: i32, %arg1: i32) -> (i32, i32) {
    %c0_i32 = arith.constant 0 : i32
    %c0_i32_0 = arith.constant 0 : i32
    return %arg1, %c0_i32 : i32, i32
  }
  func.func @transform_1(%arg0: i32, %arg1: i32) -> (i32, i32) {
    %c0_i32 = arith.constant 0 : i32
    %c0_i32_0 = arith.constant 0 : i32
    return %arg1, %c0_i32 : i32, i32
  }
  func.func @transform_2(%arg0: i32, %arg1: i32) -> (i32, i32, i32) {
    %c0_i32 = arith.constant 0 : i32
    %c0_i32_0 = arith.constant 0 : i32
    %c0_i32_1 = arith.constant 0 : i32
    return %arg0, %c0_i32, %c0_i32_0 : i32, i32, i32
  }
}

</mosaic_0001>

<llo_original>
// kernel: tpu_custom_call.1
$region0: #{tpu_custom_call.1}
  #allocation0 [shape = 'u32[]', space=smem, size = 0x4, offset = 0x4, fixed_abs, tag = 'smem constant byte address 0x4 - core index']
  #allocation1 [shape = 'u32[144,128]{1,0:T(1,128)}', space=vmem, size = 0x12000, scoped, tag = 'internal scratch']
  #allocation2 [shape = 'f32[8,256]{1,0:T(8,128)}', space=vmem, size = 0x2000, scoped, tag = 'scratch operand']
  #allocation3 [shape = 'f32[8,256]{1,0:T(8,128)}', space=vmem, size = 0x2000, scoped, tag = 'scratch operand']
  #allocation4 [shape = 'f32[8,256]{1,0:T(8,128)}', space=vmem, size = 0x2000, scoped, tag = 'scratch operand']
  #allocation5 [shape = 'f32[8,256]{1,0:T(8,128)}', space=vmem, size = 0x2000, scoped, tag = 'scratch operand']
  #allocation6 [shape = 'f32[8,256]{1,0:T(8,128)}', space=vmem, size = 0x2000, scoped, tag = 'scratch operand']
  #allocation7 [shape = 'f32[8,256]{1,0:T(8,128)}', space=vmem, size = 0x2000, scoped, tag = 'scratch operand']
  #allocation8 [shape = 'f32[8,256]{1,0:T(8,128)}', space=vmem, size = 0x2000, scoped, tag = 'scratch operand']
  #allocation9 [shape = 'f32[8,256]{1,0:T(8,128)}', space=vmem, size = 0x2000, scoped, tag = 'scratch operand']
  #allocation10 [shape = 'f32[8,256]{1,0:T(8,128)}', space=vmem, size = 0x2000, scoped, tag = 'scratch operand']
  #allocation11 [shape = 'f32[256,256]{1,0:T(8,128)}', space=vmem, size = 0x40000, scoped, tag = 'scratch operand']
  #allocation12 [shape = 'f32[256,256]{1,0:T(8,128)}', space=vmem, size = 0x40000, scoped, tag = 'scratch operand']
  %s0 = inlined_call_operand.hbm [shape: f32[64,256], index: 0, kind: input, shape index: {}]
  %s1 = inlined_call_operand.hbm [shape: f32[64,256], index: 1, kind: input, shape index: {}]
  %s2 = inlined_call_operand.hbm [shape: f32[1,8,128], index: 2, kind: output, shape index: {}]
  %s3 = sld [smem:[#allocation0]]
  $region57: #{tpu_custom_call.1} parent=0
    _
  %s5 = ssub.s32 1, %s3
  %s6 = scalar_select 0, %s5, %s3
  $region1: #{tpu_custom_call.1} parent=0
    #allocation13 [shape = 'u8[32768]{0}', space=vmem, size = 0x8000, scoped, tag = 'input window, operand 0']
    #allocation14 [shape = 's32[2]{0}', space=sflag, size = 0x8, scoped, tag = 'scoped memory for tpu_custom_call.1']
    #allocation15 [shape = 's32[2]{0}', space=sflag, size = 0x8, scoped, tag = 'scoped memory for tpu_custom_call.1']
    #allocation16 [shape = 'u8[32768]{0}', space=vmem, size = 0x8000, scoped, tag = 'input window, operand 1']
    #allocation17 [shape = 's32[2]{0}', space=sflag, size = 0x8, scoped, tag = 'scoped memory for tpu_custom_call.1']
    #allocation18 [shape = 'u8[4096]{0}', space=vmem, size = 0x1000, scoped, tag = 'output window, operand 0, single buffered']
    %7 = vsyncpa [#allocation14], 0
    %s8 = scalar_lea.sflag [#allocation14], 1
    %9 = vsyncpa %s8, 0
    %10 = vsyncpa [#allocation17], 0
    %s11 = scalar_lea.sflag [#allocation17], 1
    %12 = vsyncpa %s11, 0
    %13 = vsyncpa [#allocation15], 0
    loop: start=0, step=1, limit=6
    $region2: #{tpu_custom_call.1} parent=1 // loop_pre_header
      _
    $region3: #{tpu_custom_call.1} parent=1 // loop_header
      %s15 = sphi 0, %s19
      %p16 = scmp.ge.s32.totalorder %s15, 6
      %s22 = sphi 0, %s34
      %s23 = sphi 0, %s30
      %s24 = sphi 0, %s22
      %s25 = sphi 0, %s23
      %s26 = sphi 0, %s24
      %s27 = sphi 0, %s25
      %s37 = sphi 0, %s39
      %s40 = sphi 0, %s37
      %s41 = sphi 0, %s40
      %s57 = sphi 0, %s41
      %s63 = sphi 0, %s65
      %s66 = sphi 0, %s63
      %s67 = sphi 0, %s66
      %s83 = sphi 0, %s67
      %s89 = sphi 0, %s91
      %s92 = sphi 0, %s89
      %s93 = sphi 0, %s92
      %s109 = sphi 0, %s93
    $region4: #{tpu_custom_call.1} parent=1 // loop_header_branch
      %18 = sbr.rel (%p16) target = $region8
    $region5: #{tpu_custom_call.1} parent=1 // loop_body
      %s20 = ssub.s32 %s15, 1
      %s21 = ssub.s32 %s15, 2
      %s28 = sadd.s32 1, %s23
      %p29 = scmp.ge.s32.totalorder %s28, 4
      %s30 = scalar_select %p29, 0, %s28
      %s31 = sadd.s32 1, %s22
      %s32 = scalar_select %p29, %s31, %s22
      %p33 = scmp.ge.s32.totalorder %s32, 1
      %s34 = scalar_select %p33, 0, %s32
      %s35 = ssub.s32 %s23, %s30
      %p36 = scmp.eq.s32.totalorder %s35, 0
      %s38 = sadd.s32 %s37, 1
      %s39 = scalar_select %p36, %s37, %s38
      %p42 = pneg %p36
      %p43 = scmp.eq.s32.totalorder %s15, 3
      %p44 = por %p42, %p43
      %p45 = scmp.ne.s32.totalorder %s37, %s40
      %p46 = scmp.eq.s32.totalorder %s15, 0
      %p47 = por %p45, %p46
      %p48 = scmp.ne.s32.totalorder %s37, %s40
      %p49 = scmp.eq.s32.totalorder %s20, 3
      %p50 = por %p48, %p49
      %p51 = scmp.ne.s32.totalorder %s40, %s41
      %p52 = scmp.eq.s32.totalorder %s20, 0
      %p53 = por %p51, %p52
      %p54 = scmp.ne.s32.totalorder %s40, %s41
      %p55 = scmp.eq.s32.totalorder %s21, 3
      %p56 = por %p54, %p55
      %p58 = scmp.ne.s32.totalorder %s41, %s57
      %p59 = scmp.eq.s32.totalorder %s21, 0
      %p60 = por %p58, %p59
      %s61 = ssub.s32 %s23, %s30
      %p62 = scmp.eq.s32.totalorder %s61, 0
      %s64 = sadd.s32 %s63, 1
      %s65 = scalar_select %p62, %s63, %s64
      %p68 = pneg %p62
      %p69 = scmp.eq.s32.totalorder %s15, 3
      %p70 = por %p68, %p69
      %p71 = scmp.ne.s32.totalorder %s63, %s66
      %p72 = scmp.eq.s32.totalorder %s15, 0
      %p73 = por %p71, %p72
      %p74 = scmp.ne.s32.totalorder %s63, %s66
      %p75 = scmp.eq.s32.totalorder %s20, 3
      %p76 = por %p74, %p75
      %p77 = scmp.ne.s32.totalorder %s66, %s67
      %p78 = scmp.eq.s32.totalorder %s20, 0
      %p79 = por %p77, %p78
      %p80 = scmp.ne.s32.totalorder %s66, %s67
      %p81 = scmp.eq.s32.totalorder %s21, 3
      %p82 = por %p80, %p81
      %p84 = scmp.ne.s32.totalorder %s67, %s83
      %p85 = scmp.eq.s32.totalorder %s21, 0
      %p86 = por %p84, %p85
      %s87 = ssub.s32 %s22, %s34
      %p88 = scmp.eq.s32.totalorder %s87, 0
      %s90 = sadd.s32 %s89, 1
      %s91 = scalar_select %p88, %s89, %s90
      %p94 = pneg %p88
      %p95 = scmp.eq.s32.totalorder %s15, 3
      %p96 = por %p94, %p95
      %p97 = scmp.ne.s32.totalorder %s89, %s92
      %p98 = scmp.eq.s32.totalorder %s15, 0
      %p99 = por %p97, %p98
      %p100 = scmp.ne.s32.totalorder %s89, %s92
      %p101 = scmp.eq.s32.totalorder %s20, 3
      %p102 = por %p100, %p101
      %p103 = scmp.ne.s32.totalorder %s92, %s93
      %p104 = scmp.eq.s32.totalorder %s20, 0
      %p105 = por %p103, %p104
      %p106 = scmp.ne.s32.totalorder %s92, %s93
      %p107 = scmp.eq.s32.totalorder %s21, 3
      %p108 = por %p106, %p107
      %p110 = scmp.ne.s32.totalorder %s93, %s109
      %p111 = scmp.eq.s32.totalorder %s21, 0
      %p112 = por %p110, %p111
      %p113 = scmp.le.s32.totalorder 1, %s15
      %p114 = scmp.lt.s32.totalorder %s15, 5
      %p115 = pnand %p113, %p114
      %p116 = pneg %p115
      // Predicated region
      $region9: #{tpu_custom_call.1} parent=5 // pred_check
        _
      $region10: #{tpu_custom_call.1} parent=5 // pred_check_branch
        %118 = sbr.rel (%p115) target = $region12
      $region11: #{tpu_custom_call.1} parent=5 // pred_region
        %s119 = ssub.s32 %s15, 1
      $region12: #{tpu_custom_call.1} parent=5 // pred_fallthru
        _
      %p120 = scmp.lt.s32.totalorder %s15, 4
      // Predicated region
      $region13: #{tpu_custom_call.1} parent=5 // pred_check
        %p121 = pneg %p120
      $region14: #{tpu_custom_call.1} parent=5 // pred_check_branch
        %123 = sbr.rel (%p121) target = $region16
      $region15: #{tpu_custom_call.1} parent=5 // pred_region
        // Predicated region
        $region17: #{tpu_custom_call.1} parent=15 // pred_check
          %p124 = pneg %p47
        $region18: #{tpu_custom_call.1} parent=15 // pred_check_branch
          %126 = sbr.rel (%p124) target = $region20
        $region19: #{tpu_custom_call.1} parent=15 // pred_region
          %s127 = sand.u32 %s37, 1
          %s128 = scalar_lea.sflag [#allocation14], %s127
          %s129 = sand.u32 %s37, 1
          %s130 = smul.addr %s129, 32
          %s131 = scalar_lea.vmem [#allocation13], %s130
          %s132 = smul.u32 2, %s23
          %s134 = ssub.s32 512, 512
          %135 = vsyncadd %s128, %s134
          %s136 = smul.addr %s132, 2
          %s137 = smul.addr %s136, 128
          %s138 = scalar_lea.hbm %s0, %s137
          %s139 = sshll.u32 %s131, 4
          %s140 = int_to_ptr.vmem [resolvable:$true] %s139
          %145 = dma.hbm_to_vmem [thread:$0]  %s138, 512, %s140, %s128, 256, 256, 16
        $region20: #{tpu_custom_call.1} parent=15 // pred_fallthru
          _
        // Predicated region
        $region21: #{tpu_custom_call.1} parent=15 // pred_check
          %p146 = pneg %p73
        $region22: #{tpu_custom_call.1} parent=15 // pred_check_branch
          %148 = sbr.rel (%p146) target = $region24
        $region23: #{tpu_custom_call.1} parent=15 // pred_region
          %s149 = sand.u32 %s63, 1
          %s150 = scalar_lea.sflag [#allocation17], %s149
          %s151 = sand.u32 %s63, 1
          %s152 = smul.addr %s151, 32
          %s153 = scalar_lea.vmem [#allocation16], %s152
          %s154 = smul.u32 2, %s23
          %s156 = ssub.s32 512, 512
          %157 = vsyncadd %s150, %s156
          %s158 = smul.addr %s154, 2
          %s159 = smul.addr %s158, 128
          %s160 = scalar_lea.hbm %s1, %s159
          %s161 = sshll.u32 %s153, 4
          %s162 = int_to_ptr.vmem [resolvable:$true] %s161
          %167 = dma.hbm_to_vmem [thread:$0]  %s160, 512, %s162, %s150, 256, 256, 16
        $region24: #{tpu_custom_call.1} parent=15 // pred_fallthru
          _
      $region16: #{tpu_custom_call.1} parent=5 // pred_fallthru
        _
      %p168 = scmp.le.s32.totalorder 1, %s15
      %p169 = scmp.lt.s32.totalorder %s15, 5
      %p170 = pnand %p168, %p169
      %p171 = pneg %p170
      // Predicated region
      $region25: #{tpu_custom_call.1} parent=5 // pred_check
        _
      $region26: #{tpu_custom_call.1} parent=5 // pred_check_branch
        %173 = sbr.rel (%p170) target = $region28
      $region27: #{tpu_custom_call.1} parent=5 // pred_region
        %s174 = ssub.s32 %s15, 1
        %s175 = sand.u32 %s40, 1
        %s176 = scalar_lea.sflag [#allocation14], %s175
        %s177 = sand.u32 %s40, 1
        %s178 = smul.addr %s177, 32
        %s179 = scalar_lea.vmem [#allocation13], %s178
        // Predicated region
        $region29: #{tpu_custom_call.1} parent=27 // pred_check
          %p180 = pneg %p53
        $region30: #{tpu_custom_call.1} parent=27 // pred_check_branch
          %182 = sbr.rel (%p180) target = $region32
        $region31: #{tpu_custom_call.1} parent=27 // pred_region
          %183 = dma.done %s176, 512
        $region32: #{tpu_custom_call.1} parent=27 // pred_fallthru
          _
        %s184 = sand.u32 %s66, 1
        %s185 = scalar_lea.sflag [#allocation17], %s184
        %s186 = sand.u32 %s66, 1
        %s187 = smul.addr %s186, 32
        %s188 = scalar_lea.vmem [#allocation16], %s187
        // Predicated region
        $region33: #{tpu_custom_call.1} parent=27 // pred_check
          %p189 = pneg %p79
        $region34: #{tpu_custom_call.1} parent=27 // pred_check_branch
          %191 = sbr.rel (%p189) target = $region36
        $region35: #{tpu_custom_call.1} parent=27 // pred_region
          %192 = dma.done %s185, 512
        $region36: #{tpu_custom_call.1} parent=27 // pred_fallthru
          _
        %s193 = sand.u32 %s40, 1
        %s194 = scalar_lea.sflag [#allocation14], %s193
        %s195 = sand.u32 %s40, 1
        %s196 = smul.addr %s195, 32
        %s197 = scalar_lea.vmem [#allocation13], %s196
        %p198 = pneg %p53
        %p199 = pneg %p50
        %s200 = sand.u32 %s66, 1
        %s201 = scalar_lea.sflag [#allocation17], %s200
        %s202 = sand.u32 %s66, 1
        %s203 = smul.addr %s202, 32
        %s204 = scalar_lea.vmem [#allocation16], %s203
        %p205 = pneg %p79
        %p206 = pneg %p76
        %p207 = pneg %p105
        %p208 = pneg %p102
        %s209 = smul.u32 2, %s25
        %s210 = smul.u32 2, %s25
        %p211 = scmp.eq.s32.totalorder %s25, 0
        // Predicated region
        $region37: #{tpu_custom_call.1} parent=27 // pred_check
          %p212 = pneg %p211
        $region38: #{tpu_custom_call.1} parent=27 // pred_check_branch
          %214 = sbr.rel (%p212) target = $region40
        $region39: #{tpu_custom_call.1} parent=27 // pred_region
          %215 = vst [vmem:[#allocation2] sm:$0xff] 0.0
          %216 = vst [vmem:[#allocation2 + $0x8] sm:$0xff] 0.0
          %217 = vst [vmem:[#allocation3] sm:$0xff] 0.0
          %218 = vst [vmem:[#allocation3 + $0x8] sm:$0xff] 0.0
          %219 = vst [vmem:[#allocation4] sm:$0xff] 0.0
          %220 = vst [vmem:[#allocation4 + $0x8] sm:$0xff] 0.0
          %221 = vst [vmem:[#allocation5] sm:$0xff] 0.0
          %222 = vst [vmem:[#allocation5 + $0x8] sm:$0xff] 0.0
          %223 = vst [vmem:[#allocation6] sm:$0xff] 0.0
          %224 = vst [vmem:[#allocation6 + $0x8] sm:$0xff] 0.0
          %225 = vst [vmem:[#allocation7] sm:$0xff] 0.0
          %226 = vst [vmem:[#allocation7 + $0x8] sm:$0xff] 0.0
          %227 = vst [vmem:[#allocation8] sm:$0xff] 0.0
          %228 = vst [vmem:[#allocation8 + $0x8] sm:$0xff] 0.0
          %229 = vst [vmem:[#allocation9] sm:$0xff] 0.0
          %230 = vst [vmem:[#allocation9 + $0x8] sm:$0xff] 0.0
          %231 = vst [vmem:[#allocation10] sm:$0xff] 0.0
          %232 = vst [vmem:[#allocation10 + $0x8] sm:$0xff] 0.0
          %233 = vst [vmem:[#allocation11] sm:$0xff] 0.0
          %234 = vst [vmem:[#allocation11 + $0x8] sm:$0xff] 0.0
          %235 = vst [vmem:[#allocation11 + $0x10] sm:$0xff] 0.0
          %236 = vst [vmem:[#allocation11 + $0x18] sm:$0xff] 0.0
          %237 = vst [vmem:[#allocation11 + $0x20] sm:$0xff] 0.0
          %238 = vst [vmem:[#allocation11 + $0x28] sm:$0xff] 0.0
          %239 = vst [vmem:[#allocation11 + $0x30] sm:$0xff] 0.0
          %240 = vst [vmem:[#allocation11 + $0x38] sm:$0xff] 0.0
          %241 = vst [vmem:[#allocation11 + $0x40] sm:$0xff] 0.0
          %242 = vst [vmem:[#allocation11 + $0x48] sm:$0xff] 0.0
          %243 = vst [vmem:[#allocation11 + $0x50] sm:$0xff] 0.0
          %244 = vst [vmem:[#allocation11 + $0x58] sm:$0xff] 0.0
          %245 = vst [vmem:[#allocation11 + $0x60] sm:$0xff] 0.0
          %246 = vst [vmem:[#allocation11 + $0x68] sm:$0xff] 0.0
          %247 = vst [vmem:[#allocation11 + $0x70] sm:$0xff] 0.0
          %248 = vst [vmem:[#allocation11 + $0x78] sm:$0xff] 0.0
          %249 = vst [vmem:[#allocation11 + $0x80] sm:$0xff] 0.0
          %250 = vst [vmem:[#allocation11 + $0x88] sm:$0xff] 0.0
          %251 = vst [vmem:[#allocation11 + $0x90] sm:$0xff] 0.0
          %252 = vst [vmem:[#allocation11 + $0x98] sm:$0xff] 0.0
          %253 = vst [vmem:[#allocation11 + $0xa0] sm:$0xff] 0.0
          %254 = vst [vmem:[#allocation11 + $0xa8] sm:$0xff] 0.0
          %255 = vst [vmem:[#allocation11 + $0xb0] sm:$0xff] 0.0
          %256 = vst [vmem:[#allocation11 + $0xb8] sm:$0xff] 0.0
          %257 = vst [vmem:[#allocation11 + $0xc0] sm:$0xff] 0.0
          %258 = vst [vmem:[#allocation11 + $0xc8] sm:$0xff] 0.0
          %259 = vst [vmem:[#allocation11 + $0xd0] sm:$0xff] 0.0
          %260 = vst [vmem:[#allocation11 + $0xd8] sm:$0xff] 0.0
          %261 = vst [vmem:[#allocation11 + $0xe0] sm:$0xff] 0.0
          %262 = vst [vmem:[#allocation11 + $0xe8] sm:$0xff] 0.0
          %263 = vst [vmem:[#allocation11 + $0xf0] sm:$0xff] 0.0
          %264 = vst [vmem:[#allocation11 + $0xf8] sm:$0xff] 0.0
          %265 = vst [vmem:[#allocation11 + $0x100] sm:$0xff] 0.0
          %266 = vst [vmem:[#allocation11 + $0x108] sm:$0xff] 0.0
          %267 = vst [vmem:[#allocation11 + $0x110] sm:$0xff] 0.0
          %268 = vst [vmem:[#allocation11 + $0x118] sm:$0xff] 0.0
          %269 = vst [vmem:[#allocation11 + $0x120] sm:$0xff] 0.0
          %270 = vst [vmem:[#allocation11 + $0x128] sm:$0xff] 0.0
          %271 = vst [vmem:[#allocation11 + $0x130] sm:$0xff] 0.0
          %272 = vst [vmem:[#allocation11 + $0x138] sm:$0xff] 0.0
          %273 = vst [vmem:[#allocation11 + $0x140] sm:$0xff] 0.0
          %274 = vst [vmem:[#allocation11 + $0x148] sm:$0xff] 0.0
          %275 = vst [vmem:[#allocation11 + $0x150] sm:$0xff] 0.0
          %276 = vst [vmem:[#allocation11 + $0x158] sm:$0xff] 0.0
          %277 = vst [vmem:[#allocation11 + $0x160] sm:$0xff] 0.0
          %278 = vst [vmem:[#allocation11 + $0x168] sm:$0xff] 0.0
          %279 = vst [vmem:[#allocation11 + $0x170] sm:$0xff] 0.0
          %280 = vst [vmem:[#allocation11 + $0x178] sm:$0xff] 0.0
          %281 = vst [vmem:[#allocation11 + $0x180] sm:$0xff] 0.0
          %282 = vst [vmem:[#allocation11 + $0x188] sm:$0xff] 0.0
          %283 = vst [vmem:[#allocation11 + $0x190] sm:$0xff] 0.0
          %284 = vst [vmem:[#allocation11 + $0x198] sm:$0xff] 0.0
          %285 = vst [vmem:[#allocation11 + $0x1a0] sm:$0xff] 0.0
          %286 = vst [vmem:[#allocation11 + $0x1a8] sm:$0xff] 0.0
          %287 = vst [vmem:[#allocation11 + $0x1b0] sm:$0xff] 0.0
          %288 = vst [vmem:[#allocation11 + $0x1b8] sm:$0xff] 0.0
          %289 = vst [vmem:[#allocation11 + $0x1c0] sm:$0xff] 0.0
          %290 = vst [vmem:[#allocation11 + $0x1c8] sm:$0xff] 0.0
          %291 = vst [vmem:[#allocation11 + $0x1d0] sm:$0xff] 0.0
          %292 = vst [vmem:[#allocation11 + $0x1d8] sm:$0xff] 0.0
          %293 = vst [vmem:[#allocation11 + $0x1e0] sm:$0xff] 0.0
          %294 = vst [vmem:[#allocation11 + $0x1e8] sm:$0xff] 0.0
          %295 = vst [vmem:[#allocation11 + $0x1f0] sm:$0xff] 0.0
          %296 = vst [vmem:[#allocation11 + $0x1f8] sm:$0xff] 0.0
          %297 = vst [vmem:[#allocation12] sm:$0xff] 0.0
          %298 = vst [vmem:[#allocation12 + $0x8] sm:$0xff] 0.0
          %299 = vst [vmem:[#allocation12 + $0x10] sm:$0xff] 0.0
          %300 = vst [vmem:[#allocation12 + $0x18] sm:$0xff] 0.0
          %301 = vst [vmem:[#allocation12 + $0x20] sm:$0xff] 0.0
          %302 = vst [vmem:[#allocation12 + $0x28] sm:$0xff] 0.0
          %303 = vst [vmem:[#allocation12 + $0x30] sm:$0xff] 0.0
          %304 = vst [vmem:[#allocation12 + $0x38] sm:$0xff] 0.0
          %305 = vst [vmem:[#allocation12 + $0x40] sm:$0xff] 0.0
          %306 = vst [vmem:[#allocation12 + $0x48] sm:$0xff] 0.0
          %307 = vst [vmem:[#allocation12 + $0x50] sm:$0xff] 0.0
          %308 = vst [vmem:[#allocation12 + $0x58] sm:$0xff] 0.0
          %309 = vst [vmem:[#allocation12 + $0x60] sm:$0xff] 0.0
          %310 = vst [vmem:[#allocation12 + $0x68] sm:$0xff] 0.0
          %311 = vst [vmem:[#allocation12 + $0x70] sm:$0xff] 0.0
          %312 = vst [vmem:[#allocation12 + $0x78] sm:$0xff] 0.0
          %313 = vst [vmem:[#allocation12 + $0x80] sm:$0xff] 0.0
          %314 = vst [vmem:[#allocation12 + $0x88] sm:$0xff] 0.0
          %315 = vst [vmem:[#allocation12 + $0x90] sm:$0xff] 0.0
          %316 = vst [vmem:[#allocation12 + $0x98] sm:$0xff] 0.0
          %317 = vst [vmem:[#allocation12 + $0xa0] sm:$0xff] 0.0
          %318 = vst [vmem:[#allocation12 + $0xa8] sm:$0xff] 0.0
          %319 = vst [vmem:[#allocation12 + $0xb0] sm:$0xff] 0.0
          %320 = vst [vmem:[#allocation12 + $0xb8] sm:$0xff] 0.0
          %321 = vst [vmem:[#allocation12 + $0xc0] sm:$0xff] 0.0
          %322 = vst [vmem:[#allocation12 + $0xc8] sm:$0xff] 0.0
          %323 = vst [vmem:[#allocation12 + $0xd0] sm:$0xff] 0.0
          %324 = vst [vmem:[#allocation12 + $0xd8] sm:$0xff] 0.0
          %325 = vst [vmem:[#allocation12 + $0xe0] sm:$0xff] 0.0
          %326 = vst [vmem:[#allocation12 + $0xe8] sm:$0xff] 0.0
          %327 = vst [vmem:[#allocation12 + $0xf0] sm:$0xff] 0.0
          %328 = vst [vmem:[#allocation12 + $0xf8] sm:$0xff] 0.0
          %329 = vst [vmem:[#allocation12 + $0x100] sm:$0xff] 0.0
          %330 = vst [vmem:[#allocation12 + $0x108] sm:$0xff] 0.0
          %331 = vst [vmem:[#allocation12 + $0x110] sm:$0xff] 0.0
          %332 = vst [vmem:[#allocation12 + $0x118] sm:$0xff] 0.0
          %333 = vst [vmem:[#allocation12 + $0x120] sm:$0xff] 0.0
          %334 = vst [vmem:[#allocation12 + $0x128] sm:$0xff] 0.0
          %335 = vst [vmem:[#allocation12 + $0x130] sm:$0xff] 0.0
          %336 = vst [vmem:[#allocation12 + $0x138] sm:$0xff] 0.0
          %337 = vst [vmem:[#allocation12 + $0x140] sm:$0xff] 0.0
          %338 = vst [vmem:[#allocation12 + $0x148] sm:$0xff] 0.0
          %339 = vst [vmem:[#allocation12 + $0x150] sm:$0xff] 0.0
          %340 = vst [vmem:[#allocation12 + $0x158] sm:$0xff] 0.0
          %341 = vst [vmem:[#allocation12 + $0x160] sm:$0xff] 0.0
          %342 = vst [vmem:[#allocation12 + $0x168] sm:$0xff] 0.0
          %343 = vst [vmem:[#allocation12 + $0x170] sm:$0xff] 0.0
          %344 = vst [vmem:[#allocation12 + $0x178] sm:$0xff] 0.0
          %345 = vst [vmem:[#allocation12 + $0x180] sm:$0xff] 0.0
          %346 = vst [vmem:[#allocation12 + $0x188] sm:$0xff] 0.0
          %347 = vst [vmem:[#allocation12 + $0x190] sm:$0xff] 0.0
          %348 = vst [vmem:[#allocation12 + $0x198] sm:$0xff] 0.0
          %349 = vst [vmem:[#allocation12 + $0x1a0] sm:$0xff] 0.0
          %350 = vst [vmem:[#allocation12 + $0x1a8] sm:$0xff] 0.0
          %351 = vst [vmem:[#allocation12 + $0x1b0] sm:$0xff] 0.0
          %352 = vst [vmem:[#allocation12 + $0x1b8] sm:$0xff] 0.0
          %353 = vst [vmem:[#allocation12 + $0x1c0] sm:$0xff] 0.0
          %354 = vst [vmem:[#allocation12 + $0x1c8] sm:$0xff] 0.0
          %355 = vst [vmem:[#allocation12 + $0x1d0] sm:$0xff] 0.0
          %356 = vst [vmem:[#allocation12 + $0x1d8] sm:$0xff] 0.0
          %357 = vst [vmem:[#allocation12 + $0x1e0] sm:$0xff] 0.0
          %358 = vst [vmem:[#allocation12 + $0x1e8] sm:$0xff] 0.0
          %359 = vst [vmem:[#allocation12 + $0x1f0] sm:$0xff] 0.0
          %360 = vst [vmem:[#allocation12 + $0x1f8] sm:$0xff] 0.0
        $region40: #{tpu_custom_call.1} parent=27 // pred_fallthru
          _
        %v361 = vld [vmem:[%s179] sm:$0xff]
        %v362 = vld [vmem:[%s179 + $0x8] sm:$0xff]
        %v363 = vld [vmem:[%s179 + $0x10] sm:$0xff]
        %v364 = vld [vmem:[%s179 + $0x18] sm:$0xff]
        %v365 = vld [vmem:[%s188] sm:$0xff]
        %v366 = vld [vmem:[%s188 + $0x8] sm:$0xff]
        %v367 = vld [vmem:[%s188 + $0x10] sm:$0xff]
        %v368 = vld [vmem:[%s188 + $0x18] sm:$0xff]
        %v369 = vld [vmem:[#allocation2] sm:$0xff]
        %v370 = vld [vmem:[#allocation2 + $0x8] sm:$0xff]
        %v371 = vadd.f32 %v361, %v363
        %v372 = vadd.f32 %v362, %v364
        %v373 = vadd.f32 %v369, %v371
        %v374 = vadd.f32 %v370, %v372
        %375 = vst [vmem:[#allocation2] sm:$0xff] %v373
        %376 = vst [vmem:[#allocation2 + $0x8] sm:$0xff] %v374
        %v377 = vld [vmem:[#allocation3] sm:$0xff]
        %v378 = vld [vmem:[#allocation3 + $0x8] sm:$0xff]
        %v379 = vadd.f32 %v365, %v367
        %v380 = vadd.f32 %v366, %v368
        %v381 = vadd.f32 %v377, %v379
        %v382 = vadd.f32 %v378, %v380
        %383 = vst [vmem:[#allocation3] sm:$0xff] %v381
        %384 = vst [vmem:[#allocation3 + $0x8] sm:$0xff] %v382
        %v385 = vld [vmem:[#allocation4] sm:$0xff]
        %v386 = vld [vmem:[#allocation4 + $0x8] sm:$0xff]
        %v387 = vmul.f32 %v361, %v361
        %v388 = vmul.f32 %v362, %v362
        %v389 = vmul.f32 %v363, %v363
        %v390 = vmul.f32 %v364, %v364
        %v391 = vadd.f32 %v387, %v389
        %v392 = vadd.f32 %v388, %v390
        %v393 = vadd.f32 %v385, %v391
        %v394 = vadd.f32 %v386, %v392
        %395 = vst [vmem:[#allocation4] sm:$0xff] %v393
        %396 = vst [vmem:[#allocation4 + $0x8] sm:$0xff] %v394
        %v397 = vld [vmem:[#allocation5] sm:$0xff]
        %v398 = vld [vmem:[#allocation5 + $0x8] sm:$0xff]
        %v399 = vmul.f32 %v365, %v365
        %v400 = vmul.f32 %v366, %v366
        %v401 = vmul.f32 %v367, %v367
        %v402 = vmul.f32 %v368, %v368
        %v403 = vadd.f32 %v399, %v401
        %v404 = vadd.f32 %v400, %v402
        %v405 = vadd.f32 %v397, %v403
        %v406 = vadd.f32 %v398, %v404
        %407 = vst [vmem:[#allocation5] sm:$0xff] %v405
        %408 = vst [vmem:[#allocation5 + $0x8] sm:$0xff] %v406
        %v409 = vsub.f32 %v361, %v365
        %v410 = vsub.f32 %v362, %v366
        %v411 = vsub.f32 %v363, %v367
        %v412 = vsub.f32 %v364, %v368
        %v413 = vld [vmem:[#allocation6] sm:$0xff]
        %v414 = vld [vmem:[#allocation6 + $0x8] sm:$0xff]
        %v415 = vmul.f32 %v409, %v409
        %v416 = vmul.f32 %v410, %v410
        %v417 = vmul.f32 %v411, %v411
        %v418 = vmul.f32 %v412, %v412
        %v419 = vadd.f32 %v415, %v417
        %v420 = vadd.f32 %v416, %v418
        %v421 = vadd.f32 %v413, %v419
        %v422 = vadd.f32 %v414, %v420
        %423 = vst [vmem:[#allocation6] sm:$0xff] %v421
        %424 = vst [vmem:[#allocation6 + $0x8] sm:$0xff] %v422
        %v425 = vld [vmem:[#allocation7] sm:$0xff]
        %v426 = vld [vmem:[#allocation7 + $0x8] sm:$0xff]
        %v427 = vadd.f32 %v425, %v371
        %v428 = vadd.f32 %v426, %v372
        %429 = vst [vmem:[#allocation7] sm:$0xff] %v427
        %430 = vst [vmem:[#allocation7 + $0x8] sm:$0xff] %v428
        %v431 = vld [vmem:[#allocation8] sm:$0xff]
        %v432 = vld [vmem:[#allocation8 + $0x8] sm:$0xff]
        %v433 = vadd.f32 %v431, %v379
        %v434 = vadd.f32 %v432, %v380
        %435 = vst [vmem:[#allocation8] sm:$0xff] %v433
        %436 = vst [vmem:[#allocation8 + $0x8] sm:$0xff] %v434
        %v437 = vld [vmem:[#allocation9] sm:$0xff]
        %v438 = vld [vmem:[#allocation9 + $0x8] sm:$0xff]
        %v439 = vadd.f32 %v437, %v391
        %v440 = vadd.f32 %v438, %v392
        %441 = vst [vmem:[#allocation9] sm:$0xff] %v439
        %442 = vst [vmem:[#allocation9 + $0x8] sm:$0xff] %v440
        %v443 = vld [vmem:[#allocation10] sm:$0xff]
        %v444 = vld [vmem:[#allocation10 + $0x8] sm:$0xff]
        %v445 = vadd.f32 %v443, %v403
        %v446 = vadd.f32 %v444, %v404
        %447 = vst [vmem:[#allocation10] sm:$0xff] %v445
        %448 = vst [vmem:[#allocation10 + $0x8] sm:$0xff] %v446
        %v449 = vld [vmem:[#allocation11] sm:$0xff]
        %v450 = vld [vmem:[#allocation11 + $0x8] sm:$0xff]
        %v451 = vld [vmem:[#allocation11 + $0x10] sm:$0xff]
        %v452 = vld [vmem:[#allocation11 + $0x18] sm:$0xff]
        %v453 = vld [vmem:[#allocation11 + $0x20] sm:$0xff]
        %v454 = vld [vmem:[#allocation11 + $0x28] sm:$0xff]
        %v455 = vld [vmem:[#allocation11 + $0x30] sm:$0xff]
        %v456 = vld [vmem:[#allocation11 + $0x38] sm:$0xff]
        %v457 = vld [vmem:[#allocation11 + $0x40] sm:$0xff]
        %v458 = vld [vmem:[#allocation11 + $0x48] sm:$0xff]
        %v459 = vld [vmem:[#allocation11 + $0x50] sm:$0xff]
        %v460 = vld [vmem:[#allocation11 + $0x58] sm:$0xff]
        %v461 = vld [vmem:[#allocation11 + $0x60] sm:$0xff]
        %v462 = vld [vmem:[#allocation11 + $0x68] sm:$0xff]
        %v463 = vld [vmem:[#allocation11 + $0x70] sm:$0xff]
        %v464 = vld [vmem:[#allocation11 + $0x78] sm:$0xff]
        %v465 = vld [vmem:[#allocation11 + $0x80] sm:$0xff]
        %v466 = vld [vmem:[#allocation11 + $0x88] sm:$0xff]
        %v467 = vld [vmem:[#allocation11 + $0x90] sm:$0xff]
        %v468 = vld [vmem:[#allocation11 + $0x98] sm:$0xff]
        %v469 = vld [vmem:[#allocation11 + $0xa0] sm:$0xff]
        %v470 = vld [vmem:[#allocation11 + $0xa8] sm:$0xff]
        %v471 = vld [vmem:[#allocation11 + $0xb0] sm:$0xff]
        %v472 = vld [vmem:[#allocation11 + $0xb8] sm:$0xff]
        %v473 = vld [vmem:[#allocation11 + $0xc0] sm:$0xff]
        %v474 = vld [vmem:[#allocation11 + $0xc8] sm:$0xff]
        %v475 = vld [vmem:[#allocation11 + $0xd0] sm:$0xff]
        %v476 = vld [vmem:[#allocation11 + $0xd8] sm:$0xff]
        %v477 = vld [vmem:[#allocation11 + $0xe0] sm:$0xff]
        %v478 = vld [vmem:[#allocation11 + $0xe8] sm:$0xff]
        %v479 = vld [vmem:[#allocation11 + $0xf0] sm:$0xff]
        %v480 = vld [vmem:[#allocation11 + $0xf8] sm:$0xff]
        %v481 = vld [vmem:[#allocation11 + $0x100] sm:$0xff]
        %v482 = vld [vmem:[#allocation11 + $0x108] sm:$0xff]
        %v483 = vld [vmem:[#allocation11 + $0x110] sm:$0xff]
        %v484 = vld [vmem:[#allocation11 + $0x118] sm:$0xff]
        %v485 = vld [vmem:[#allocation11 + $0x120] sm:$0xff]
        %v486 = vld [vmem:[#allocation11 + $0x128] sm:$0xff]
        %v487 = vld [vmem:[#allocation11 + $0x130] sm:$0xff]
        %v488 = vld [vmem:[#allocation11 + $0x138] sm:$0xff]
        %v489 = vld [vmem:[#allocation11 + $0x140] sm:$0xff]
        %v490 = vld [vmem:[#allocation11 + $0x148] sm:$0xff]
        %v491 = vld [vmem:[#allocation11 + $0x150] sm:$0xff]
        %v492 = vld [vmem:[#allocation11 + $0x158] sm:$0xff]
        %v493 = vld [vmem:[#allocation11 + $0x160] sm:$0xff]
        %v494 = vld [vmem:[#allocation11 + $0x168] sm:$0xff]
        %v495 = vld [vmem:[#allocation11 + $0x170] sm:$0xff]
        %v496 = vld [vmem:[#allocation11 + $0x178] sm:$0xff]
        %v497 = vld [vmem:[#allocation11 + $0x180] sm:$0xff]
        %v498 = vld [vmem:[#allocation11 + $0x188] sm:$0xff]
        %v499 = vld [vmem:[#allocation11 + $0x190] sm:$0xff]
        %v500 = vld [vmem:[#allocation11 + $0x198] sm:$0xff]
        %v501 = vld [vmem:[#allocation11 + $0x1a0] sm:$0xff]
        %v502 = vld [vmem:[#allocation11 + $0x1a8] sm:$0xff]
        %v503 = vld [vmem:[#allocation11 + $0x1b0] sm:$0xff]
        %v504 = vld [vmem:[#allocation11 + $0x1b8] sm:$0xff]
        %v505 = vld [vmem:[#allocation11 + $0x1c0] sm:$0xff]
        %v506 = vld [vmem:[#allocation11 + $0x1c8] sm:$0xff]
        %v507 = vld [vmem:[#allocation11 + $0x1d0] sm:$0xff]
        %v508 = vld [vmem:[#allocation11 + $0x1d8] sm:$0xff]
        %v509 = vld [vmem:[#allocation11 + $0x1e0] sm:$0xff]
        %v510 = vld [vmem:[#allocation11 + $0x1e8] sm:$0xff]
        %v511 = vld [vmem:[#allocation11 + $0x1f0] sm:$0xff]
        %v512 = vld [vmem:[#allocation11 + $0x1f8] sm:$0xff]
        %513 = vxpose.xlu0.b32.start [1/16] %v361, 128
        %514 = vxpose.xlu0.b32.cont [2/16] %v363, 128
        %515 = vxpose.xlu0.b32.cont [3/16] 0.0, 128
        %516 = vxpose.xlu0.b32.cont [4/16] 0.0, 128
        %517 = vxpose.xlu0.b32.cont [5/16] 0.0, 128
        %518 = vxpose.xlu0.b32.cont [6/16] 0.0, 128
        %519 = vxpose.xlu0.b32.cont [7/16] 0.0, 128
        %520 = vxpose.xlu0.b32.cont [8/16] 0.0, 128
        %521 = vxpose.xlu0.b32.cont [9/16] 0.0, 128
        %522 = vxpose.xlu0.b32.cont [10/16] 0.0, 128
        %523 = vxpose.xlu0.b32.cont [11/16] 0.0, 128
        %524 = vxpose.xlu0.b32.cont [12/16] 0.0, 128
        %525 = vxpose.xlu0.b32.cont [13/16] 0.0, 128
        %526 = vxpose.xlu0.b32.cont [14/16] 0.0, 128
        %527 = vxpose.xlu0.b32.cont [15/16] 0.0, 128
        %528 = vxpose.xlu0.b32.end [16/16] 0.0, 128
        %v529 = vpop.trf.xlu0
        %v530 = vpop.trf.xlu0
        %v531 = vpop.trf.xlu0
        %v532 = vpop.trf.xlu0
        %v533 = vpop.trf.xlu0
        %v534 = vpop.trf.xlu0
        %v535 = vpop.trf.xlu0
        %v536 = vpop.trf.xlu0
        %v537 = vpop.trf.xlu0
        %v538 = vpop.trf.xlu0
        %v539 = vpop.trf.xlu0
        %v540 = vpop.trf.xlu0
        %v541 = vpop.trf.xlu0
        %v542 = vpop.trf.xlu0
        %v543 = vpop.trf.xlu0
        %v544 = vpop.trf.xlu0
        %545 = vxpose.xlu0.b32.start [1/16] %v362, 128
        %546 = vxpose.xlu0.b32.cont [2/16] %v364, 128
        %547 = vxpose.xlu0.b32.cont [3/16] 0.0, 128
        %548 = vxpose.xlu0.b32.cont [4/16] 0.0, 128
        %549 = vxpose.xlu0.b32.cont [5/16] 0.0, 128
        %550 = vxpose.xlu0.b32.cont [6/16] 0.0, 128
        %551 = vxpose.xlu0.b32.cont [7/16] 0.0, 128
        %552 = vxpose.xlu0.b32.cont [8/16] 0.0, 128
        %553 = vxpose.xlu0.b32.cont [9/16] 0.0, 128
        %554 = vxpose.xlu0.b32.cont [10/16] 0.0, 128
        %555 = vxpose.xlu0.b32.cont [11/16] 0.0, 128
        %556 = vxpose.xlu0.b32.cont [12/16] 0.0, 128
        %557 = vxpose.xlu0.b32.cont [13/16] 0.0, 128
        %558 = vxpose.xlu0.b32.cont [14/16] 0.0, 128
        %559 = vxpose.xlu0.b32.cont [15/16] 0.0, 128
        %560 = vxpose.xlu0.b32.end [16/16] 0.0, 128
        %v561 = vpop.trf.xlu0
        %v562 = vpop.trf.xlu0
        %v563 = vpop.trf.xlu0
        %v564 = vpop.trf.xlu0
        %v565 = vpop.trf.xlu0
        %v566 = vpop.trf.xlu0
        %v567 = vpop.trf.xlu0
        %v568 = vpop.trf.xlu0
        %v569 = vpop.trf.xlu0
        %v570 = vpop.trf.xlu0
        %v571 = vpop.trf.xlu0
        %v572 = vpop.trf.xlu0
        %v573 = vpop.trf.xlu0
        %v574 = vpop.trf.xlu0
        %v575 = vpop.trf.xlu0
        %v576 = vpop.trf.xlu0
        %vm577 = vcmask 130048
        %v579 = vsel %vm577, %v529, 0
        %v582 = vsel %vm577, %v530, 0
        %v585 = vsel %vm577, %v531, 0
        %v588 = vsel %vm577, %v532, 0
        %v591 = vsel %vm577, %v533, 0
        %v594 = vsel %vm577, %v534, 0
        %v597 = vsel %vm577, %v535, 0
        %v600 = vsel %vm577, %v536, 0
        %v603 = vsel %vm577, %v537, 0
        %v606 = vsel %vm577, %v538, 0
        %v609 = vsel %vm577, %v539, 0
        %v612 = vsel %vm577, %v540, 0
        %v615 = vsel %vm577, %v541, 0
        %v618 = vsel %vm577, %v542, 0
        %v621 = vsel %vm577, %v543, 0
        %v624 = vsel %vm577, %v544, 0
        %v627 = vsel %vm577, %v561, 0
        %v630 = vsel %vm577, %v562, 0
        %v633 = vsel %vm577, %v563, 0
        %v636 = vsel %vm577, %v564, 0
        %v639 = vsel %vm577, %v565, 0
        %v642 = vsel %vm577, %v566, 0
        %v645 = vsel %vm577, %v567, 0
        %v648 = vsel %vm577, %v568, 0
        %v651 = vsel %vm577, %v569, 0
        %v654 = vsel %vm577, %v570, 0
        %v657 = vsel %vm577, %v571, 0
        %v660 = vsel %vm577, %v572, 0
        %v663 = vsel %vm577, %v573, 0
        %v666 = vsel %vm577, %v574, 0
        %v669 = vsel %vm577, %v575, 0
        %v672 = vsel %vm577, %v576, 0
        %674 = vmatprep.subr.mxu0 0.0
        %675 = vmatpush1.msra.mxu0 0.0
        %676 = vmatprep.subr.mxu0 0.0
        %677 = vmatpush1.msra.mxu0 0.0
        %678 = vmatprep.subr.mxu0 0.0
        %679 = vmatpush1.msra.mxu0 0.0
        %680 = vmatprep.subr.mxu0 0.0
        %681 = vmatpush1.msra.mxu0 0.0
        %682 = vmatprep.subr.mxu0 0.0
        %683 = vmatpush1.msra.mxu0 0.0
        %684 = vmatprep.subr.mxu0 0.0
        %685 = vmatpush1.msra.mxu0 0.0
        %686 = vmatprep.subr.mxu0 0.0
        %687 = vmatpush1.msra.mxu0 0.0
        %688 = vmatprep.subr.mxu0 0.0
        %689 = vmatpush1.msra.mxu0 0.0
        %690 = vmatprep.subr.mxu0 0.0
        %691 = vmatpush1.msra.mxu0 0.0
        %692 = vmatprep.subr.mxu0 0.0
        %693 = vmatpush1.msra.mxu0 0.0
        %694 = vmatprep.subr.mxu0 0.0
        %695 = vmatpush1.msra.mxu0 0.0
        %696 = vmatprep.subr.mxu0 0.0
        %697 = vmatpush1.msra.mxu0 0.0
        %698 = vmatprep.subr.mxu0 0.0
        %699 = vmatpush1.msra.mxu0 0.0
        %700 = vmatprep.subr.mxu0 0.0
        %701 = vmatpush1.msra.mxu0 0.0
        %702 = vmatprep.subr.mxu0 %v364
        %703 = vmatpush1.msra.mxu0 %v363
        %704 = vmatprep.subr.mxu0 %v362
        %705 = vmatpush1.msra.mxu0 %v361
        %706 = vmatprep.subr.mxu0 0.0
        %707 = vmatpush2.msra.mxu0 0.0
        %708 = vmatprep.subr.mxu0 0.0
        %709 = vmatpush2.msra.mxu0 0.0
        %710 = vmatprep.subr.mxu0 0.0
        %711 = vmatpush2.msra.mxu0 0.0
        %712 = vmatprep.subr.mxu0 0.0
        %713 = vmatpush2.msra.mxu0 0.0
        %714 = vmatprep.subr.mxu0 0.0
        %715 = vmatpush2.msra.mxu0 0.0
        %716 = vmatprep.subr.mxu0 0.0
        %717 = vmatpush2.msra.mxu0 0.0
        %718 = vmatprep.subr.mxu0 0.0
        %719 = vmatpush2.msra.mxu0 0.0
        %720 = vmatprep.subr.mxu0 0.0
        %721 = vmatpush2.msra.mxu0 0.0
        %722 = vmatprep.subr.mxu0 0.0
        %723 = vmatpush2.msra.mxu0 0.0
        %724 = vmatprep.subr.mxu0 0.0
        %725 = vmatpush2.msra.mxu0 0.0
        %726 = vmatprep.subr.mxu0 0.0
        %727 = vmatpush2.msra.mxu0 0.0
        %728 = vmatprep.subr.mxu0 0.0
        %729 = vmatpush2.msra.mxu0 0.0
        %730 = vmatprep.subr.mxu0 0.0
        %731 = vmatpush2.msra.mxu0 0.0
        %732 = vmatprep.subr.mxu0 0.0
        %733 = vmatpush2.msra.mxu0 0.0
        %734 = vmatprep.subr.mxu0 0.0
        %735 = vmatpush2.msra.mxu0 0.0
        %736 = vmatprep.subr.mxu0 0.0
        %737 = vmatpush2.msra.mxu0 0.0
        %738 = vmatprep.mubr.f32.mxu0 0.0
        %739 = vmatmul.mubr.f32.gmra.mxu0 %v579
        %v740 = vpop.f32.mrf.mxu0
        %v741 = vadd.f32 0.0, %v740
        %v742 = vpop.f32.mrf.mxu0
        %v743 = vadd.f32 0.0, %v742
        %744 = vmatprep.mubr.f32.mxu0 0.0
        %745 = vmatmul.mubr.f32.gmra.mxu0 %v582
        %v746 = vpop.f32.mrf.mxu0
        %v747 = vadd.f32 0.0, %v746
        %v748 = vpop.f32.mrf.mxu0
        %v749 = vadd.f32 0.0, %v748
        %750 = vmatprep.mubr.f32.mxu0 0.0
        %751 = vmatmul.mubr.f32.gmra.mxu0 %v585
        %v752 = vpop.f32.mrf.mxu0
        %v753 = vadd.f32 0.0, %v752
        %v754 = vpop.f32.mrf.mxu0
        %v755 = vadd.f32 0.0, %v754
        %756 = vmatprep.mubr.f32.mxu0 0.0
        %757 = vmatmul.mubr.f32.gmra.mxu0 %v588
        %v758 = vpop.f32.mrf.mxu0
        %v759 = vadd.f32 0.0, %v758
        %v760 = vpop.f32.mrf.mxu0
        %v761 = vadd.f32 0.0, %v760
        %762 = vmatprep.mubr.f32.mxu0 0.0
        %763 = vmatmul.mubr.f32.gmra.mxu0 %v591
        %v764 = vpop.f32.mrf.mxu0
        %v765 = vadd.f32 0.0, %v764
        %v766 = vpop.f32.mrf.mxu0
        %v767 = vadd.f32 0.0, %v766
        %768 = vmatprep.mubr.f32.mxu0 0.0
        %769 = vmatmul.mubr.f32.gmra.mxu0 %v594
        %v770 = vpop.f32.mrf.mxu0
        %v771 = vadd.f32 0.0, %v770
        %v772 = vpop.f32.mrf.mxu0
        %v773 = vadd.f32 0.0, %v772
        %774 = vmatprep.mubr.f32.mxu0 0.0
        %775 = vmatmul.mubr.f32.gmra.mxu0 %v597
        %v776 = vpop.f32.mrf.mxu0
        %v777 = vadd.f32 0.0, %v776
        %v778 = vpop.f32.mrf.mxu0
        %v779 = vadd.f32 0.0, %v778
        %780 = vmatprep.mubr.f32.mxu0 0.0
        %781 = vmatmul.mubr.f32.gmra.mxu0 %v600
        %v782 = vpop.f32.mrf.mxu0
        %v783 = vadd.f32 0.0, %v782
        %v784 = vpop.f32.mrf.mxu0
        %v785 = vadd.f32 0.0, %v784
        %786 = vmatprep.mubr.f32.mxu0 0.0
        %787 = vmatmul.mubr.f32.gmra.mxu0 %v603
        %v788 = vpop.f32.mrf.mxu0
        %v789 = vadd.f32 0.0, %v788
        %v790 = vpop.f32.mrf.mxu0
        %v791 = vadd.f32 0.0, %v790
        %792 = vmatprep.mubr.f32.mxu0 0.0
        %793 = vmatmul.mubr.f32.gmra.mxu0 %v606
        %v794 = vpop.f32.mrf.mxu0
        %v795 = vadd.f32 0.0, %v794
        %v796 = vpop.f32.mrf.mxu0
        %v797 = vadd.f32 0.0, %v796
        %798 = vmatprep.mubr.f32.mxu0 0.0
        %799 = vmatmul.mubr.f32.gmra.mxu0 %v609
        %v800 = vpop.f32.mrf.mxu0
        %v801 = vadd.f32 0.0, %v800
        %v802 = vpop.f32.mrf.mxu0
        %v803 = vadd.f32 0.0, %v802
        %804 = vmatprep.mubr.f32.mxu0 0.0
        %805 = vmatmul.mubr.f32.gmra.mxu0 %v612
        %v806 = vpop.f32.mrf.mxu0
        %v807 = vadd.f32 0.0, %v806
        %v808 = vpop.f32.mrf.mxu0
        %v809 = vadd.f32 0.0, %v808
        %810 = vmatprep.mubr.f32.mxu0 0.0
        %811 = vmatmul.mubr.f32.gmra.mxu0 %v615
        %v812 = vpop.f32.mrf.mxu0
        %v813 = vadd.f32 0.0, %v812
        %v814 = vpop.f32.mrf.mxu0
        %v815 = vadd.f32 0.0, %v814
        %816 = vmatprep.mubr.f32.mxu0 0.0
        %817 = vmatmul.mubr.f32.gmra.mxu0 %v618
        %v818 = vpop.f32.mrf.mxu0
        %v819 = vadd.f32 0.0, %v818
        %v820 = vpop.f32.mrf.mxu0
        %v821 = vadd.f32 0.0, %v820
        %822 = vmatprep.mubr.f32.mxu0 0.0
        %823 = vmatmul.mubr.f32.gmra.mxu0 %v621
        %v824 = vpop.f32.mrf.mxu0
        %v825 = vadd.f32 0.0, %v824
        %v826 = vpop.f32.mrf.mxu0
        %v827 = vadd.f32 0.0, %v826
        %828 = vmatprep.mubr.f32.mxu0 0.0
        %829 = vmatmul.mubr.f32.gmra.mxu0 %v624
        %v830 = vpop.f32.mrf.mxu0
        %v831 = vadd.f32 0.0, %v830
        %v832 = vpop.f32.mrf.mxu0
        %v833 = vadd.f32 0.0, %v832
        %834 = vmatprep.mubr.f32.mxu0 0.0
        %835 = vmatmul.mubr.f32.gmra.mxu0 %v627
        %v836 = vpop.f32.mrf.mxu0
        %v837 = vadd.f32 0.0, %v836
        %v838 = vpop.f32.mrf.mxu0
        %v839 = vadd.f32 0.0, %v838
        %840 = vmatprep.mubr.f32.mxu0 0.0
        %841 = vmatmul.mubr.f32.gmra.mxu0 %v630
        %v842 = vpop.f32.mrf.mxu0
        %v843 = vadd.f32 0.0, %v842
        %v844 = vpop.f32.mrf.mxu0
        %v845 = vadd.f32 0.0, %v844
        %846 = vmatprep.mubr.f32.mxu0 0.0
        %847 = vmatmul.mubr.f32.gmra.mxu0 %v633
        %v848 = vpop.f32.mrf.mxu0
        %v849 = vadd.f32 0.0, %v848
        %v850 = vpop.f32.mrf.mxu0
        %v851 = vadd.f32 0.0, %v850
        %852 = vmatprep.mubr.f32.mxu0 0.0
        %853 = vmatmul.mubr.f32.gmra.mxu0 %v636
        %v854 = vpop.f32.mrf.mxu0
        %v855 = vadd.f32 0.0, %v854
        %v856 = vpop.f32.mrf.mxu0
        %v857 = vadd.f32 0.0, %v856
        %858 = vmatprep.mubr.f32.mxu0 0.0
        %859 = vmatmul.mubr.f32.gmra.mxu0 %v639
        %v860 = vpop.f32.mrf.mxu0
        %v861 = vadd.f32 0.0, %v860
        %v862 = vpop.f32.mrf.mxu0
        %v863 = vadd.f32 0.0, %v862
        %864 = vmatprep.mubr.f32.mxu0 0.0
        %865 = vmatmul.mubr.f32.gmra.mxu0 %v642
        %v866 = vpop.f32.mrf.mxu0
        %v867 = vadd.f32 0.0, %v866
        %v868 = vpop.f32.mrf.mxu0
        %v869 = vadd.f32 0.0, %v868
        %870 = vmatprep.mubr.f32.mxu0 0.0
        %871 = vmatmul.mubr.f32.gmra.mxu0 %v645
        %v872 = vpop.f32.mrf.mxu0
        %v873 = vadd.f32 0.0, %v872
        %v874 = vpop.f32.mrf.mxu0
        %v875 = vadd.f32 0.0, %v874
        %876 = vmatprep.mubr.f32.mxu0 0.0
        %877 = vmatmul.mubr.f32.gmra.mxu0 %v648
        %v878 = vpop.f32.mrf.mxu0
        %v879 = vadd.f32 0.0, %v878
        %v880 = vpop.f32.mrf.mxu0
        %v881 = vadd.f32 0.0, %v880
        %882 = vmatprep.mubr.f32.mxu0 0.0
        %883 = vmatmul.mubr.f32.gmra.mxu0 %v651
        %v884 = vpop.f32.mrf.mxu0
        %v885 = vadd.f32 0.0, %v884
        %v886 = vpop.f32.mrf.mxu0
        %v887 = vadd.f32 0.0, %v886
        %888 = vmatprep.mubr.f32.mxu0 0.0
        %889 = vmatmul.mubr.f32.gmra.mxu0 %v654
        %v890 = vpop.f32.mrf.mxu0
        %v891 = vadd.f32 0.0, %v890
        %v892 = vpop.f32.mrf.mxu0
        %v893 = vadd.f32 0.0, %v892
        %894 = vmatprep.mubr.f32.mxu0 0.0
        %895 = vmatmul.mubr.f32.gmra.mxu0 %v657
        %v896 = vpop.f32.mrf.mxu0
        %v897 = vadd.f32 0.0, %v896
        %v898 = vpop.f32.mrf.mxu0
        %v899 = vadd.f32 0.0, %v898
        %900 = vmatprep.mubr.f32.mxu0 0.0
        %901 = vmatmul.mubr.f32.gmra.mxu0 %v660
        %v902 = vpop.f32.mrf.mxu0
        %v903 = vadd.f32 0.0, %v902
        %v904 = vpop.f32.mrf.mxu0
        %v905 = vadd.f32 0.0, %v904
        %906 = vmatprep.mubr.f32.mxu0 0.0
        %907 = vmatmul.mubr.f32.gmra.mxu0 %v663
        %v908 = vpop.f32.mrf.mxu0
        %v909 = vadd.f32 0.0, %v908
        %v910 = vpop.f32.mrf.mxu0
        %v911 = vadd.f32 0.0, %v910
        %912 = vmatprep.mubr.f32.mxu0 0.0
        %913 = vmatmul.mubr.f32.gmra.mxu0 %v666
        %v914 = vpop.f32.mrf.mxu0
        %v915 = vadd.f32 0.0, %v914
        %v916 = vpop.f32.mrf.mxu0
        %v917 = vadd.f32 0.0, %v916
        %918 = vmatprep.mubr.f32.mxu0 0.0
        %919 = vmatmul.mubr.f32.gmra.mxu0 %v669
        %v920 = vpop.f32.mrf.mxu0
        %v921 = vadd.f32 0.0, %v920
        %v922 = vpop.f32.mrf.mxu0
        %v923 = vadd.f32 0.0, %v922
        %924 = vmatprep.mubr.f32.mxu0 0.0
        %925 = vmatmul.mubr.f32.gmra.mxu0 %v672
        %v926 = vpop.f32.mrf.mxu0
        %v927 = vadd.f32 0.0, %v926
        %v928 = vpop.f32.mrf.mxu0
        %v929 = vadd.f32 0.0, %v928
        %930 = vdwg.mxu0
        %v931 = vadd.f32 %v449, %v741
        %v932 = vadd.f32 %v450, %v743
        %v933 = vadd.f32 %v451, %v747
        %v934 = vadd.f32 %v452, %v749
        %v935 = vadd.f32 %v453, %v753
        %v936 = vadd.f32 %v454, %v755
        %v937 = vadd.f32 %v455, %v759
        %v938 = vadd.f32 %v456, %v761
        %v939 = vadd.f32 %v457, %v765
        %v940 = vadd.f32 %v458, %v767
        %v941 = vadd.f32 %v459, %v771
        %v942 = vadd.f32 %v460, %v773
        %v943 = vadd.f32 %v461, %v777
        %v944 = vadd.f32 %v462, %v779
        %v945 = vadd.f32 %v463, %v783
        %v946 = vadd.f32 %v464, %v785
        %v947 = vadd.f32 %v465, %v789
        %v948 = vadd.f32 %v466, %v791
        %v949 = vadd.f32 %v467, %v795
        %v950 = vadd.f32 %v468, %v797
        %v951 = vadd.f32 %v469, %v801
        %v952 = vadd.f32 %v470, %v803
        %v953 = vadd.f32 %v471, %v807
        %v954 = vadd.f32 %v472, %v809
        %v955 = vadd.f32 %v473, %v813
        %v956 = vadd.f32 %v474, %v815
        %v957 = vadd.f32 %v475, %v819
        %v958 = vadd.f32 %v476, %v821
        %v959 = vadd.f32 %v477, %v825
        %v960 = vadd.f32 %v478, %v827
        %v961 = vadd.f32 %v479, %v831
        %v962 = vadd.f32 %v480, %v833
        %v963 = vadd.f32 %v481, %v837
        %v964 = vadd.f32 %v482, %v839
        %v965 = vadd.f32 %v483, %v843
        %v966 = vadd.f32 %v484, %v845
        %v967 = vadd.f32 %v485, %v849
        %v968 = vadd.f32 %v486, %v851
        %v969 = vadd.f32 %v487, %v855
        %v970 = vadd.f32 %v488, %v857
        %v971 = vadd.f32 %v489, %v861
        %v972 = vadd.f32 %v490, %v863
        %v973 = vadd.f32 %v491, %v867
        %v974 = vadd.f32 %v492, %v869
        %v975 = vadd.f32 %v493, %v873
        %v976 = vadd.f32 %v494, %v875
        %v977 = vadd.f32 %v495, %v879
        %v978 = vadd.f32 %v496, %v881
        %v979 = vadd.f32 %v497, %v885
        %v980 = vadd.f32 %v498, %v887
        %v981 = vadd.f32 %v499, %v891
        %v982 = vadd.f32 %v500, %v893
        %v983 = vadd.f32 %v501, %v897
        %v984 = vadd.f32 %v502, %v899
        %v985 = vadd.f32 %v503, %v903
        %v986 = vadd.f32 %v504, %v905
        %v987 = vadd.f32 %v505, %v909
        %v988 = vadd.f32 %v506, %v911
        %v989 = vadd.f32 %v507, %v915
        %v990 = vadd.f32 %v508, %v917
        %v991 = vadd.f32 %v509, %v921
        %v992 = vadd.f32 %v510, %v923
        %v993 = vadd.f32 %v511, %v927
        %v994 = vadd.f32 %v512, %v929
        %995 = vst [vmem:[#allocation11] sm:$0xff] %v931
        %996 = vst [vmem:[#allocation11 + $0x8] sm:$0xff] %v932
        %997 = vst [vmem:[#allocation11 + $0x10] sm:$0xff] %v933
        %998 = vst [vmem:[#allocation11 + $0x18] sm:$0xff] %v934
        %999 = vst [vmem:[#allocation11 + $0x20] sm:$0xff] %v935
        %1000 = vst [vmem:[#allocation11 + $0x28] sm:$0xff] %v936
        %1001 = vst [vmem:[#allocation11 + $0x30] sm:$0xff] %v937
        %1002 = vst [vmem:[#allocation11 + $0x38] sm:$0xff] %v938
        %1003 = vst [vmem:[#allocation11 + $0x40] sm:$0xff] %v939
        %1004 = vst [vmem:[#allocation11 + $0x48] sm:$0xff] %v940
        %1005 = vst [vmem:[#allocation11 + $0x50] sm:$0xff] %v941
        %1006 = vst [vmem:[#allocation11 + $0x58] sm:$0xff] %v942
        %1007 = vst [vmem:[#allocation11 + $0x60] sm:$0xff] %v943
        %1008 = vst [vmem:[#allocation11 + $0x68] sm:$0xff] %v944
        %1009 = vst [vmem:[#allocation11 + $0x70] sm:$0xff] %v945
        %1010 = vst [vmem:[#allocation11 + $0x78] sm:$0xff] %v946
        %1011 = vst [vmem:[#allocation11 + $0x80] sm:$0xff] %v947
        %1012 = vst [vmem:[#allocation11 + $0x88] sm:$0xff] %v948
        %1013 = vst [vmem:[#allocation11 + $0x90] sm:$0xff] %v949
        %1014 = vst [vmem:[#allocation11 + $0x98] sm:$0xff] %v950
        %1015 = vst [vmem:[#allocation11 + $0xa0] sm:$0xff] %v951
        %1016 = vst [vmem:[#allocation11 + $0xa8] sm:$0xff] %v952
        %1017 = vst [vmem:[#allocation11 + $0xb0] sm:$0xff] %v953
        %1018 = vst [vmem:[#allocation11 + $0xb8] sm:$0xff] %v954
        %1019 = vst [vmem:[#allocation11 + $0xc0] sm:$0xff] %v955
        %1020 = vst [vmem:[#allocation11 + $0xc8] sm:$0xff] %v956
        %1021 = vst [vmem:[#allocation11 + $0xd0] sm:$0xff] %v957
        %1022 = vst [vmem:[#allocation11 + $0xd8] sm:$0xff] %v958
        %1023 = vst [vmem:[#allocation11 + $0xe0] sm:$0xff] %v959
        %1024 = vst [vmem:[#allocation11 + $0xe8] sm:$0xff] %v960
        %1025 = vst [vmem:[#allocation11 + $0xf0] sm:$0xff] %v961
        %1026 = vst [vmem:[#allocation11 + $0xf8] sm:$0xff] %v962
        %1027 = vst [vmem:[#allocation11 + $0x100] sm:$0xff] %v963
        %1028 = vst [vmem:[#allocation11 + $0x108] sm:$0xff] %v964
        %1029 = vst [vmem:[#allocation11 + $0x110] sm:$0xff] %v965
        %1030 = vst [vmem:[#allocation11 + $0x118] sm:$0xff] %v966
        %1031 = vst [vmem:[#allocation11 + $0x120] sm:$0xff] %v967
        %1032 = vst [vmem:[#allocation11 + $0x128] sm:$0xff] %v968
        %1033 = vst [vmem:[#allocation11 + $0x130] sm:$0xff] %v969
        %1034 = vst [vmem:[#allocation11 + $0x138] sm:$0xff] %v970
        %1035 = vst [vmem:[#allocation11 + $0x140] sm:$0xff] %v971
        %1036 = vst [vmem:[#allocation11 + $0x148] sm:$0xff] %v972
        %1037 = vst [vmem:[#allocation11 + $0x150] sm:$0xff] %v973
        %1038 = vst [vmem:[#allocation11 + $0x158] sm:$0xff] %v974
        %1039 = vst [vmem:[#allocation11 + $0x160] sm:$0xff] %v975
        %1040 = vst [vmem:[#allocation11 + $0x168] sm:$0xff] %v976
        %1041 = vst [vmem:[#allocation11 + $0x170] sm:$0xff] %v977
        %1042 = vst [vmem:[#allocation11 + $0x178] sm:$0xff] %v978
        %1043 = vst [vmem:[#allocation11 + $0x180] sm:$0xff] %v979
        %1044 = vst [vmem:[#allocation11 + $0x188] sm:$0xff] %v980
        %1045 = vst [vmem:[#allocation11 + $0x190] sm:$0xff] %v981
        %1046 = vst [vmem:[#allocation11 + $0x198] sm:$0xff] %v982
        %1047 = vst [vmem:[#allocation11 + $0x1a0] sm:$0xff] %v983
        %1048 = vst [vmem:[#allocation11 + $0x1a8] sm:$0xff] %v984
        %1049 = vst [vmem:[#allocation11 + $0x1b0] sm:$0xff] %v985
        %1050 = vst [vmem:[#allocation11 + $0x1b8] sm:$0xff] %v986
        %1051 = vst [vmem:[#allocation11 + $0x1c0] sm:$0xff] %v987
        %1052 = vst [vmem:[#allocation11 + $0x1c8] sm:$0xff] %v988
        %1053 = vst [vmem:[#allocation11 + $0x1d0] sm:$0xff] %v989
        %1054 = vst [vmem:[#allocation11 + $0x1d8] sm:$0xff] %v990
        %1055 = vst [vmem:[#allocation11 + $0x1e0] sm:$0xff] %v991
        %1056 = vst [vmem:[#allocation11 + $0x1e8] sm:$0xff] %v992
        %1057 = vst [vmem:[#allocation11 + $0x1f0] sm:$0xff] %v993
        %1058 = vst [vmem:[#allocation11 + $0x1f8] sm:$0xff] %v994
        %v1059 = vld [vmem:[#allocation12] sm:$0xff]
        %v1060 = vld [vmem:[#allocation12 + $0x8] sm:$0xff]
        %v1061 = vld [vmem:[#allocation12 + $0x10] sm:$0xff]
        %v1062 = vld [vmem:[#allocation12 + $0x18] sm:$0xff]
        %v1063 = vld [vmem:[#allocation12 + $0x20] sm:$0xff]
        %v1064 = vld [vmem:[#allocation12 + $0x28] sm:$0xff]
        %v1065 = vld [vmem:[#allocation12 + $0x30] sm:$0xff]
        %v1066 = vld [vmem:[#allocation12 + $0x38] sm:$0xff]
        %v1067 = vld [vmem:[#allocation12 + $0x40] sm:$0xff]
        %v1068 = vld [vmem:[#allocation12 + $0x48] sm:$0xff]
        %v1069 = vld [vmem:[#allocation12 + $0x50] sm:$0xff]
        %v1070 = vld [vmem:[#allocation12 + $0x58] sm:$0xff]
        %v1071 = vld [vmem:[#allocation12 + $0x60] sm:$0xff]
        %v1072 = vld [vmem:[#allocation12 + $0x68] sm:$0xff]
        %v1073 = vld [vmem:[#allocation12 + $0x70] sm:$0xff]
        %v1074 = vld [vmem:[#allocation12 + $0x78] sm:$0xff]
        %v1075 = vld [vmem:[#allocation12 + $0x80] sm:$0xff]
        %v1076 = vld [vmem:[#allocation12 + $0x88] sm:$0xff]
        %v1077 = vld [vmem:[#allocation12 + $0x90] sm:$0xff]
        %v1078 = vld [vmem:[#allocation12 + $0x98] sm:$0xff]
        %v1079 = vld [vmem:[#allocation12 + $0xa0] sm:$0xff]
        %v1080 = vld [vmem:[#allocation12 + $0xa8] sm:$0xff]
        %v1081 = vld [vmem:[#allocation12 + $0xb0] sm:$0xff]
        %v1082 = vld [vmem:[#allocation12 + $0xb8] sm:$0xff]
        %v1083 = vld [vmem:[#allocation12 + $0xc0] sm:$0xff]
        %v1084 = vld [vmem:[#allocation12 + $0xc8] sm:$0xff]
        %v1085 = vld [vmem:[#allocation12 + $0xd0] sm:$0xff]
        %v1086 = vld [vmem:[#allocation12 + $0xd8] sm:$0xff]
        %v1087 = vld [vmem:[#allocation12 + $0xe0] sm:$0xff]
        %v1088 = vld [vmem:[#allocation12 + $0xe8] sm:$0xff]
        %v1089 = vld [vmem:[#allocation12 + $0xf0] sm:$0xff]
        %v1090 = vld [vmem:[#allocation12 + $0xf8] sm:$0xff]
        %v1091 = vld [vmem:[#allocation12 + $0x100] sm:$0xff]
        %v1092 = vld [vmem:[#allocation12 + $0x108] sm:$0xff]
        %v1093 = vld [vmem:[#allocation12 + $0x110] sm:$0xff]
        %v1094 = vld [vmem:[#allocation12 + $0x118] sm:$0xff]
        %v1095 = vld [vmem:[#allocation12 + $0x120] sm:$0xff]
        %v1096 = vld [vmem:[#allocation12 + $0x128] sm:$0xff]
        %v1097 = vld [vmem:[#allocation12 + $0x130] sm:$0xff]
        %v1098 = vld [vmem:[#allocation12 + $0x138] sm:$0xff]
        %v1099 = vld [vmem:[#allocation12 + $0x140] sm:$0xff]
        %v1100 = vld [vmem:[#allocation12 + $0x148] sm:$0xff]
        %v1101 = vld [vmem:[#allocation12 + $0x150] sm:$0xff]
        %v1102 = vld [vmem:[#allocation12 + $0x158] sm:$0xff]
        %v1103 = vld [vmem:[#allocation12 + $0x160] sm:$0xff]
        %v1104 = vld [vmem:[#allocation12 + $0x168] sm:$0xff]
        %v1105 = vld [vmem:[#allocation12 + $0x170] sm:$0xff]
        %v1106 = vld [vmem:[#allocation12 + $0x178] sm:$0xff]
        %v1107 = vld [vmem:[#allocation12 + $0x180] sm:$0xff]
        %v1108 = vld [vmem:[#allocation12 + $0x188] sm:$0xff]
        %v1109 = vld [vmem:[#allocation12 + $0x190] sm:$0xff]
        %v1110 = vld [vmem:[#allocation12 + $0x198] sm:$0xff]
        %v1111 = vld [vmem:[#allocation12 + $0x1a0] sm:$0xff]
        %v1112 = vld [vmem:[#allocation12 + $0x1a8] sm:$0xff]
        %v1113 = vld [vmem:[#allocation12 + $0x1b0] sm:$0xff]
        %v1114 = vld [vmem:[#allocation12 + $0x1b8] sm:$0xff]
        %v1115 = vld [vmem:[#allocation12 + $0x1c0] sm:$0xff]
        %v1116 = vld [vmem:[#allocation12 + $0x1c8] sm:$0xff]
        %v1117 = vld [vmem:[#allocation12 + $0x1d0] sm:$0xff]
        %v1118 = vld [vmem:[#allocation12 + $0x1d8] sm:$0xff]
        %v1119 = vld [vmem:[#allocation12 + $0x1e0] sm:$0xff]
        %v1120 = vld [vmem:[#allocation12 + $0x1e8] sm:$0xff]
        %v1121 = vld [vmem:[#allocation12 + $0x1f0] sm:$0xff]
        %v1122 = vld [vmem:[#allocation12 + $0x1f8] sm:$0xff]
        %1123 = vxpose.xlu0.b32.start [1/16] %v365, 128
        %1124 = vxpose.xlu0.b32.cont [2/16] %v367, 128
        %1125 = vxpose.xlu0.b32.cont [3/16] 0.0, 128
        %1126 = vxpose.xlu0.b32.cont [4/16] 0.0, 128
        %1127 = vxpose.xlu0.b32.cont [5/16] 0.0, 128
        %1128 = vxpose.xlu0.b32.cont [6/16] 0.0, 128
        %1129 = vxpose.xlu0.b32.cont [7/16] 0.0, 128
        %1130 = vxpose.xlu0.b32.cont [8/16] 0.0, 128
        %1131 = vxpose.xlu0.b32.cont [9/16] 0.0, 128
        %1132 = vxpose.xlu0.b32.cont [10/16] 0.0, 128
        %1133 = vxpose.xlu0.b32.cont [11/16] 0.0, 128
        %1134 = vxpose.xlu0.b32.cont [12/16] 0.0, 128
        %1135 = vxpose.xlu0.b32.cont [13/16] 0.0, 128
        %1136 = vxpose.xlu0.b32.cont [14/16] 0.0, 128
        %1137 = vxpose.xlu0.b32.cont [15/16] 0.0, 128
        %1138 = vxpose.xlu0.b32.end [16/16] 0.0, 128
        %v1139 = vpop.trf.xlu0
        %v1140 = vpop.trf.xlu0
        %v1141 = vpop.trf.xlu0
        %v1142 = vpop.trf.xlu0
        %v1143 = vpop.trf.xlu0
        %v1144 = vpop.trf.xlu0
        %v1145 = vpop.trf.xlu0
        %v1146 = vpop.trf.xlu0
        %v1147 = vpop.trf.xlu0
        %v1148 = vpop.trf.xlu0
        %v1149 = vpop.trf.xlu0
        %v1150 = vpop.trf.xlu0
        %v1151 = vpop.trf.xlu0
        %v1152 = vpop.trf.xlu0
        %v1153 = vpop.trf.xlu0
        %v1154 = vpop.trf.xlu0
        %1155 = vxpose.xlu0.b32.start [1/16] %v366, 128
        %1156 = vxpose.xlu0.b32.cont [2/16] %v368, 128
        %1157 = vxpose.xlu0.b32.cont [3/16] 0.0, 128
        %1158 = vxpose.xlu0.b32.cont [4/16] 0.0, 128
        %1159 = vxpose.xlu0.b32.cont [5/16] 0.0, 128
        %1160 = vxpose.xlu0.b32.cont [6/16] 0.0, 128
        %1161 = vxpose.xlu0.b32.cont [7/16] 0.0, 128
        %1162 = vxpose.xlu0.b32.cont [8/16] 0.0, 128
        %1163 = vxpose.xlu0.b32.cont [9/16] 0.0, 128
        %1164 = vxpose.xlu0.b32.cont [10/16] 0.0, 128
        %1165 = vxpose.xlu0.b32.cont [11/16] 0.0, 128
        %1166 = vxpose.xlu0.b32.cont [12/16] 0.0, 128
        %1167 = vxpose.xlu0.b32.cont [13/16] 0.0, 128
        %1168 = vxpose.xlu0.b32.cont [14/16] 0.0, 128
        %1169 = vxpose.xlu0.b32.cont [15/16] 0.0, 128
        %1170 = vxpose.xlu0.b32.end [16/16] 0.0, 128
        %v1171 = vpop.trf.xlu0
        %v1172 = vpop.trf.xlu0
        %v1173 = vpop.trf.xlu0
        %v1174 = vpop.trf.xlu0
        %v1175 = vpop.trf.xlu0
        %v1176 = vpop.trf.xlu0
        %v1177 = vpop.trf.xlu0
        %v1178 = vpop.trf.xlu0
        %v1179 = vpop.trf.xlu0
        %v1180 = vpop.trf.xlu0
        %v1181 = vpop.trf.xlu0
        %v1182 = vpop.trf.xlu0
        %v1183 = vpop.trf.xlu0
        %v1184 = vpop.trf.xlu0
        %v1185 = vpop.trf.xlu0
        %v1186 = vpop.trf.xlu0
        %v1188 = vsel %vm577, %v1139, 0
        %v1191 = vsel %vm577, %v1140, 0
        %v1194 = vsel %vm577, %v1141, 0
        %v1197 = vsel %vm577, %v1142, 0
        %v1200 = vsel %vm577, %v1143, 0
        %v1203 = vsel %vm577, %v1144, 0
        %v1206 = vsel %vm577, %v1145, 0
        %v1209 = vsel %vm577, %v1146, 0
        %v1212 = vsel %vm577, %v1147, 0
        %v1215 = vsel %vm577, %v1148, 0
        %v1218 = vsel %vm577, %v1149, 0
        %v1221 = vsel %vm577, %v1150, 0
        %v1224 = vsel %vm577, %v1151, 0
        %v1227 = vsel %vm577, %v1152, 0
        %v1230 = vsel %vm577, %v1153, 0
        %v1233 = vsel %vm577, %v1154, 0
        %v1236 = vsel %vm577, %v1171, 0
        %v1239 = vsel %vm577, %v1172, 0
        %v1242 = vsel %vm577, %v1173, 0
        %v1245 = vsel %vm577, %v1174, 0
        %v1248 = vsel %vm577, %v1175, 0
        %v1251 = vsel %vm577, %v1176, 0
        %v1254 = vsel %vm577, %v1177, 0
        %v1257 = vsel %vm577, %v1178, 0
        %v1260 = vsel %vm577, %v1179, 0
        %v1263 = vsel %vm577, %v1180, 0
        %v1266 = vsel %vm577, %v1181, 0
        %v1269 = vsel %vm577, %v1182, 0
        %v1272 = vsel %vm577, %v1183, 0
        %v1275 = vsel %vm577, %v1184, 0
        %v1278 = vsel %vm577, %v1185, 0
        %v1281 = vsel %vm577, %v1186, 0
        %1283 = vmatprep.subr.mxu0 0.0
        %1284 = vmatpush1.msra.mxu0 0.0
        %1285 = vmatprep.subr.mxu0 0.0
        %1286 = vmatpush1.msra.mxu0 0.0
        %1287 = vmatprep.subr.mxu0 0.0
        %1288 = vmatpush1.msra.mxu0 0.0
        %1289 = vmatprep.subr.mxu0 0.0
        %1290 = vmatpush1.msra.mxu0 0.0
        %1291 = vmatprep.subr.mxu0 0.0
        %1292 = vmatpush1.msra.mxu0 0.0
        %1293 = vmatprep.subr.mxu0 0.0
        %1294 = vmatpush1.msra.mxu0 0.0
        %1295 = vmatprep.subr.mxu0 0.0
        %1296 = vmatpush1.msra.mxu0 0.0
        %1297 = vmatprep.subr.mxu0 0.0
        %1298 = vmatpush1.msra.mxu0 0.0
        %1299 = vmatprep.subr.mxu0 0.0
        %1300 = vmatpush1.msra.mxu0 0.0
        %1301 = vmatprep.subr.mxu0 0.0
        %1302 = vmatpush1.msra.mxu0 0.0
        %1303 = vmatprep.subr.mxu0 0.0
        %1304 = vmatpush1.msra.mxu0 0.0
        %1305 = vmatprep.subr.mxu0 0.0
        %1306 = vmatpush1.msra.mxu0 0.0
        %1307 = vmatprep.subr.mxu0 0.0
        %1308 = vmatpush1.msra.mxu0 0.0
        %1309 = vmatprep.subr.mxu0 0.0
        %1310 = vmatpush1.msra.mxu0 0.0
        %1311 = vmatprep.subr.mxu0 %v368
        %1312 = vmatpush1.msra.mxu0 %v367
        %1313 = vmatprep.subr.mxu0 %v366
        %1314 = vmatpush1.msra.mxu0 %v365
        %1315 = vmatprep.subr.mxu0 0.0
        %1316 = vmatpush2.msra.mxu0 0.0
        %1317 = vmatprep.subr.mxu0 0.0
        %1318 = vmatpush2.msra.mxu0 0.0
        %1319 = vmatprep.subr.mxu0 0.0
        %1320 = vmatpush2.msra.mxu0 0.0
        %1321 = vmatprep.subr.mxu0 0.0
        %1322 = vmatpush2.msra.mxu0 0.0
        %1323 = vmatprep.subr.mxu0 0.0
        %1324 = vmatpush2.msra.mxu0 0.0
        %1325 = vmatprep.subr.mxu0 0.0
        %1326 = vmatpush2.msra.mxu0 0.0
        %1327 = vmatprep.subr.mxu0 0.0
        %1328 = vmatpush2.msra.mxu0 0.0
        %1329 = vmatprep.subr.mxu0 0.0
        %1330 = vmatpush2.msra.mxu0 0.0
        %1331 = vmatprep.subr.mxu0 0.0
        %1332 = vmatpush2.msra.mxu0 0.0
        %1333 = vmatprep.subr.mxu0 0.0
        %1334 = vmatpush2.msra.mxu0 0.0
        %1335 = vmatprep.subr.mxu0 0.0
        %1336 = vmatpush2.msra.mxu0 0.0
        %1337 = vmatprep.subr.mxu0 0.0
        %1338 = vmatpush2.msra.mxu0 0.0
        %1339 = vmatprep.subr.mxu0 0.0
        %1340 = vmatpush2.msra.mxu0 0.0
        %1341 = vmatprep.subr.mxu0 0.0
        %1342 = vmatpush2.msra.mxu0 0.0
        %1343 = vmatprep.subr.mxu0 0.0
        %1344 = vmatpush2.msra.mxu0 0.0
        %1345 = vmatprep.subr.mxu0 0.0
        %1346 = vmatpush2.msra.mxu0 0.0
        %1347 = vmatprep.mubr.f32.mxu0 0.0
        %1348 = vmatmul.mubr.f32.gmra.mxu0 %v1188
        %v1349 = vpop.f32.mrf.mxu0
        %v1350 = vadd.f32 0.0, %v1349
        %v1351 = vpop.f32.mrf.mxu0
        %v1352 = vadd.f32 0.0, %v1351
        %1353 = vmatprep.mubr.f32.mxu0 0.0
        %1354 = vmatmul.mubr.f32.gmra.mxu0 %v1191
        %v1355 = vpop.f32.mrf.mxu0
        %v1356 = vadd.f32 0.0, %v1355
        %v1357 = vpop.f32.mrf.mxu0
        %v1358 = vadd.f32 0.0, %v1357
        %1359 = vmatprep.mubr.f32.mxu0 0.0
        %1360 = vmatmul.mubr.f32.gmra.mxu0 %v1194
        %v1361 = vpop.f32.mrf.mxu0
        %v1362 = vadd.f32 0.0, %v1361
        %v1363 = vpop.f32.mrf.mxu0
        %v1364 = vadd.f32 0.0, %v1363
        %1365 = vmatprep.mubr.f32.mxu0 0.0
        %1366 = vmatmul.mubr.f32.gmra.mxu0 %v1197
        %v1367 = vpop.f32.mrf.mxu0
        %v1368 = vadd.f32 0.0, %v1367
        %v1369 = vpop.f32.mrf.mxu0
        %v1370 = vadd.f32 0.0, %v1369
        %1371 = vmatprep.mubr.f32.mxu0 0.0
        %1372 = vmatmul.mubr.f32.gmra.mxu0 %v1200
        %v1373 = vpop.f32.mrf.mxu0
        %v1374 = vadd.f32 0.0, %v1373
        %v1375 = vpop.f32.mrf.mxu0
        %v1376 = vadd.f32 0.0, %v1375
        %1377 = vmatprep.mubr.f32.mxu0 0.0
        %1378 = vmatmul.mubr.f32.gmra.mxu0 %v1203
        %v1379 = vpop.f32.mrf.mxu0
        %v1380 = vadd.f32 0.0, %v1379
        %v1381 = vpop.f32.mrf.mxu0
        %v1382 = vadd.f32 0.0, %v1381
        %1383 = vmatprep.mubr.f32.mxu0 0.0
        %1384 = vmatmul.mubr.f32.gmra.mxu0 %v1206
        %v1385 = vpop.f32.mrf.mxu0
        %v1386 = vadd.f32 0.0, %v1385
        %v1387 = vpop.f32.mrf.mxu0
        %v1388 = vadd.f32 0.0, %v1387
        %1389 = vmatprep.mubr.f32.mxu0 0.0
        %1390 = vmatmul.mubr.f32.gmra.mxu0 %v1209
        %v1391 = vpop.f32.mrf.mxu0
        %v1392 = vadd.f32 0.0, %v1391
        %v1393 = vpop.f32.mrf.mxu0
        %v1394 = vadd.f32 0.0, %v1393
        %1395 = vmatprep.mubr.f32.mxu0 0.0
        %1396 = vmatmul.mubr.f32.gmra.mxu0 %v1212
        %v1397 = vpop.f32.mrf.mxu0
        %v1398 = vadd.f32 0.0, %v1397
        %v1399 = vpop.f32.mrf.mxu0
        %v1400 = vadd.f32 0.0, %v1399
        %1401 = vmatprep.mubr.f32.mxu0 0.0
        %1402 = vmatmul.mubr.f32.gmra.mxu0 %v1215
        %v1403 = vpop.f32.mrf.mxu0
        %v1404 = vadd.f32 0.0, %v1403
        %v1405 = vpop.f32.mrf.mxu0
        %v1406 = vadd.f32 0.0, %v1405
        %1407 = vmatprep.mubr.f32.mxu0 0.0
        %1408 = vmatmul.mubr.f32.gmra.mxu0 %v1218
        %v1409 = vpop.f32.mrf.mxu0
        %v1410 = vadd.f32 0.0, %v1409
        %v1411 = vpop.f32.mrf.mxu0
        %v1412 = vadd.f32 0.0, %v1411
        %1413 = vmatprep.mubr.f32.mxu0 0.0
        %1414 = vmatmul.mubr.f32.gmra.mxu0 %v1221
        %v1415 = vpop.f32.mrf.mxu0
        %v1416 = vadd.f32 0.0, %v1415
        %v1417 = vpop.f32.mrf.mxu0
        %v1418 = vadd.f32 0.0, %v1417
        %1419 = vmatprep.mubr.f32.mxu0 0.0
        %1420 = vmatmul.mubr.f32.gmra.mxu0 %v1224
        %v1421 = vpop.f32.mrf.mxu0
        %v1422 = vadd.f32 0.0, %v1421
        %v1423 = vpop.f32.mrf.mxu0
        %v1424 = vadd.f32 0.0, %v1423
        %1425 = vmatprep.mubr.f32.mxu0 0.0
        %1426 = vmatmul.mubr.f32.gmra.mxu0 %v1227
        %v1427 = vpop.f32.mrf.mxu0
        %v1428 = vadd.f32 0.0, %v1427
        %v1429 = vpop.f32.mrf.mxu0
        %v1430 = vadd.f32 0.0, %v1429
        %1431 = vmatprep.mubr.f32.mxu0 0.0
        %1432 = vmatmul.mubr.f32.gmra.mxu0 %v1230
        %v1433 = vpop.f32.mrf.mxu0
        %v1434 = vadd.f32 0.0, %v1433
        %v1435 = vpop.f32.mrf.mxu0
        %v1436 = vadd.f32 0.0, %v1435
        %1437 = vmatprep.mubr.f32.mxu0 0.0
        %1438 = vmatmul.mubr.f32.gmra.mxu0 %v1233
        %v1439 = vpop.f32.mrf.mxu0
        %v1440 = vadd.f32 0.0, %v1439
        %v1441 = vpop.f32.mrf.mxu0
        %v1442 = vadd.f32 0.0, %v1441
        %1443 = vmatprep.mubr.f32.mxu0 0.0
        %1444 = vmatmul.mubr.f32.gmra.mxu0 %v1236
        %v1445 = vpop.f32.mrf.mxu0
        %v1446 = vadd.f32 0.0, %v1445
        %v1447 = vpop.f32.mrf.mxu0
        %v1448 = vadd.f32 0.0, %v1447
        %1449 = vmatprep.mubr.f32.mxu0 0.0
        %1450 = vmatmul.mubr.f32.gmra.mxu0 %v1239
        %v1451 = vpop.f32.mrf.mxu0
        %v1452 = vadd.f32 0.0, %v1451
        %v1453 = vpop.f32.mrf.mxu0
        %v1454 = vadd.f32 0.0, %v1453
        %1455 = vmatprep.mubr.f32.mxu0 0.0
        %1456 = vmatmul.mubr.f32.gmra.mxu0 %v1242
        %v1457 = vpop.f32.mrf.mxu0
        %v1458 = vadd.f32 0.0, %v1457
        %v1459 = vpop.f32.mrf.mxu0
        %v1460 = vadd.f32 0.0, %v1459
        %1461 = vmatprep.mubr.f32.mxu0 0.0
        %1462 = vmatmul.mubr.f32.gmra.mxu0 %v1245
        %v1463 = vpop.f32.mrf.mxu0
        %v1464 = vadd.f32 0.0, %v1463
        %v1465 = vpop.f32.mrf.mxu0
        %v1466 = vadd.f32 0.0, %v1465
        %1467 = vmatprep.mubr.f32.mxu0 0.0
        %1468 = vmatmul.mubr.f32.gmra.mxu0 %v1248
        %v1469 = vpop.f32.mrf.mxu0
        %v1470 = vadd.f32 0.0, %v1469
        %v1471 = vpop.f32.mrf.mxu0
        %v1472 = vadd.f32 0.0, %v1471
        %1473 = vmatprep.mubr.f32.mxu0 0.0
        %1474 = vmatmul.mubr.f32.gmra.mxu0 %v1251
        %v1475 = vpop.f32.mrf.mxu0
        %v1476 = vadd.f32 0.0, %v1475
        %v1477 = vpop.f32.mrf.mxu0
        %v1478 = vadd.f32 0.0, %v1477
        %1479 = vmatprep.mubr.f32.mxu0 0.0
        %1480 = vmatmul.mubr.f32.gmra.mxu0 %v1254
        %v1481 = vpop.f32.mrf.mxu0
        %v1482 = vadd.f32 0.0, %v1481
        %v1483 = vpop.f32.mrf.mxu0
        %v1484 = vadd.f32 0.0, %v1483
        %1485 = vmatprep.mubr.f32.mxu0 0.0
        %1486 = vmatmul.mubr.f32.gmra.mxu0 %v1257
        %v1487 = vpop.f32.mrf.mxu0
        %v1488 = vadd.f32 0.0, %v1487
        %v1489 = vpop.f32.mrf.mxu0
        %v1490 = vadd.f32 0.0, %v1489
        %1491 = vmatprep.mubr.f32.mxu0 0.0
        %1492 = vmatmul.mubr.f32.gmra.mxu0 %v1260
        %v1493 = vpop.f32.mrf.mxu0
        %v1494 = vadd.f32 0.0, %v1493
        %v1495 = vpop.f32.mrf.mxu0
        %v1496 = vadd.f32 0.0, %v1495
        %1497 = vmatprep.mubr.f32.mxu0 0.0
        %1498 = vmatmul.mubr.f32.gmra.mxu0 %v1263
        %v1499 = vpop.f32.mrf.mxu0
        %v1500 = vadd.f32 0.0, %v1499
        %v1501 = vpop.f32.mrf.mxu0
        %v1502 = vadd.f32 0.0, %v1501
        %1503 = vmatprep.mubr.f32.mxu0 0.0
        %1504 = vmatmul.mubr.f32.gmra.mxu0 %v1266
        %v1505 = vpop.f32.mrf.mxu0
        %v1506 = vadd.f32 0.0, %v1505
        %v1507 = vpop.f32.mrf.mxu0
        %v1508 = vadd.f32 0.0, %v1507
        %1509 = vmatprep.mubr.f32.mxu0 0.0
        %1510 = vmatmul.mubr.f32.gmra.mxu0 %v1269
        %v1511 = vpop.f32.mrf.mxu0
        %v1512 = vadd.f32 0.0, %v1511
        %v1513 = vpop.f32.mrf.mxu0
        %v1514 = vadd.f32 0.0, %v1513
        %1515 = vmatprep.mubr.f32.mxu0 0.0
        %1516 = vmatmul.mubr.f32.gmra.mxu0 %v1272
        %v1517 = vpop.f32.mrf.mxu0
        %v1518 = vadd.f32 0.0, %v1517
        %v1519 = vpop.f32.mrf.mxu0
        %v1520 = vadd.f32 0.0, %v1519
        %1521 = vmatprep.mubr.f32.mxu0 0.0
        %1522 = vmatmul.mubr.f32.gmra.mxu0 %v1275
        %v1523 = vpop.f32.mrf.mxu0
        %v1524 = vadd.f32 0.0, %v1523
        %v1525 = vpop.f32.mrf.mxu0
        %v1526 = vadd.f32 0.0, %v1525
        %1527 = vmatprep.mubr.f32.mxu0 0.0
        %1528 = vmatmul.mubr.f32.gmra.mxu0 %v1278
        %v1529 = vpop.f32.mrf.mxu0
        %v1530 = vadd.f32 0.0, %v1529
        %v1531 = vpop.f32.mrf.mxu0
        %v1532 = vadd.f32 0.0, %v1531
        %1533 = vmatprep.mubr.f32.mxu0 0.0
        %1534 = vmatmul.mubr.f32.gmra.mxu0 %v1281
        %v1535 = vpop.f32.mrf.mxu0
        %v1536 = vadd.f32 0.0, %v1535
        %v1537 = vpop.f32.mrf.mxu0
        %v1538 = vadd.f32 0.0, %v1537
        %1539 = vdwg.mxu0
        %v1540 = vadd.f32 %v1059, %v1350
        %v1541 = vadd.f32 %v1060, %v1352
        %v1542 = vadd.f32 %v1061, %v1356
        %v1543 = vadd.f32 %v1062, %v1358
        %v1544 = vadd.f32 %v1063, %v1362
        %v1545 = vadd.f32 %v1064, %v1364
        %v1546 = vadd.f32 %v1065, %v1368
        %v1547 = vadd.f32 %v1066, %v1370
        %v1548 = vadd.f32 %v1067, %v1374
        %v1549 = vadd.f32 %v1068, %v1376
        %v1550 = vadd.f32 %v1069, %v1380
        %v1551 = vadd.f32 %v1070, %v1382
        %v1552 = vadd.f32 %v1071, %v1386
        %v1553 = vadd.f32 %v1072, %v1388
        %v1554 = vadd.f32 %v1073, %v1392
        %v1555 = vadd.f32 %v1074, %v1394
        %v1556 = vadd.f32 %v1075, %v1398
        %v1557 = vadd.f32 %v1076, %v1400
        %v1558 = vadd.f32 %v1077, %v1404
        %v1559 = vadd.f32 %v1078, %v1406
        %v1560 = vadd.f32 %v1079, %v1410
        %v1561 = vadd.f32 %v1080, %v1412
        %v1562 = vadd.f32 %v1081, %v1416
        %v1563 = vadd.f32 %v1082, %v1418
        %v1564 = vadd.f32 %v1083, %v1422
        %v1565 = vadd.f32 %v1084, %v1424
        %v1566 = vadd.f32 %v1085, %v1428
        %v1567 = vadd.f32 %v1086, %v1430
        %v1568 = vadd.f32 %v1087, %v1434
        %v1569 = vadd.f32 %v1088, %v1436
        %v1570 = vadd.f32 %v1089, %v1440
        %v1571 = vadd.f32 %v1090, %v1442
        %v1572 = vadd.f32 %v1091, %v1446
        %v1573 = vadd.f32 %v1092, %v1448
        %v1574 = vadd.f32 %v1093, %v1452
        %v1575 = vadd.f32 %v1094, %v1454
        %v1576 = vadd.f32 %v1095, %v1458
        %v1577 = vadd.f32 %v1096, %v1460
        %v1578 = vadd.f32 %v1097, %v1464
        %v1579 = vadd.f32 %v1098, %v1466
        %v1580 = vadd.f32 %v1099, %v1470
        %v1581 = vadd.f32 %v1100, %v1472
        %v1582 = vadd.f32 %v1101, %v1476
        %v1583 = vadd.f32 %v1102, %v1478
        %v1584 = vadd.f32 %v1103, %v1482
        %v1585 = vadd.f32 %v1104, %v1484
        %v1586 = vadd.f32 %v1105, %v1488
        %v1587 = vadd.f32 %v1106, %v1490
        %v1588 = vadd.f32 %v1107, %v1494
        %v1589 = vadd.f32 %v1108, %v1496
        %v1590 = vadd.f32 %v1109, %v1500
        %v1591 = vadd.f32 %v1110, %v1502
        %v1592 = vadd.f32 %v1111, %v1506
        %v1593 = vadd.f32 %v1112, %v1508
        %v1594 = vadd.f32 %v1113, %v1512
        %v1595 = vadd.f32 %v1114, %v1514
        %v1596 = vadd.f32 %v1115, %v1518
        %v1597 = vadd.f32 %v1116, %v1520
        %v1598 = vadd.f32 %v1117, %v1524
        %v1599 = vadd.f32 %v1118, %v1526
        %v1600 = vadd.f32 %v1119, %v1530
        %v1601 = vadd.f32 %v1120, %v1532
        %v1602 = vadd.f32 %v1121, %v1536
        %v1603 = vadd.f32 %v1122, %v1538
        %1604 = vst [vmem:[#allocation12] sm:$0xff] %v1540
        %1605 = vst [vmem:[#allocation12 + $0x8] sm:$0xff] %v1541
        %1606 = vst [vmem:[#allocation12 + $0x10] sm:$0xff] %v1542
        %1607 = vst [vmem:[#allocation12 + $0x18] sm:$0xff] %v1543
        %1608 = vst [vmem:[#allocation12 + $0x20] sm:$0xff] %v1544
        %1609 = vst [vmem:[#allocation12 + $0x28] sm:$0xff] %v1545
        %1610 = vst [vmem:[#allocation12 + $0x30] sm:$0xff] %v1546
        %1611 = vst [vmem:[#allocation12 + $0x38] sm:$0xff] %v1547
        %1612 = vst [vmem:[#allocation12 + $0x40] sm:$0xff] %v1548
        %1613 = vst [vmem:[#allocation12 + $0x48] sm:$0xff] %v1549
        %1614 = vst [vmem:[#allocation12 + $0x50] sm:$0xff] %v1550
        %1615 = vst [vmem:[#allocation12 + $0x58] sm:$0xff] %v1551
        %1616 = vst [vmem:[#allocation12 + $0x60] sm:$0xff] %v1552
        %1617 = vst [vmem:[#allocation12 + $0x68] sm:$0xff] %v1553
        %1618 = vst [vmem:[#allocation12 + $0x70] sm:$0xff] %v1554
        %1619 = vst [vmem:[#allocation12 + $0x78] sm:$0xff] %v1555
        %1620 = vst [vmem:[#allocation12 + $0x80] sm:$0xff] %v1556
        %1621 = vst [vmem:[#allocation12 + $0x88] sm:$0xff] %v1557
        %1622 = vst [vmem:[#allocation12 + $0x90] sm:$0xff] %v1558
        %1623 = vst [vmem:[#allocation12 + $0x98] sm:$0xff] %v1559
        %1624 = vst [vmem:[#allocation12 + $0xa0] sm:$0xff] %v1560
        %1625 = vst [vmem:[#allocation12 + $0xa8] sm:$0xff] %v1561
        %1626 = vst [vmem:[#allocation12 + $0xb0] sm:$0xff] %v1562
        %1627 = vst [vmem:[#allocation12 + $0xb8] sm:$0xff] %v1563
        %1628 = vst [vmem:[#allocation12 + $0xc0] sm:$0xff] %v1564
        %1629 = vst [vmem:[#allocation12 + $0xc8] sm:$0xff] %v1565
        %1630 = vst [vmem:[#allocation12 + $0xd0] sm:$0xff] %v1566
        %1631 = vst [vmem:[#allocation12 + $0xd8] sm:$0xff] %v1567
        %1632 = vst [vmem:[#allocation12 + $0xe0] sm:$0xff] %v1568
        %1633 = vst [vmem:[#allocation12 + $0xe8] sm:$0xff] %v1569
        %1634 = vst [vmem:[#allocation12 + $0xf0] sm:$0xff] %v1570
        %1635 = vst [vmem:[#allocation12 + $0xf8] sm:$0xff] %v1571
        %1636 = vst [vmem:[#allocation12 + $0x100] sm:$0xff] %v1572
        %1637 = vst [vmem:[#allocation12 + $0x108] sm:$0xff] %v1573
        %1638 = vst [vmem:[#allocation12 + $0x110] sm:$0xff] %v1574
        %1639 = vst [vmem:[#allocation12 + $0x118] sm:$0xff] %v1575
        %1640 = vst [vmem:[#allocation12 + $0x120] sm:$0xff] %v1576
        %1641 = vst [vmem:[#allocation12 + $0x128] sm:$0xff] %v1577
        %1642 = vst [vmem:[#allocation12 + $0x130] sm:$0xff] %v1578
        %1643 = vst [vmem:[#allocation12 + $0x138] sm:$0xff] %v1579
        %1644 = vst [vmem:[#allocation12 + $0x140] sm:$0xff] %v1580
        %1645 = vst [vmem:[#allocation12 + $0x148] sm:$0xff] %v1581
        %1646 = vst [vmem:[#allocation12 + $0x150] sm:$0xff] %v1582
        %1647 = vst [vmem:[#allocation12 + $0x158] sm:$0xff] %v1583
        %1648 = vst [vmem:[#allocation12 + $0x160] sm:$0xff] %v1584
        %1649 = vst [vmem:[#allocation12 + $0x168] sm:$0xff] %v1585
        %1650 = vst [vmem:[#allocation12 + $0x170] sm:$0xff] %v1586
        %1651 = vst [vmem:[#allocation12 + $0x178] sm:$0xff] %v1587
        %1652 = vst [vmem:[#allocation12 + $0x180] sm:$0xff] %v1588
        %1653 = vst [vmem:[#allocation12 + $0x188] sm:$0xff] %v1589
        %1654 = vst [vmem:[#allocation12 + $0x190] sm:$0xff] %v1590
        %1655 = vst [vmem:[#allocation12 + $0x198] sm:$0xff] %v1591
        %1656 = vst [vmem:[#allocation12 + $0x1a0] sm:$0xff] %v1592
        %1657 = vst [vmem:[#allocation12 + $0x1a8] sm:$0xff] %v1593
        %1658 = vst [vmem:[#allocation12 + $0x1b0] sm:$0xff] %v1594
        %1659 = vst [vmem:[#allocation12 + $0x1b8] sm:$0xff] %v1595
        %1660 = vst [vmem:[#allocation12 + $0x1c0] sm:$0xff] %v1596
        %1661 = vst [vmem:[#allocation12 + $0x1c8] sm:$0xff] %v1597
        %1662 = vst [vmem:[#allocation12 + $0x1d0] sm:$0xff] %v1598
        %1663 = vst [vmem:[#allocation12 + $0x1d8] sm:$0xff] %v1599
        %1664 = vst [vmem:[#allocation12 + $0x1e0] sm:$0xff] %v1600
        %1665 = vst [vmem:[#allocation12 + $0x1e8] sm:$0xff] %v1601
        %1666 = vst [vmem:[#allocation12 + $0x1f0] sm:$0xff] %v1602
        %1667 = vst [vmem:[#allocation12 + $0x1f8] sm:$0xff] %v1603
        %p1668 = scmp.eq.s32.totalorder %s25, 3
        // Predicated region
        $region41: #{tpu_custom_call.1} parent=27 // pred_check
          %p1669 = pneg %p1668
        $region42: #{tpu_custom_call.1} parent=27 // pred_check_branch
          %1671 = sbr.rel (%p1669) target = $region44
        $region43: #{tpu_custom_call.1} parent=27 // pred_region
          %p1672 = scmp.eq.s32.totalorder %s24, 0
          %s1673 = scalar_select %p1672, 1, 0
          %s1674 = scvt.s32.f32 %s1673
          %v1675 = vld [vmem:[#allocation2] sm:$0xff]
          %v1676 = vld [vmem:[#allocation2 + $0x8] sm:$0xff]
          %v1677 = vrot.slane %v1675, 4
          %v1678 = vadd.f32 %v1675, %v1677
          %v1679 = vrot.slane %v1678, 2
          %v1680 = vadd.f32 %v1678, %v1679
          %v1681 = vrot.slane %v1680, 1
          %v1682 = vadd.f32 %v1680, %v1681
          %v1683 = vrot.slane %v1676, 4
          %v1684 = vadd.f32 %v1676, %v1683
          %v1685 = vrot.slane %v1684, 2
          %v1686 = vadd.f32 %v1684, %v1685
          %v1687 = vrot.slane %v1686, 1
          %v1688 = vadd.f32 %v1686, %v1687
          %v1689 = vld [vmem:[#allocation3] sm:$0xff]
          %v1690 = vld [vmem:[#allocation3 + $0x8] sm:$0xff]
          %v1691 = vrot.slane %v1689, 4
          %v1692 = vadd.f32 %v1689, %v1691
          %v1693 = vrot.slane %v1692, 2
          %v1694 = vadd.f32 %v1692, %v1693
          %v1695 = vrot.slane %v1694, 1
          %v1696 = vadd.f32 %v1694, %v1695
          %v1697 = vrot.slane %v1690, 4
          %v1698 = vadd.f32 %v1690, %v1697
          %v1699 = vrot.slane %v1698, 2
          %v1700 = vadd.f32 %v1698, %v1699
          %v1701 = vrot.slane %v1700, 1
          %v1702 = vadd.f32 %v1700, %v1701
          %v1703 = vld [vmem:[#allocation4] sm:$0xff]
          %v1704 = vld [vmem:[#allocation4 + $0x8] sm:$0xff]
          %v1705 = vrot.slane %v1703, 4
          %v1706 = vadd.f32 %v1703, %v1705
          %v1707 = vrot.slane %v1706, 2
          %v1708 = vadd.f32 %v1706, %v1707
          %v1709 = vrot.slane %v1708, 1
          %v1710 = vadd.f32 %v1708, %v1709
          %v1711 = vrot.slane %v1704, 4
          %v1712 = vadd.f32 %v1704, %v1711
          %v1713 = vrot.slane %v1712, 2
          %v1714 = vadd.f32 %v1712, %v1713
          %v1715 = vrot.slane %v1714, 1
          %v1716 = vadd.f32 %v1714, %v1715
          %v1717 = vld [vmem:[#allocation5] sm:$0xff]
          %v1718 = vld [vmem:[#allocation5 + $0x8] sm:$0xff]
          %v1719 = vrot.slane %v1717, 4
          %v1720 = vadd.f32 %v1717, %v1719
          %v1721 = vrot.slane %v1720, 2
          %v1722 = vadd.f32 %v1720, %v1721
          %v1723 = vrot.slane %v1722, 1
          %v1724 = vadd.f32 %v1722, %v1723
          %v1725 = vrot.slane %v1718, 4
          %v1726 = vadd.f32 %v1718, %v1725
          %v1727 = vrot.slane %v1726, 2
          %v1728 = vadd.f32 %v1726, %v1727
          %v1729 = vrot.slane %v1728, 1
          %v1730 = vadd.f32 %v1728, %v1729
          %v1731 = vld [vmem:[#allocation7] sm:$0xff]
          %v1732 = vld [vmem:[#allocation7 + $0x8] sm:$0xff]
          %v1733 = vrot.slane %v1731, 4
          %v1734 = vadd.f32 %v1731, %v1733
          %v1735 = vrot.slane %v1734, 2
          %v1736 = vadd.f32 %v1734, %v1735
          %v1737 = vrot.slane %v1736, 1
          %v1738 = vadd.f32 %v1736, %v1737
          %v1739 = vrot.slane %v1732, 4
          %v1740 = vadd.f32 %v1732, %v1739
          %v1741 = vrot.slane %v1740, 2
          %v1742 = vadd.f32 %v1740, %v1741
          %v1743 = vrot.slane %v1742, 1
          %v1744 = vadd.f32 %v1742, %v1743
          %v1745 = vld [vmem:[#allocation8] sm:$0xff]
          %v1746 = vld [vmem:[#allocation8 + $0x8] sm:$0xff]
          %v1747 = vrot.slane %v1745, 4
          %v1748 = vadd.f32 %v1745, %v1747
          %v1749 = vrot.slane %v1748, 2
          %v1750 = vadd.f32 %v1748, %v1749
          %v1751 = vrot.slane %v1750, 1
          %v1752 = vadd.f32 %v1750, %v1751
          %v1753 = vrot.slane %v1746, 4
          %v1754 = vadd.f32 %v1746, %v1753
          %v1755 = vrot.slane %v1754, 2
          %v1756 = vadd.f32 %v1754, %v1755
          %v1757 = vrot.slane %v1756, 1
          %v1758 = vadd.f32 %v1756, %v1757
          %v1759 = vld [vmem:[#allocation9] sm:$0xff]
          %v1760 = vld [vmem:[#allocation9 + $0x8] sm:$0xff]
          %v1761 = vrot.slane %v1759, 4
          %v1762 = vadd.f32 %v1759, %v1761
          %v1763 = vrot.slane %v1762, 2
          %v1764 = vadd.f32 %v1762, %v1763
          %v1765 = vrot.slane %v1764, 1
          %v1766 = vadd.f32 %v1764, %v1765
          %v1767 = vrot.slane %v1760, 4
          %v1768 = vadd.f32 %v1760, %v1767
          %v1769 = vrot.slane %v1768, 2
          %v1770 = vadd.f32 %v1768, %v1769
          %v1771 = vrot.slane %v1770, 1
          %v1772 = vadd.f32 %v1770, %v1771
          %v1773 = vld [vmem:[#allocation10] sm:$0xff]
          %v1774 = vld [vmem:[#allocation10 + $0x8] sm:$0xff]
          %v1775 = vrot.slane %v1773, 4
          %v1776 = vadd.f32 %v1773, %v1775
          %v1777 = vrot.slane %v1776, 2
          %v1778 = vadd.f32 %v1776, %v1777
          %v1779 = vrot.slane %v1778, 1
          %v1780 = vadd.f32 %v1778, %v1779
          %v1781 = vrot.slane %v1774, 4
          %v1782 = vadd.f32 %v1774, %v1781
          %v1783 = vrot.slane %v1782, 2
          %v1784 = vadd.f32 %v1782, %v1783
          %v1785 = vrot.slane %v1784, 1
          %v1786 = vadd.f32 %v1784, %v1785
          %v1787 = vmul.f32 %v1682, %v1682
          %v1788 = vmul.f32 %v1688, %v1688
          %v1789 = vmul.f32 %v1787, 0.015625
          %v1790 = vmul.f32 %v1788, 0.015625
          %v1791 = vsub.f32 %v1710, %v1789
          %v1792 = vsub.f32 %v1716, %v1790
          %v1793 = vmul.f32 %v1791, 0.015873017
          %v1794 = vmul.f32 %v1792, 0.015873017
          %v1795 = vadd.f32 %v1793, 0.0001
          %v1796 = vadd.f32 %v1794, 0.0001
          %v1797 = vrsqrt.pop %v1795
          %v1798 = vmul.f32 %v1795, %v1797
          %vm1799 = vcmp.eq.f32.partialorder %v1795, inf
          %v1800 = vsel %vm1799, %v1795, %v1798
          %vm1801 = vcmp.eq.f32.partialorder %v1795, 0.0
          %v1802 = vand.u32 %v1795, 2147483648
          %v1803 = vsel %vm1801, %v1802, %v1800
          %v1804 = vrsqrt.pop %v1796
          %v1805 = vmul.f32 %v1796, %v1804
          %vm1806 = vcmp.eq.f32.partialorder %v1796, inf
          %v1807 = vsel %vm1806, %v1796, %v1805
          %vm1808 = vcmp.eq.f32.partialorder %v1796, 0.0
          %v1809 = vand.u32 %v1796, 2147483648
          %v1810 = vsel %vm1808, %v1809, %v1807
          %v1811 = vsub.f32 1.0, %v1803
          %v1812 = vsub.f32 1.0, %v1810
          %v1813 = vmax.f32 %v1811, 0.0
          %v1814 = vmax.f32 %v1812, 0.0
          %vm1815 = vcmask 1040384
          %v1816 = vsel %vm1815, %v1813, 0.0
          %v1817 = vsel %vm1815, %v1814, 0.0
          %v1818 = vadd.f32 %v1816, %v1817
          %1819 = vadd.xlane.f32.xlu0 %v1818
          %v1820 = vpop.xlane.xlu0 %1819
          %v1821 = vrot.slane %v1820, 4
          %v1822 = vadd.f32 %v1820, %v1821
          %v1823 = vrot.slane %v1822, 2
          %v1824 = vadd.f32 %v1822, %v1823
          %v1825 = vrot.slane %v1824, 1
          %v1826 = vadd.f32 %v1824, %v1825
          %s1827 = vtos %v1826
          %v1828 = vmul.f32 %v1696, %v1696
          %v1829 = vmul.f32 %v1702, %v1702
          %v1830 = vmul.f32 %v1828, 0.015625
          %v1831 = vmul.f32 %v1829, 0.015625
          %v1832 = vsub.f32 %v1724, %v1830
          %v1833 = vsub.f32 %v1730, %v1831
          %v1834 = vmul.f32 %v1832, 0.015873017
          %v1835 = vmul.f32 %v1833, 0.015873017
          %v1836 = vadd.f32 %v1834, 0.0001
          %v1837 = vadd.f32 %v1835, 0.0001
          %v1838 = vrsqrt.pop %v1836
          %v1839 = vmul.f32 %v1836, %v1838
          %vm1840 = vcmp.eq.f32.partialorder %v1836, inf
          %v1841 = vsel %vm1840, %v1836, %v1839
          %vm1842 = vcmp.eq.f32.partialorder %v1836, 0.0
          %v1843 = vand.u32 %v1836, 2147483648
          %v1844 = vsel %vm1842, %v1843, %v1841
          %v1845 = vrsqrt.pop %v1837
          %v1846 = vmul.f32 %v1837, %v1845
          %vm1847 = vcmp.eq.f32.partialorder %v1837, inf
          %v1848 = vsel %vm1847, %v1837, %v1846
          %vm1849 = vcmp.eq.f32.partialorder %v1837, 0.0
          %v1850 = vand.u32 %v1837, 2147483648
          %v1851 = vsel %vm1849, %v1850, %v1848
          %v1852 = vsub.f32 1.0, %v1844
          %v1853 = vsub.f32 1.0, %v1851
          %v1854 = vmax.f32 %v1852, 0.0
          %v1855 = vmax.f32 %v1853, 0.0
          %v1856 = vsel %vm1815, %v1854, 0.0
          %v1857 = vsel %vm1815, %v1855, 0.0
          %v1858 = vadd.f32 %v1856, %v1857
          %1859 = vadd.xlane.f32.xlu0 %v1858
          %v1860 = vpop.xlane.xlu0 %1859
          %v1861 = vrot.slane %v1860, 4
          %v1862 = vadd.f32 %v1860, %v1861
          %v1863 = vrot.slane %v1862, 2
          %v1864 = vadd.f32 %v1862, %v1863
          %v1865 = vrot.slane %v1864, 1
          %v1866 = vadd.f32 %v1864, %v1865
          %s1867 = vtos %v1866
          %s1868 = sadd.f32 %s1827, %s1867
          %s1869 = smul.f32 %s1868, 0.00390625
          %v1870 = vld [vmem:[#allocation6] sm:$0xff]
          %v1871 = vld [vmem:[#allocation6 + $0x8] sm:$0xff]
          %v1872 = vadd.f32 %v1870, %v1871
          %1873 = vadd.xlane.f32.xlu0 %v1872
          %v1874 = vpop.xlane.xlu0 %1873
          %v1875 = vrot.slane %v1874, 4
          %v1876 = vadd.f32 %v1874, %v1875
          %v1877 = vrot.slane %v1876, 2
          %v1878 = vadd.f32 %v1876, %v1877
          %v1879 = vrot.slane %v1878, 1
          %v1880 = vadd.f32 %v1878, %v1879
          %s1881 = vtos %v1880
          %s1882 = smul.f32 %s1881, 6.1035156e-05
          %v1883 = vlaneseq
          %v1884 = vshrl.u32 %v1883, 7
          %v1885 = vld [vmem:[#allocation11] sm:$0xff]
          %v1886 = vld [vmem:[#allocation11 + $0x8] sm:$0xff]
          %v1887 = vld [vmem:[#allocation11 + $0x10] sm:$0xff]
          %v1888 = vld [vmem:[#allocation11 + $0x18] sm:$0xff]
          %v1889 = vld [vmem:[#allocation11 + $0x20] sm:$0xff]
          %v1890 = vld [vmem:[#allocation11 + $0x28] sm:$0xff]
          %v1891 = vld [vmem:[#allocation11 + $0x30] sm:$0xff]
          %v1892 = vld [vmem:[#allocation11 + $0x38] sm:$0xff]
          %v1893 = vld [vmem:[#allocation11 + $0x40] sm:$0xff]
          %v1894 = vld [vmem:[#allocation11 + $0x48] sm:$0xff]
          %v1895 = vld [vmem:[#allocation11 + $0x50] sm:$0xff]
          %v1896 = vld [vmem:[#allocation11 + $0x58] sm:$0xff]
          %v1897 = vld [vmem:[#allocation11 + $0x60] sm:$0xff]
          %v1898 = vld [vmem:[#allocation11 + $0x68] sm:$0xff]
          %v1899 = vld [vmem:[#allocation11 + $0x70] sm:$0xff]
          %v1900 = vld [vmem:[#allocation11 + $0x78] sm:$0xff]
          %v1901 = vld [vmem:[#allocation11 + $0x80] sm:$0xff]
          %v1902 = vld [vmem:[#allocation11 + $0x88] sm:$0xff]
          %v1903 = vld [vmem:[#allocation11 + $0x90] sm:$0xff]
          %v1904 = vld [vmem:[#allocation11 + $0x98] sm:$0xff]
          %v1905 = vld [vmem:[#allocation11 + $0xa0] sm:$0xff]
          %v1906 = vld [vmem:[#allocation11 + $0xa8] sm:$0xff]
          %v1907 = vld [vmem:[#allocation11 + $0xb0] sm:$0xff]
          %v1908 = vld [vmem:[#allocation11 + $0xb8] sm:$0xff]
          %v1909 = vld [vmem:[#allocation11 + $0xc0] sm:$0xff]
          %v1910 = vld [vmem:[#allocation11 + $0xc8] sm:$0xff]
          %v1911 = vld [vmem:[#allocation11 + $0xd0] sm:$0xff]
          %v1912 = vld [vmem:[#allocation11 + $0xd8] sm:$0xff]
          %v1913 = vld [vmem:[#allocation11 + $0xe0] sm:$0xff]
          %v1914 = vld [vmem:[#allocation11 + $0xe8] sm:$0xff]
          %v1915 = vld [vmem:[#allocation11 + $0xf0] sm:$0xff]
          %v1916 = vld [vmem:[#allocation11 + $0xf8] sm:$0xff]
          %v1917 = vld [vmem:[#allocation11 + $0x100] sm:$0xff]
          %v1918 = vld [vmem:[#allocation11 + $0x108] sm:$0xff]
          %v1919 = vld [vmem:[#allocation11 + $0x110] sm:$0xff]
          %v1920 = vld [vmem:[#allocation11 + $0x118] sm:$0xff]
          %v1921 = vld [vmem:[#allocation11 + $0x120] sm:$0xff]
          %v1922 = vld [vmem:[#allocation11 + $0x128] sm:$0xff]
          %v1923 = vld [vmem:[#allocation11 + $0x130] sm:$0xff]
          %v1924 = vld [vmem:[#allocation11 + $0x138] sm:$0xff]
          %v1925 = vld [vmem:[#allocation11 + $0x140] sm:$0xff]
          %v1926 = vld [vmem:[#allocation11 + $0x148] sm:$0xff]
          %v1927 = vld [vmem:[#allocation11 + $0x150] sm:$0xff]
          %v1928 = vld [vmem:[#allocation11 + $0x158] sm:$0xff]
          %v1929 = vld [vmem:[#allocation11 + $0x160] sm:$0xff]
          %v1930 = vld [vmem:[#allocation11 + $0x168] sm:$0xff]
          %v1931 = vld [vmem:[#allocation11 + $0x170] sm:$0xff]
          %v1932 = vld [vmem:[#allocation11 + $0x178] sm:$0xff]
          %v1933 = vld [vmem:[#allocation11 + $0x180] sm:$0xff]
          %v1934 = vld [vmem:[#allocation11 + $0x188] sm:$0xff]
          %v1935 = vld [vmem:[#allocation11 + $0x190] sm:$0xff]
          %v1936 = vld [vmem:[#allocation11 + $0x198] sm:$0xff]
          %v1937 = vld [vmem:[#allocation11 + $0x1a0] sm:$0xff]
          %v1938 = vld [vmem:[#allocation11 + $0x1a8] sm:$0xff]
          %v1939 = vld [vmem:[#allocation11 + $0x1b0] sm:$0xff]
          %v1940 = vld [vmem:[#allocation11 + $0x1b8] sm:$0xff]
          %v1941 = vld [vmem:[#allocation11 + $0x1c0] sm:$0xff]
          %v1942 = vld [vmem:[#allocation11 + $0x1c8] sm:$0xff]
          %v1943 = vld [vmem:[#allocation11 + $0x1d0] sm:$0xff]
          %v1944 = vld [vmem:[#allocation11 + $0x1d8] sm:$0xff]
          %v1945 = vld [vmem:[#allocation11 + $0x1e0] sm:$0xff]
          %v1946 = vld [vmem:[#allocation11 + $0x1e8] sm:$0xff]
          %v1947 = vld [vmem:[#allocation11 + $0x1f0] sm:$0xff]
          %v1948 = vld [vmem:[#allocation11 + $0x1f8] sm:$0xff]
          %v1949 = vmul.f32 %v1885, %v1885
          %v1950 = vmul.f32 %v1886, %v1886
          %v1951 = vmul.f32 %v1887, %v1887
          %v1952 = vmul.f32 %v1888, %v1888
          %v1953 = vmul.f32 %v1889, %v1889
          %v1954 = vmul.f32 %v1890, %v1890
          %v1955 = vmul.f32 %v1891, %v1891
          %v1956 = vmul.f32 %v1892, %v1892
          %v1957 = vmul.f32 %v1893, %v1893
          %v1958 = vmul.f32 %v1894, %v1894
          %v1959 = vmul.f32 %v1895, %v1895
          %v1960 = vmul.f32 %v1896, %v1896
          %v1961 = vmul.f32 %v1897, %v1897
          %v1962 = vmul.f32 %v1898, %v1898
          %v1963 = vmul.f32 %v1899, %v1899
          %v1964 = vmul.f32 %v1900, %v1900
          %v1965 = vmul.f32 %v1901, %v1901
          %v1966 = vmul.f32 %v1902, %v1902
          %v1967 = vmul.f32 %v1903, %v1903
          %v1968 = vmul.f32 %v1904, %v1904
          %v1969 = vmul.f32 %v1905, %v1905
          %v1970 = vmul.f32 %v1906, %v1906
          %v1971 = vmul.f32 %v1907, %v1907
          %v1972 = vmul.f32 %v1908, %v1908
          %v1973 = vmul.f32 %v1909, %v1909
          %v1974 = vmul.f32 %v1910, %v1910
          %v1975 = vmul.f32 %v1911, %v1911
          %v1976 = vmul.f32 %v1912, %v1912
          %v1977 = vmul.f32 %v1913, %v1913
          %v1978 = vmul.f32 %v1914, %v1914
          %v1979 = vmul.f32 %v1915, %v1915
          %v1980 = vmul.f32 %v1916, %v1916
          %v1981 = vmul.f32 %v1917, %v1917
          %v1982 = vmul.f32 %v1918, %v1918
          %v1983 = vmul.f32 %v1919, %v1919
          %v1984 = vmul.f32 %v1920, %v1920
          %v1985 = vmul.f32 %v1921, %v1921
          %v1986 = vmul.f32 %v1922, %v1922
          %v1987 = vmul.f32 %v1923, %v1923
          %v1988 = vmul.f32 %v1924, %v1924
          %v1989 = vmul.f32 %v1925, %v1925
          %v1990 = vmul.f32 %v1926, %v1926
          %v1991 = vmul.f32 %v1927, %v1927
          %v1992 = vmul.f32 %v1928, %v1928
          %v1993 = vmul.f32 %v1929, %v1929
          %v1994 = vmul.f32 %v1930, %v1930
          %v1995 = vmul.f32 %v1931, %v1931
          %v1996 = vmul.f32 %v1932, %v1932
          %v1997 = vmul.f32 %v1933, %v1933
          %v1998 = vmul.f32 %v1934, %v1934
          %v1999 = vmul.f32 %v1935, %v1935
          %v2000 = vmul.f32 %v1936, %v1936
          %v2001 = vmul.f32 %v1937, %v1937
          %v2002 = vmul.f32 %v1938, %v1938
          %v2003 = vmul.f32 %v1939, %v1939
          %v2004 = vmul.f32 %v1940, %v1940
          %v2005 = vmul.f32 %v1941, %v1941
          %v2006 = vmul.f32 %v1942, %v1942
          %v2007 = vmul.f32 %v1943, %v1943
          %v2008 = vmul.f32 %v1944, %v1944
          %v2009 = vmul.f32 %v1945, %v1945
          %v2010 = vmul.f32 %v1946, %v1946
          %v2011 = vmul.f32 %v1947, %v1947
          %v2012 = vmul.f32 %v1948, %v1948
          %v2013 = vadd.f32 %v1949, %v1950
          %v2014 = vadd.f32 %v2013, %v1951
          %v2015 = vadd.f32 %v2014, %v1952
          %v2016 = vadd.f32 %v2015, %v1953
          %v2017 = vadd.f32 %v2016, %v1954
          %v2018 = vadd.f32 %v2017, %v1955
          %v2019 = vadd.f32 %v2018, %v1956
          %v2020 = vadd.f32 %v2019, %v1957
          %v2021 = vadd.f32 %v2020, %v1958
          %v2022 = vadd.f32 %v2021, %v1959
          %v2023 = vadd.f32 %v2022, %v1960
          %v2024 = vadd.f32 %v2023, %v1961
          %v2025 = vadd.f32 %v2024, %v1962
          %v2026 = vadd.f32 %v2025, %v1963
          %v2027 = vadd.f32 %v2026, %v1964
          %v2028 = vadd.f32 %v2027, %v1965
          %v2029 = vadd.f32 %v2028, %v1966
          %v2030 = vadd.f32 %v2029, %v1967
          %v2031 = vadd.f32 %v2030, %v1968
          %v2032 = vadd.f32 %v2031, %v1969
          %v2033 = vadd.f32 %v2032, %v1970
          %v2034 = vadd.f32 %v2033, %v1971
          %v2035 = vadd.f32 %v2034, %v1972
          %v2036 = vadd.f32 %v2035, %v1973
          %v2037 = vadd.f32 %v2036, %v1974
          %v2038 = vadd.f32 %v2037, %v1975
          %v2039 = vadd.f32 %v2038, %v1976
          %v2040 = vadd.f32 %v2039, %v1977
          %v2041 = vadd.f32 %v2040, %v1978
          %v2042 = vadd.f32 %v2041, %v1979
          %v2043 = vadd.f32 %v2042, %v1980
          %v2044 = vadd.f32 %v2043, %v1981
          %v2045 = vadd.f32 %v2044, %v1982
          %v2046 = vadd.f32 %v2045, %v1983
          %v2047 = vadd.f32 %v2046, %v1984
          %v2048 = vadd.f32 %v2047, %v1985
          %v2049 = vadd.f32 %v2048, %v1986
          %v2050 = vadd.f32 %v2049, %v1987
          %v2051 = vadd.f32 %v2050, %v1988
          %v2052 = vadd.f32 %v2051, %v1989
          %v2053 = vadd.f32 %v2052, %v1990
          %v2054 = vadd.f32 %v2053, %v1991
          %v2055 = vadd.f32 %v2054, %v1992
          %v2056 = vadd.f32 %v2055, %v1993
          %v2057 = vadd.f32 %v2056, %v1994
          %v2058 = vadd.f32 %v2057, %v1995
          %v2059 = vadd.f32 %v2058, %v1996
          %v2060 = vadd.f32 %v2059, %v1997
          %v2061 = vadd.f32 %v2060, %v1998
          %v2062 = vadd.f32 %v2061, %v1999
          %v2063 = vadd.f32 %v2062, %v2000
          %v2064 = vadd.f32 %v2063, %v2001
          %v2065 = vadd.f32 %v2064, %v2002
          %v2066 = vadd.f32 %v2065, %v2003
          %v2067 = vadd.f32 %v2066, %v2004
          %v2068 = vadd.f32 %v2067, %v2005
          %v2069 = vadd.f32 %v2068, %v2006
          %v2070 = vadd.f32 %v2069, %v2007
          %v2071 = vadd.f32 %v2070, %v2008
          %v2072 = vadd.f32 %v2071, %v2009
          %v2073 = vadd.f32 %v2072, %v2010
          %v2074 = vadd.f32 %v2073, %v2011
          %v2075 = vadd.f32 %v2074, %v2012
          %2076 = vadd.xlane.f32.xlu0 %v2075
          %v2077 = vpop.xlane.xlu0 %2076
          %v2078 = vrot.slane %v2077, 4
          %v2079 = vadd.f32 %v2077, %v2078
          %v2080 = vrot.slane %v2079, 2
          %v2081 = vadd.f32 %v2079, %v2080
          %v2082 = vrot.slane %v2081, 1
          %v2083 = vadd.f32 %v2081, %v2082
          %s2084 = vtos %v2083
          %vm2085 = vcmp.eq.s32.totalorder %v1884, 0
          %v2086 = vsel %vm2085, %v1682, 0.0
          %v2087 = vsel %vm2085, %v1688, 0.0
          %v2088 = vsel %vm2085, %v1738, 0.0
          %v2089 = vsel %vm2085, %v1744, 0.0
          %2090 = vmatprep.subr.mxu0 %v1916
          %2091 = vmatpush1.msra.mxu0 %v1915
          %2092 = vmatprep.subr.mxu0 %v1914
          %2093 = vmatpush1.msra.mxu0 %v1913
          %2094 = vmatprep.subr.mxu0 %v1912
          %2095 = vmatpush1.msra.mxu0 %v1911
          %2096 = vmatprep.subr.mxu0 %v1910
          %2097 = vmatpush1.msra.mxu0 %v1909
          %2098 = vmatprep.subr.mxu0 %v1908
          %2099 = vmatpush1.msra.mxu0 %v1907
          %2100 = vmatprep.subr.mxu0 %v1906
          %2101 = vmatpush1.msra.mxu0 %v1905
          %2102 = vmatprep.subr.mxu0 %v1904
          %2103 = vmatpush1.msra.mxu0 %v1903
          %2104 = vmatprep.subr.mxu0 %v1902
          %2105 = vmatpush1.msra.mxu0 %v1901
          %2106 = vmatprep.subr.mxu0 %v1900
          %2107 = vmatpush1.msra.mxu0 %v1899
          %2108 = vmatprep.subr.mxu0 %v1898
          %2109 = vmatpush1.msra.mxu0 %v1897
          %2110 = vmatprep.subr.mxu0 %v1896
          %2111 = vmatpush1.msra.mxu0 %v1895
          %2112 = vmatprep.subr.mxu0 %v1894
          %2113 = vmatpush1.msra.mxu0 %v1893
          %2114 = vmatprep.subr.mxu0 %v1892
          %2115 = vmatpush1.msra.mxu0 %v1891
          %2116 = vmatprep.subr.mxu0 %v1890
          %2117 = vmatpush1.msra.mxu0 %v1889
          %2118 = vmatprep.subr.mxu0 %v1888
          %2119 = vmatpush1.msra.mxu0 %v1887
          %2120 = vmatprep.subr.mxu0 %v1886
          %2121 = vmatpush1.msra.mxu0 %v1885
          %2122 = vmatprep.subr.mxu0 %v1948
          %2123 = vmatpush2.msra.mxu0 %v1947
          %2124 = vmatprep.subr.mxu0 %v1946
          %2125 = vmatpush2.msra.mxu0 %v1945
          %2126 = vmatprep.subr.mxu0 %v1944
          %2127 = vmatpush2.msra.mxu0 %v1943
          %2128 = vmatprep.subr.mxu0 %v1942
          %2129 = vmatpush2.msra.mxu0 %v1941
          %2130 = vmatprep.subr.mxu0 %v1940
          %2131 = vmatpush2.msra.mxu0 %v1939
          %2132 = vmatprep.subr.mxu0 %v1938
          %2133 = vmatpush2.msra.mxu0 %v1937
          %2134 = vmatprep.subr.mxu0 %v1936
          %2135 = vmatpush2.msra.mxu0 %v1935
          %2136 = vmatprep.subr.mxu0 %v1934
          %2137 = vmatpush2.msra.mxu0 %v1933
          %2138 = vmatprep.subr.mxu0 %v1932
          %2139 = vmatpush2.msra.mxu0 %v1931
          %2140 = vmatprep.subr.mxu0 %v1930
          %2141 = vmatpush2.msra.mxu0 %v1929
          %2142 = vmatprep.subr.mxu0 %v1928
          %2143 = vmatpush2.msra.mxu0 %v1927
          %2144 = vmatprep.subr.mxu0 %v1926
          %2145 = vmatpush2.msra.mxu0 %v1925
          %2146 = vmatprep.subr.mxu0 %v1924
          %2147 = vmatpush2.msra.mxu0 %v1923
          %2148 = vmatprep.subr.mxu0 %v1922
          %2149 = vmatpush2.msra.mxu0 %v1921
          %2150 = vmatprep.subr.mxu0 %v1920
          %2151 = vmatpush2.msra.mxu0 %v1919
          %2152 = vmatprep.subr.mxu0 %v1918
          %2153 = vmatpush2.msra.mxu0 %v1917
          %2154 = vmatprep.mubr.f32.mxu0 %v2087
          %2155 = vmatmul.mubr.f32.gmra.mxu0 %v2086
          %v2156 = vpop.f32.mrf.mxu0
          %v2157 = vadd.f32 0.0, %v2156
          %v2158 = vpop.f32.mrf.mxu0
          %v2159 = vadd.f32 0.0, %v2158
          %2160 = vdwg.mxu0
          %v2161 = vmul.f32 %v2157, %v2088
          %v2162 = vmul.f32 %v2159, %v2089
          %v2163 = vadd.f32 %v2161, %v2162
          %2164 = vadd.xlane.f32.xlu0 %v2163
          %v2165 = vpop.xlane.xlu0 %2164
          %v2166 = vrot.slane %v2165, 4
          %v2167 = vadd.f32 %v2165, %v2166
          %v2168 = vrot.slane %v2167, 2
          %v2169 = vadd.f32 %v2167, %v2168
          %v2170 = vrot.slane %v2169, 1
          %v2171 = vadd.f32 %v2169, %v2170
          %s2172 = vtos %v2171
          %v2173 = vmul.f32 %v1738, %v1738
          %v2174 = vmul.f32 %v1744, %v1744
          %v2175 = vmul.f32 %v2173, 0.015625
          %v2176 = vmul.f32 %v2174, 0.015625
          %v2177 = vsub.f32 %v1766, %v2175
          %v2178 = vsub.f32 %v1772, %v2176
          %v2179 = vmul.f32 %v2177, %v2177
          %v2180 = vmul.f32 %v2178, %v2178
          %v2181 = vsel %vm1815, %v2179, 0.0
          %v2182 = vsel %vm1815, %v2180, 0.0
          %v2183 = vadd.f32 %v2181, %v2182
          %2184 = vadd.xlane.f32.xlu0 %v2183
          %v2185 = vpop.xlane.xlu0 %2184
          %v2186 = vrot.slane %v2185, 4
          %v2187 = vadd.f32 %v2185, %v2186
          %v2188 = vrot.slane %v2187, 2
          %v2189 = vadd.f32 %v2187, %v2188
          %v2190 = vrot.slane %v2189, 1
          %v2191 = vadd.f32 %v2189, %v2190
          %s2192 = vtos %v2191
          %v2193 = vsel %vm1815, %v1787, 0.0
          %v2194 = vsel %vm1815, %v1788, 0.0
          %v2195 = vadd.f32 %v2193, %v2194
          %2196 = vadd.xlane.f32.xlu0 %v2195
          %v2197 = vpop.xlane.xlu0 %2196
          %v2198 = vrot.slane %v2197, 4
          %v2199 = vadd.f32 %v2197, %v2198
          %v2200 = vrot.slane %v2199, 2
          %v2201 = vadd.f32 %v2199, %v2200
          %v2202 = vrot.slane %v2201, 1
          %v2203 = vadd.f32 %v2201, %v2202
          %s2204 = vtos %v2203
          %s2205 = smul.f32 %s2204, 0.015625
          %s2206 = smul.f32 %s2205, %s2205
          %s2207 = smul.f32 %s2172, 0.03125
          %s2208 = ssub.f32 %s2084, %s2207
          %s2209 = ssub.f32 %s2208, %s2192
          %s2210 = smul.f32 %s1674, %s2206
          %s2211 = sadd.f32 %s2209, %s2210
          %s2212 = smul.f32 %s2211, 0.00025195265
          %v2213 = vld [vmem:[#allocation12] sm:$0xff]
          %v2214 = vld [vmem:[#allocation12 + $0x8] sm:$0xff]
          %v2215 = vld [vmem:[#allocation12 + $0x10] sm:$0xff]
          %v2216 = vld [vmem:[#allocation12 + $0x18] sm:$0xff]
          %v2217 = vld [vmem:[#allocation12 + $0x20] sm:$0xff]
          %v2218 = vld [vmem:[#allocation12 + $0x28] sm:$0xff]
          %v2219 = vld [vmem:[#allocation12 + $0x30] sm:$0xff]
          %v2220 = vld [vmem:[#allocation12 + $0x38] sm:$0xff]
          %v2221 = vld [vmem:[#allocation12 + $0x40] sm:$0xff]
          %v2222 = vld [vmem:[#allocation12 + $0x48] sm:$0xff]
          %v2223 = vld [vmem:[#allocation12 + $0x50] sm:$0xff]
          %v2224 = vld [vmem:[#allocation12 + $0x58] sm:$0xff]
          %v2225 = vld [vmem:[#allocation12 + $0x60] sm:$0xff]
          %v2226 = vld [vmem:[#allocation12 + $0x68] sm:$0xff]
          %v2227 = vld [vmem:[#allocation12 + $0x70] sm:$0xff]
          %v2228 = vld [vmem:[#allocation12 + $0x78] sm:$0xff]
          %v2229 = vld [vmem:[#allocation12 + $0x80] sm:$0xff]
          %v2230 = vld [vmem:[#allocation12 + $0x88] sm:$0xff]
          %v2231 = vld [vmem:[#allocation12 + $0x90] sm:$0xff]
          %v2232 = vld [vmem:[#allocation12 + $0x98] sm:$0xff]
          %v2233 = vld [vmem:[#allocation12 + $0xa0] sm:$0xff]
          %v2234 = vld [vmem:[#allocation12 + $0xa8] sm:$0xff]
          %v2235 = vld [vmem:[#allocation12 + $0xb0] sm:$0xff]
          %v2236 = vld [vmem:[#allocation12 + $0xb8] sm:$0xff]
          %v2237 = vld [vmem:[#allocation12 + $0xc0] sm:$0xff]
          %v2238 = vld [vmem:[#allocation12 + $0xc8] sm:$0xff]
          %v2239 = vld [vmem:[#allocation12 + $0xd0] sm:$0xff]
          %v2240 = vld [vmem:[#allocation12 + $0xd8] sm:$0xff]
          %v2241 = vld [vmem:[#allocation12 + $0xe0] sm:$0xff]
          %v2242 = vld [vmem:[#allocation12 + $0xe8] sm:$0xff]
          %v2243 = vld [vmem:[#allocation12 + $0xf0] sm:$0xff]
          %v2244 = vld [vmem:[#allocation12 + $0xf8] sm:$0xff]
          %v2245 = vld [vmem:[#allocation12 + $0x100] sm:$0xff]
          %v2246 = vld [vmem:[#allocation12 + $0x108] sm:$0xff]
          %v2247 = vld [vmem:[#allocation12 + $0x110] sm:$0xff]
          %v2248 = vld [vmem:[#allocation12 + $0x118] sm:$0xff]
          %v2249 = vld [vmem:[#allocation12 + $0x120] sm:$0xff]
          %v2250 = vld [vmem:[#allocation12 + $0x128] sm:$0xff]
          %v2251 = vld [vmem:[#allocation12 + $0x130] sm:$0xff]
          %v2252 = vld [vmem:[#allocation12 + $0x138] sm:$0xff]
          %v2253 = vld [vmem:[#allocation12 + $0x140] sm:$0xff]
          %v2254 = vld [vmem:[#allocation12 + $0x148] sm:$0xff]
          %v2255 = vld [vmem:[#allocation12 + $0x150] sm:$0xff]
          %v2256 = vld [vmem:[#allocation12 + $0x158] sm:$0xff]
          %v2257 = vld [vmem:[#allocation12 + $0x160] sm:$0xff]
          %v2258 = vld [vmem:[#allocation12 + $0x168] sm:$0xff]
          %v2259 = vld [vmem:[#allocation12 + $0x170] sm:$0xff]
          %v2260 = vld [vmem:[#allocation12 + $0x178] sm:$0xff]
          %v2261 = vld [vmem:[#allocation12 + $0x180] sm:$0xff]
          %v2262 = vld [vmem:[#allocation12 + $0x188] sm:$0xff]
          %v2263 = vld [vmem:[#allocation12 + $0x190] sm:$0xff]
          %v2264 = vld [vmem:[#allocation12 + $0x198] sm:$0xff]
          %v2265 = vld [vmem:[#allocation12 + $0x1a0] sm:$0xff]
          %v2266 = vld [vmem:[#allocation12 + $0x1a8] sm:$0xff]
          %v2267 = vld [vmem:[#allocation12 + $0x1b0] sm:$0xff]
          %v2268 = vld [vmem:[#allocation12 + $0x1b8] sm:$0xff]
          %v2269 = vld [vmem:[#allocation12 + $0x1c0] sm:$0xff]
          %v2270 = vld [vmem:[#allocation12 + $0x1c8] sm:$0xff]
          %v2271 = vld [vmem:[#allocation12 + $0x1d0] sm:$0xff]
          %v2272 = vld [vmem:[#allocation12 + $0x1d8] sm:$0xff]
          %v2273 = vld [vmem:[#allocation12 + $0x1e0] sm:$0xff]
          %v2274 = vld [vmem:[#allocation12 + $0x1e8] sm:$0xff]
          %v2275 = vld [vmem:[#allocation12 + $0x1f0] sm:$0xff]
          %v2276 = vld [vmem:[#allocation12 + $0x1f8] sm:$0xff]
          %v2277 = vmul.f32 %v2213, %v2213
          %v2278 = vmul.f32 %v2214, %v2214
          %v2279 = vmul.f32 %v2215, %v2215
          %v2280 = vmul.f32 %v2216, %v2216
          %v2281 = vmul.f32 %v2217, %v2217
          %v2282 = vmul.f32 %v2218, %v2218
          %v2283 = vmul.f32 %v2219, %v2219
          %v2284 = vmul.f32 %v2220, %v2220
          %v2285 = vmul.f32 %v2221, %v2221
          %v2286 = vmul.f32 %v2222, %v2222
          %v2287 = vmul.f32 %v2223, %v2223
          %v2288 = vmul.f32 %v2224, %v2224
          %v2289 = vmul.f32 %v2225, %v2225
          %v2290 = vmul.f32 %v2226, %v2226
          %v2291 = vmul.f32 %v2227, %v2227
          %v2292 = vmul.f32 %v2228, %v2228
          %v2293 = vmul.f32 %v2229, %v2229
          %v2294 = vmul.f32 %v2230, %v2230
          %v2295 = vmul.f32 %v2231, %v2231
          %v2296 = vmul.f32 %v2232, %v2232
          %v2297 = vmul.f32 %v2233, %v2233
          %v2298 = vmul.f32 %v2234, %v2234
          %v2299 = vmul.f32 %v2235, %v2235
          %v2300 = vmul.f32 %v2236, %v2236
          %v2301 = vmul.f32 %v2237, %v2237
          %v2302 = vmul.f32 %v2238, %v2238
          %v2303 = vmul.f32 %v2239, %v2239
          %v2304 = vmul.f32 %v2240, %v2240
          %v2305 = vmul.f32 %v2241, %v2241
          %v2306 = vmul.f32 %v2242, %v2242
          %v2307 = vmul.f32 %v2243, %v2243
          %v2308 = vmul.f32 %v2244, %v2244
          %v2309 = vmul.f32 %v2245, %v2245
          %v2310 = vmul.f32 %v2246, %v2246
          %v2311 = vmul.f32 %v2247, %v2247
          %v2312 = vmul.f32 %v2248, %v2248
          %v2313 = vmul.f32 %v2249, %v2249
          %v2314 = vmul.f32 %v2250, %v2250
          %v2315 = vmul.f32 %v2251, %v2251
          %v2316 = vmul.f32 %v2252, %v2252
          %v2317 = vmul.f32 %v2253, %v2253
          %v2318 = vmul.f32 %v2254, %v2254
          %v2319 = vmul.f32 %v2255, %v2255
          %v2320 = vmul.f32 %v2256, %v2256
          %v2321 = vmul.f32 %v2257, %v2257
          %v2322 = vmul.f32 %v2258, %v2258
          %v2323 = vmul.f32 %v2259, %v2259
          %v2324 = vmul.f32 %v2260, %v2260
          %v2325 = vmul.f32 %v2261, %v2261
          %v2326 = vmul.f32 %v2262, %v2262
          %v2327 = vmul.f32 %v2263, %v2263
          %v2328 = vmul.f32 %v2264, %v2264
          %v2329 = vmul.f32 %v2265, %v2265
          %v2330 = vmul.f32 %v2266, %v2266
          %v2331 = vmul.f32 %v2267, %v2267
          %v2332 = vmul.f32 %v2268, %v2268
          %v2333 = vmul.f32 %v2269, %v2269
          %v2334 = vmul.f32 %v2270, %v2270
          %v2335 = vmul.f32 %v2271, %v2271
          %v2336 = vmul.f32 %v2272, %v2272
          %v2337 = vmul.f32 %v2273, %v2273
          %v2338 = vmul.f32 %v2274, %v2274
          %v2339 = vmul.f32 %v2275, %v2275
          %v2340 = vmul.f32 %v2276, %v2276
          %v2341 = vadd.f32 %v2277, %v2278
          %v2342 = vadd.f32 %v2341, %v2279
          %v2343 = vadd.f32 %v2342, %v2280
          %v2344 = vadd.f32 %v2343, %v2281
          %v2345 = vadd.f32 %v2344, %v2282
          %v2346 = vadd.f32 %v2345, %v2283
          %v2347 = vadd.f32 %v2346, %v2284
          %v2348 = vadd.f32 %v2347, %v2285
          %v2349 = vadd.f32 %v2348, %v2286
          %v2350 = vadd.f32 %v2349, %v2287
          %v2351 = vadd.f32 %v2350, %v2288
          %v2352 = vadd.f32 %v2351, %v2289
          %v2353 = vadd.f32 %v2352, %v2290
          %v2354 = vadd.f32 %v2353, %v2291
          %v2355 = vadd.f32 %v2354, %v2292
          %v2356 = vadd.f32 %v2355, %v2293
          %v2357 = vadd.f32 %v2356, %v2294
          %v2358 = vadd.f32 %v2357, %v2295
          %v2359 = vadd.f32 %v2358, %v2296
          %v2360 = vadd.f32 %v2359, %v2297
          %v2361 = vadd.f32 %v2360, %v2298
          %v2362 = vadd.f32 %v2361, %v2299
          %v2363 = vadd.f32 %v2362, %v2300
          %v2364 = vadd.f32 %v2363, %v2301
          %v2365 = vadd.f32 %v2364, %v2302
          %v2366 = vadd.f32 %v2365, %v2303
          %v2367 = vadd.f32 %v2366, %v2304
          %v2368 = vadd.f32 %v2367, %v2305
          %v2369 = vadd.f32 %v2368, %v2306
          %v2370 = vadd.f32 %v2369, %v2307
          %v2371 = vadd.f32 %v2370, %v2308
          %v2372 = vadd.f32 %v2371, %v2309
          %v2373 = vadd.f32 %v2372, %v2310
          %v2374 = vadd.f32 %v2373, %v2311
          %v2375 = vadd.f32 %v2374, %v2312
          %v2376 = vadd.f32 %v2375, %v2313
          %v2377 = vadd.f32 %v2376, %v2314
          %v2378 = vadd.f32 %v2377, %v2315
          %v2379 = vadd.f32 %v2378, %v2316
          %v2380 = vadd.f32 %v2379, %v2317
          %v2381 = vadd.f32 %v2380, %v2318
          %v2382 = vadd.f32 %v2381, %v2319
          %v2383 = vadd.f32 %v2382, %v2320
          %v2384 = vadd.f32 %v2383, %v2321
          %v2385 = vadd.f32 %v2384, %v2322
          %v2386 = vadd.f32 %v2385, %v2323
          %v2387 = vadd.f32 %v2386, %v2324
          %v2388 = vadd.f32 %v2387, %v2325
          %v2389 = vadd.f32 %v2388, %v2326
          %v2390 = vadd.f32 %v2389, %v2327
          %v2391 = vadd.f32 %v2390, %v2328
          %v2392 = vadd.f32 %v2391, %v2329
          %v2393 = vadd.f32 %v2392, %v2330
          %v2394 = vadd.f32 %v2393, %v2331
          %v2395 = vadd.f32 %v2394, %v2332
          %v2396 = vadd.f32 %v2395, %v2333
          %v2397 = vadd.f32 %v2396, %v2334
          %v2398 = vadd.f32 %v2397, %v2335
          %v2399 = vadd.f32 %v2398, %v2336
          %v2400 = vadd.f32 %v2399, %v2337
          %v2401 = vadd.f32 %v2400, %v2338
          %v2402 = vadd.f32 %v2401, %v2339
          %v2403 = vadd.f32 %v2402, %v2340
          %2404 = vadd.xlane.f32.xlu0 %v2403
          %v2405 = vpop.xlane.xlu0 %2404
          %v2406 = vrot.slane %v2405, 4
          %v2407 = vadd.f32 %v2405, %v2406
          %v2408 = vrot.slane %v2407, 2
          %v2409 = vadd.f32 %v2407, %v2408
          %v2410 = vrot.slane %v2409, 1
          %v2411 = vadd.f32 %v2409, %v2410
          %s2412 = vtos %v2411
          %v2413 = vsel %vm2085, %v1696, 0.0
          %v2414 = vsel %vm2085, %v1702, 0.0
          %v2415 = vsel %vm2085, %v1752, 0.0
          %v2416 = vsel %vm2085, %v1758, 0.0
          %2417 = vmatprep.subr.mxu0 %v2244
          %2418 = vmatpush1.msra.mxu0 %v2243
          %2419 = vmatprep.subr.mxu0 %v2242
          %2420 = vmatpush1.msra.mxu0 %v2241
          %2421 = vmatprep.subr.mxu0 %v2240
          %2422 = vmatpush1.msra.mxu0 %v2239
          %2423 = vmatprep.subr.mxu0 %v2238
          %2424 = vmatpush1.msra.mxu0 %v2237
          %2425 = vmatprep.subr.mxu0 %v2236
          %2426 = vmatpush1.msra.mxu0 %v2235
          %2427 = vmatprep.subr.mxu0 %v2234
          %2428 = vmatpush1.msra.mxu0 %v2233
          %2429 = vmatprep.subr.mxu0 %v2232
          %2430 = vmatpush1.msra.mxu0 %v2231
          %2431 = vmatprep.subr.mxu0 %v2230
          %2432 = vmatpush1.msra.mxu0 %v2229
          %2433 = vmatprep.subr.mxu0 %v2228
          %2434 = vmatpush1.msra.mxu0 %v2227
          %2435 = vmatprep.subr.mxu0 %v2226
          %2436 = vmatpush1.msra.mxu0 %v2225
          %2437 = vmatprep.subr.mxu0 %v2224
          %2438 = vmatpush1.msra.mxu0 %v2223
          %2439 = vmatprep.subr.mxu0 %v2222
          %2440 = vmatpush1.msra.mxu0 %v2221
          %2441 = vmatprep.subr.mxu0 %v2220
          %2442 = vmatpush1.msra.mxu0 %v2219
          %2443 = vmatprep.subr.mxu0 %v2218
          %2444 = vmatpush1.msra.mxu0 %v2217
          %2445 = vmatprep.subr.mxu0 %v2216
          %2446 = vmatpush1.msra.mxu0 %v2215
          %2447 = vmatprep.subr.mxu0 %v2214
          %2448 = vmatpush1.msra.mxu0 %v2213
          %2449 = vmatprep.subr.mxu0 %v2276
          %2450 = vmatpush2.msra.mxu0 %v2275
          %2451 = vmatprep.subr.mxu0 %v2274
          %2452 = vmatpush2.msra.mxu0 %v2273
          %2453 = vmatprep.subr.mxu0 %v2272
          %2454 = vmatpush2.msra.mxu0 %v2271
          %2455 = vmatprep.subr.mxu0 %v2270
          %2456 = vmatpush2.msra.mxu0 %v2269
          %2457 = vmatprep.subr.mxu0 %v2268
          %2458 = vmatpush2.msra.mxu0 %v2267
          %2459 = vmatprep.subr.mxu0 %v2266
          %2460 = vmatpush2.msra.mxu0 %v2265
          %2461 = vmatprep.subr.mxu0 %v2264
          %2462 = vmatpush2.msra.mxu0 %v2263
          %2463 = vmatprep.subr.mxu0 %v2262
          %2464 = vmatpush2.msra.mxu0 %v2261
          %2465 = vmatprep.subr.mxu0 %v2260
          %2466 = vmatpush2.msra.mxu0 %v2259
          %2467 = vmatprep.subr.mxu0 %v2258
          %2468 = vmatpush2.msra.mxu0 %v2257
          %2469 = vmatprep.subr.mxu0 %v2256
          %2470 = vmatpush2.msra.mxu0 %v2255
          %2471 = vmatprep.subr.mxu0 %v2254
          %2472 = vmatpush2.msra.mxu0 %v2253
          %2473 = vmatprep.subr.mxu0 %v2252
          %2474 = vmatpush2.msra.mxu0 %v2251
          %2475 = vmatprep.subr.mxu0 %v2250
          %2476 = vmatpush2.msra.mxu0 %v2249
          %2477 = vmatprep.subr.mxu0 %v2248
          %2478 = vmatpush2.msra.mxu0 %v2247
          %2479 = vmatprep.subr.mxu0 %v2246
          %2480 = vmatpush2.msra.mxu0 %v2245
          %2481 = vmatprep.mubr.f32.mxu0 %v2414
          %2482 = vmatmul.mubr.f32.gmra.mxu0 %v2413
          %v2483 = vpop.f32.mrf.mxu0
          %v2484 = vadd.f32 0.0, %v2483
          %v2485 = vpop.f32.mrf.mxu0
          %v2486 = vadd.f32 0.0, %v2485
          %2487 = vdwg.mxu0
          %v2488 = vmul.f32 %v2484, %v2415
          %v2489 = vmul.f32 %v2486, %v2416
          %v2490 = vadd.f32 %v2488, %v2489
          %2491 = vadd.xlane.f32.xlu0 %v2490
          %v2492 = vpop.xlane.xlu0 %2491
          %v2493 = vrot.slane %v2492, 4
          %v2494 = vadd.f32 %v2492, %v2493
          %v2495 = vrot.slane %v2494, 2
          %v2496 = vadd.f32 %v2494, %v2495
          %v2497 = vrot.slane %v2496, 1
          %v2498 = vadd.f32 %v2496, %v2497
          %s2499 = vtos %v2498
          %v2500 = vmul.f32 %v1752, %v1752
          %v2501 = vmul.f32 %v1758, %v1758
          %v2502 = vmul.f32 %v2500, 0.015625
          %v2503 = vmul.f32 %v2501, 0.015625
          %v2504 = vsub.f32 %v1780, %v2502
          %v2505 = vsub.f32 %v1786, %v2503
          %v2506 = vmul.f32 %v2504, %v2504
          %v2507 = vmul.f32 %v2505, %v2505
          %v2508 = vsel %vm1815, %v2506, 0.0
          %v2509 = vsel %vm1815, %v2507, 0.0
          %v2510 = vadd.f32 %v2508, %v2509
          %2511 = vadd.xlane.f32.xlu0 %v2510
          %v2512 = vpop.xlane.xlu0 %2511
          %v2513 = vrot.slane %v2512, 4
          %v2514 = vadd.f32 %v2512, %v2513
          %v2515 = vrot.slane %v2514, 2
          %v2516 = vadd.f32 %v2514, %v2515
          %v2517 = vrot.slane %v2516, 1
          %v2518 = vadd.f32 %v2516, %v2517
          %s2519 = vtos %v2518
          %v2520 = vsel %vm1815, %v1828, 0.0
          %v2521 = vsel %vm1815, %v1829, 0.0
          %v2522 = vadd.f32 %v2520, %v2521
          %2523 = vadd.xlane.f32.xlu0 %v2522
          %v2524 = vpop.xlane.xlu0 %2523
          %v2525 = vrot.slane %v2524, 4
          %v2526 = vadd.f32 %v2524, %v2525
          %v2527 = vrot.slane %v2526, 2
          %v2528 = vadd.f32 %v2526, %v2527
          %v2529 = vrot.slane %v2528, 1
          %v2530 = vadd.f32 %v2528, %v2529
          %s2531 = vtos %v2530
          %s2532 = smul.f32 %s2531, 0.015625
          %s2533 = smul.f32 %s2532, %s2532
          %s2534 = smul.f32 %s2499, 0.03125
          %s2535 = ssub.f32 %s2412, %s2534
          %s2536 = ssub.f32 %s2535, %s2519
          %s2537 = smul.f32 %s1674, %s2533
          %s2538 = sadd.f32 %s2536, %s2537
          %s2539 = smul.f32 %s2538, 0.00025195265
          %s2540 = sadd.f32 %s2212, %s2539
          %s2541 = smul.f32 %s2540, 0.00390625
          %s2542 = smul.f32 %s1882, 25.0
          %s2543 = smul.f32 %s1869, 25.0
          %s2544 = sadd.f32 %s2542, %s2543
          %s2545 = smul.f32 %s1674, %s2544
          %s2546 = sadd.f32 %s2541, %s2545
          %v2547 = vstv %s2546
          %v2548 = vadd.f32 %v2547, 0.0
          %2549 = vst [vmem:[#allocation18] sm:$0xff] %v2548
        $region44: #{tpu_custom_call.1} parent=27 // pred_fallthru
          _
        // Predicated region
        $region45: #{tpu_custom_call.1} parent=27 // pred_check
          %p2550 = pneg %p102
        $region46: #{tpu_custom_call.1} parent=27 // pred_check_branch
          %2552 = sbr.rel (%p2550) target = $region48
        $region47: #{tpu_custom_call.1} parent=27 // pred_region
          %s2554 = ssub.s32 128, 128
          %2555 = vsyncadd [#allocation15], %s2554
          %s2556 = smul.addr %s24, 128
          %s2557 = scalar_lea.hbm %s2, %s2556
          %s2559 = sshll.u32 [#allocation18], 4
          %s2560 = int_to_ptr.vmem [resolvable:$true] %s2559
          %2562 = dma.vmem_to_hbm [thread:$0]  %s2560, 128, %s2557, [#allocation15]
        $region48: #{tpu_custom_call.1} parent=27 // pred_fallthru
          _
        // Predicated region
        $region49: #{tpu_custom_call.1} parent=27 // pred_check
          %p2563 = pneg %p102
        $region50: #{tpu_custom_call.1} parent=27 // pred_check_branch
          %2565 = sbr.rel (%p2563) target = $region52
        $region51: #{tpu_custom_call.1} parent=27 // pred_region
          %2566 = dma.done [#allocation15], 128
        $region52: #{tpu_custom_call.1} parent=27 // pred_fallthru
          _
      $region28: #{tpu_custom_call.1} parent=5 // pred_fallthru
        _
      %p2567 = scmp.le.s32.totalorder 2, %s15
      // Predicated region
      $region53: #{tpu_custom_call.1} parent=5 // pred_check
        %p2568 = pneg %p2567
      $region54: #{tpu_custom_call.1} parent=5 // pred_check_branch
        %2570 = sbr.rel (%p2568) target = $region56
      $region55: #{tpu_custom_call.1} parent=5 // pred_region
        %s2571 = ssub.s32 %s15, 2
      $region56: #{tpu_custom_call.1} parent=5 // pred_fallthru
        _
    $region6: #{tpu_custom_call.1} parent=1 // loop_footer
      %s19 = sadd.s32 1, %s15
    $region7: #{tpu_custom_call.1} parent=1 // loop_footer_branch
      %14 = sbr.rel target = $region3
    $region8: #{tpu_custom_call.1} parent=1 // loop_exit
      _
    %2572 = vsyncpa [#allocation14], 1
    %s2573 = scalar_lea.sflag [#allocation14], 1
    %2574 = vsyncpa %s2573, 1
    %2575 = vsyncpa [#allocation17], 1
    %s2576 = scalar_lea.sflag [#allocation17], 1
    %2577 = vsyncpa %s2576, 1
    %2578 = vsyncpa [#allocation15], 1
    %s2579 = scalar_lea.sflag [#allocation15], 1
    %2580 = vsyncpa %s2579, 1

</llo_original>
